<compile_context>
chip_gen: v5e
topology: v5e:2x2
jax: 0.10.0
libtpu: 0.0.40
codegen_flags: <defaults>
</compile_context>

<pallas_src>
import functools

import jax
import jax.numpy as jnp
from jax.experimental import pallas as pl
from jax.experimental.pallas import tpu as pltpu


def _round_up(x, m):
    return (x + m - 1) // m * m


def _vmem_capacity_bytes():
    """Per-TensorCore VMEM capacity; conservative fallback = v7x (64 MiB)."""
    try:
        cap = int(pltpu.get_tpu_info().vmem_capacity_bytes)
        if cap > 0:
            return cap
    except Exception:
        pass
    return 64 * 1024 * 1024


# ----------------------------- Pallas kernel --------------------------------
def _gcn_classifier_kernel(adj_ref, h_ref, w_ref, affine_ref, wc_ref, out_ref,
                           *, num_layers, eps):
    """Fused GCN (use_weight=False) + bias-free classifier for one batch block.

    adj_ref    : (Bblk, L, L)       bf16  adjacency (0/1, self loops included)
    h_ref      : (Bblk, L, H)       bf16  compacted encoder output
    w_ref      : (NLAYERS, H, H)    bf16  GCN Linear weights, pre-transposed (x @ W)
    affine_ref : (NLAYERS, 3, H)    f32   rows = [linear bias, ln gamma (a_2), ln beta (b_2)]
    wc_ref     : (H, NL_PAD)        bf16  classifier weight, zero-padded to 128 lanes
    out_ref    : (Bblk, L, NL_PAD)  bf16  logits (lane-padded)
    """
    bblk, L, H = h_ref.shape

    # get_att with use_weight=False:
    #   attention = adj / (sum(adj, dim=2, keepdims) + 1e-10)
    # Row sums accumulated in f32; adjacency itself is exact in bf16.
    adj_f32 = adj_ref[...].astype(jnp.float32)                # (Bblk, L, L)
    row_sum = jnp.sum(adj_f32, axis=-1, keepdims=True)
    att = (adj_f32 * pl.reciprocal(row_sum + 1e-10, approx=True)).astype(jnp.bfloat16)

    # Flatten batch*seq so the Linear / classifier matmuls get a tall M dim.
    h2 = h_ref[...].reshape(bblk * L, H)                      # (BL, H) bf16

    inv_h = 1.0 / H
    inv_hm1 = 1.0 / (H - 1)

    for layer in range(num_layers):
        w = w_ref[layer]                                      # (H, H)  bf16
        aff = affine_ref[layer]                               # (3, H)  f32
        bias, gamma, beta = aff[0:1], aff[1:2], aff[2:3]      # each (1, H) f32

        # hidden_state = self.linear(hidden_state)   (bf16 operands, f32 acc)
        hw = jnp.dot(h2, w, preferred_element_type=jnp.float32) + bias      # (BL, H) f32
        hw_b = hw.astype(jnp.bfloat16).reshape(bblk, L, H)

        # context_attention = torch.bmm(attention, hidden_state)
        ctx = jnp.einsum("bls,bsh->blh", att, hw_b,
                         preferred_element_type=jnp.float32)                # (Bblk, L, H)
        ctx = ctx.reshape(bblk * L, H)

        # LayerNormalization: torch.std is unbiased (ddof=1); eps added to sigma.
        # Single-sweep statistics: mu = s1/H, var = (s2 - mu*s1)/(H-1)  (f32).
        s1 = jnp.sum(ctx, axis=-1, keepdims=True)
        s2 = jnp.sum(ctx * ctx, axis=-1, keepdims=True)
        mu = s1 * inv_h
        var = jnp.maximum(s2 - mu * s1, 0.0) * inv_hm1
        sigma = jnp.sqrt(var)
        inv_sig = pl.reciprocal(sigma + eps)                  # exact (non-approx)
        ln = (ctx - mu) * inv_sig * gamma + beta

        # ReLU; keep inter-layer activation in bf16.
        h2 = jnp.maximum(ln, 0.0).astype(jnp.bfloat16)

    # classifier: Linear(hidden, num_labels, bias=False), lane-padded to 128.
    out = jnp.dot(h2, wc_ref[...], preferred_element_type=jnp.float32)      # (BL, NL_PAD)
    out_ref[...] = out.reshape(out_ref.shape).astype(out_ref.dtype)


def gcn_classifier(adjacency, hidden_state, gcn_w, gcn_b, gcn_gamma, gcn_beta,
                   classifier_w, *, eps=1e-3, max_batch_block=16):
    """hidden_state: (B, L, H) f32; adjacency: (B, L, L) f32. Returns (B, L, num_labels) f32."""
    B, L, H = hidden_state.shape
    num_layers = gcn_w.shape[0]
    num_labels = classifier_w.shape[1]

    # ---- wrapper-side layout prep (perf) ------------------------------------
    # Lane-dense classifier/output: zero-pad num_labels -> multiple of 128.
    nl_pad = max(128, _round_up(num_labels, 128))
    wc_pad = jnp.zeros((H, nl_pad), jnp.bfloat16).at[:, :num_labels].set(
        classifier_w.astype(jnp.bfloat16))
    # bf16 matmul weights (fp32 accumulation happens inside the kernel).
    gcn_w_bf16 = gcn_w.astype(jnp.bfloat16)
    # Pack bias / gamma / beta into one (NLAYERS, 3, H) f32 block.
    affine = jnp.concatenate([gcn_b, gcn_gamma, gcn_beta], axis=1)

    # Lane-align the sequence dimension: l_pad = multiple of 128 (floor 128).
    # Padded rows have all-zero adjacency, so they neither receive nor emit
    # attention; their (finite) garbage output is sliced off below.
    l_pad = max(128, _round_up(L, 128))
    h_pad = _round_up(H, 128)

    # ---- generation-aware batch-block sizing --------------------------------
    # Resident weights (single-buffered) + per-batch-element pipelined blocks
    # (bf16, double-buffered) + in-kernel temporaries, sized against the real
    # per-TC VMEM capacity with ~25% headroom.
    weight_bytes = (num_layers * h_pad * h_pad * 2            # GCN W bf16
                    + h_pad * nl_pad * 2                      # classifier W bf16
                    + num_layers * 8 * h_pad * 4)             # affine f32
    per_b_blocks = 2 * 2 * l_pad * (l_pad + h_pad + nl_pad)   # bf16, double-buffered
    per_b_temps = (6 * l_pad * l_pad                          # adj f32 cast + att bf16
                   + 4 * 4 * l_pad * h_pad)                   # ~4 live f32 (L,H) temps
    capacity = _vmem_capacity_bytes()
    budget = int(0.75 * capacity)
    bblk_fit = max(1, (budget - weight_bytes) // (per_b_blocks + per_b_temps))
    bblk = int(max(1, min(bblk_fit, max_batch_block, B)))
    if B >= 2:
        # keep the grid >= 2 so both v7x TensorCores get work under "parallel".
        bblk = min(bblk, -(-B // 2))
    b_pad = _round_up(B, bblk)

    # ---- bf16 activation streams + padding ----------------------------------
    hidden_bf16 = hidden_state.astype(jnp.bfloat16)           # adjacency is 0/1 -> exact
    adj_bf16 = adjacency.astype(jnp.bfloat16)
    if (b_pad, l_pad) != (B, L):
        hidden_bf16 = jnp.pad(hidden_bf16,
                              ((0, b_pad - B), (0, l_pad - L), (0, 0)))
        adj_bf16 = jnp.pad(adj_bf16,
                           ((0, b_pad - B), (0, l_pad - L), (0, l_pad - L)))

    kernel = functools.partial(_gcn_classifier_kernel,
                               num_layers=num_layers, eps=eps)

    est = weight_bytes + bblk * (per_b_blocks + per_b_temps)
    vmem_limit = int(min(capacity, max(32 * 1024 * 1024, 2 * est)))

    out = pl.pallas_call(
        kernel,
        out_shape=jax.ShapeDtypeStruct((b_pad, l_pad, nl_pad), jnp.bfloat16),
        grid_spec=pltpu.PrefetchScalarGridSpec(
            num_scalar_prefetch=0,
            grid=(b_pad // bblk,),
            in_specs=[
                pl.BlockSpec((bblk, l_pad, l_pad), lambda b: (b, 0, 0)),   # adjacency (bf16)
                pl.BlockSpec((bblk, l_pad, H), lambda b: (b, 0, 0)),       # hidden (bf16)
                # Grid-invariant params: whole array resident in VMEM once
                # (no per-step DMA, no double buffering).
                pl.BlockSpec(memory_space=pltpu.MemorySpace.VMEM),         # gcn W (bf16)
                pl.BlockSpec(memory_space=pltpu.MemorySpace.VMEM),         # bias/gamma/beta
                pl.BlockSpec(memory_space=pltpu.MemorySpace.VMEM),         # classifier W
            ],
            out_specs=pl.BlockSpec((bblk, l_pad, nl_pad), lambda b: (b, 0, 0)),
        ),
        compiler_params=pltpu.CompilerParams(
            dimension_semantics=("parallel",),
            vmem_limit_bytes=vmem_limit),
    )(adj_bf16, hidden_bf16, gcn_w_bf16, affine, wc_pad)

    return out[:B, :L, :num_labels].astype(jnp.float32)


# ------------------------------- JAX glue ------------------------------------
def compact_valid_tokens(sequence_output, valid_ids):
    """valid_output[i][:n_i] = sequence_output[i][valid_ids[i] == 1], rest 0."""
    B, L, H = sequence_output.shape
    # stable argsort puts valid tokens first, preserving original order
    order = jnp.argsort(1 - valid_ids, axis=1, stable=True)          # (B, L)
    gathered = jnp.take_along_axis(sequence_output, order[..., None], axis=1)
    counts = jnp.sum(valid_ids, axis=1, keepdims=True)                # (B, 1)
    row_idx = jnp.arange(L)[None, :]                                  # (1, L)
    keep = (row_idx < counts)[..., None]
    return jnp.where(keep, gathered, 0.0).astype(jnp.float32)


def nest_ccg_forward(params, input_ids, valid_ids, adjacency_matrix):
    # TODO(synk): the BERT encoder has no clean single-kernel Pallas equivalent;
    # it is replaced here by a deterministic embedding lookup producing the
    # (B, L, H) "sequence_output".
    sequence_output = params["embedding"][input_ids]                  # (B, L, H)

    # valid-id compaction (the per-batch boolean gather in the torch forward)
    valid_output = compact_valid_tokens(sequence_output, valid_ids)

    # dropout: eval mode -> identity

    # GCN (3 layers, use_weight=False) + bias-free classifier, fused in Pallas
    logits = gcn_classifier(
        adjacency_matrix, valid_output,
        params["gcn_w"], params["gcn_b"],
        params["gcn_gamma"], params["gcn_beta"],
        params["classifier_w"])
    return logits


def init_params(key, vocab_size, hidden, num_layers, num_labels):
    keys = jax.random.split(key, 4)
    scale = 1.0 / jnp.sqrt(hidden)
    # GCN Linear weights stored pre-transposed so the kernel does x @ W.
    gcn_w = jax.random.uniform(keys[0], (num_layers, hidden, hidden),
                               minval=-scale, maxval=scale, dtype=jnp.float32)
    gcn_b = jax.random.uniform(keys[1], (num_layers, 1, hidden),
                               minval=-scale, maxval=scale, dtype=jnp.float32)
    gcn_gamma = jnp.ones((num_layers, 1, hidden), jnp.float32)   # a_2 init = ones
    gcn_beta = jnp.zeros((num_layers, 1, hidden), jnp.float32)   # b_2 init = zeros
    classifier_w = jax.random.uniform(keys[2], (hidden, num_labels),
                                      minval=-scale, maxval=scale,
                                      dtype=jnp.float32)
    embedding = jax.random.normal(keys[3], (vocab_size, hidden),
                                  dtype=jnp.float32) * 0.02
    return {
        "embedding": embedding,
        "gcn_w": gcn_w,
        "gcn_b": gcn_b,
        "gcn_gamma": gcn_gamma,
        "gcn_beta": gcn_beta,
        "classifier_w": classifier_w,
    }


# ------------------------ pure-JAX reference (sanity) ------------------------
def reference_forward(params, input_ids, valid_ids, adjacency_matrix):
    """Mirrors the kernel's bf16-operand / fp32-accumulate matmuls and bf16
    inter-layer activations; LN statistics stay f32 (two-sweep)."""
    seq = params["embedding"][input_ids]
    h = compact_valid_tokens(seq, valid_ids).astype(jnp.bfloat16)
    adj = adjacency_matrix
    att = (adj / (jnp.sum(adj, axis=-1, keepdims=True) + 1e-10)).astype(jnp.bfloat16)
    H = h.shape[-1]
    for l in range(params["gcn_w"].shape[0]):
        w = params["gcn_w"][l].astype(jnp.bfloat16)
        hw = jnp.einsum("blh,hk->blk", h, w,
                        preferred_element_type=jnp.float32) + params["gcn_b"][l]
        ctx = jnp.einsum("bls,bsh->blh", att, hw.astype(jnp.bfloat16),
                         preferred_element_type=jnp.float32)
        mu = jnp.mean(ctx, axis=-1, keepdims=True)
        sigma = jnp.sqrt(jnp.sum((ctx - mu) ** 2, axis=-1, keepdims=True) / (H - 1))
        ln = (ctx - mu) / (sigma + 1e-3) * params["gcn_gamma"][l] + params["gcn_beta"][l]
        h = jnp.maximum(ln, 0.0).astype(jnp.bfloat16)
    return jnp.einsum("blh,hn->bln", h,
                      params["classifier_w"].astype(jnp.bfloat16),
                      preferred_element_type=jnp.float32)


# ---------------------------------- main -------------------------------------
if __name__ == "__main__":
    B, L, H = 2, 8, 32          # batch, max_seq_length, hidden_size
    NUM_LAYERS = 3              # gcn_layer_number (default hpara)
    NUM_LABELS = 6              # len(labelmap)
    VOCAB = 64

    key = jax.random.PRNGKey(0)
    k_p, k_ids, k_valid = jax.random.split(key, 3)

    params = init_params(k_p, VOCAB, H, NUM_LAYERS, NUM_LABELS)

    input_ids = jax.random.randint(k_ids, (B, L), 1, VOCAB, dtype=jnp.int32)
    # valid_ids: some sub-word tokens marked invalid (0)
    valid_ids = (jax.random.uniform(k_valid, (B, L)) > 0.25).astype(jnp.int32)

    # adjacency matrix: self loops + symmetric neighbor links (as built in
    # convert_examples_to_features)
    eye = jnp.eye(L, dtype=jnp.float32)
    off = jnp.eye(L, k=1, dtype=jnp.float32) + jnp.eye(L, k=-1, dtype=jnp.float32)
    adjacency = jnp.broadcast_to(eye + off, (B, L, L)).astype(jnp.float32)

    logits = nest_ccg_forward(params, input_ids, valid_ids, adjacency)
    logits = jax.block_until_ready(logits)

    ref = reference_forward(params, input_ids, valid_ids, adjacency)
    assert logits.shape == (B, L, NUM_LABELS)
    # bf16 streams/activations + approx EUP reciprocal on the attention row
    # norm + bf16 logit store -> looser tolerance than pure fp32.
    assert jnp.allclose(logits, ref, atol=3e-2, rtol=3e-2), "mismatch vs reference"

    print("KERNEL_OK")
</pallas_src>

<mosaic_0001>
module attributes {stable_mosaic.version = 11 : i64} {
  func.func @_gcn_classifier_kernel(%arg0: i32, %arg1: memref<1x128x128xbf16, #tpu.memory_space<vmem>>, %arg2: memref<1x128x32xbf16, #tpu.memory_space<vmem>>, %arg3: memref<3x32x32xbf16, #tpu.memory_space<vmem>>, %arg4: memref<3x3x32xf32, #tpu.memory_space<vmem>>, %arg5: memref<32x128xbf16, #tpu.memory_space<vmem>>, %arg6: memref<1x128x128xbf16, #tpu.memory_space<vmem>>) attributes {dimension_semantics = [#tpu.dimension_semantics<parallel>], iteration_bounds = array<i64: 2>, scalar_prefetch = 0 : i64, scratch_operands = 0 : i64, tpu.core_type = #tpu.core_type<tc>, window_params = [{transform_indices = @transform_0, window_bounds = array<i64: 1, 128, 128>}, {transform_indices = @transform_1, window_bounds = array<i64: 1, 128, 32>}, {pipeline_mode = #tpu.pipeline_mode<synchronous>, transform_indices = @transform_2, window_bounds = array<i64: 3, 32, 32>}, {pipeline_mode = #tpu.pipeline_mode<synchronous>, transform_indices = @transform_3, window_bounds = array<i64: 3, 3, 32>}, {pipeline_mode = #tpu.pipeline_mode<synchronous>, transform_indices = @transform_4, window_bounds = array<i64: 32, 128>}, {transform_indices = @transform_5, window_bounds = array<i64: 1, 128, 128>}]} {
    %c0 = arith.constant 0 : index
    %c0_0 = arith.constant 0 : index
    %c0_1 = arith.constant 0 : index
    %0 = vector.load %arg1[%c0, %c0_0, %c0_1] : memref<1x128x128xbf16, #tpu.memory_space<vmem>>, vector<1x128x128xbf16>
    %1 = arith.extf %0 : vector<1x128x128xbf16> to vector<1x128x128xf32>
    %cst = arith.constant dense<0.000000e+00> : vector<1x128xf32>
    %2 = vector.multi_reduction <add>, %1, %cst [2] : vector<1x128x128xf32> to vector<1x128xf32>
    %3 = vector.shape_cast %2 : vector<1x128xf32> to vector<1x128x1xf32>
    %cst_2 = arith.constant 1.000000e-10 : f32
    %4 = vector.broadcast %cst_2 : f32 to vector<1x128x1xf32>
    %5 = arith.addf %3, %4 : vector<1x128x1xf32>
    %6 = tpu.reciprocal %5 {approx = true} : vector<1x128x1xf32> -> vector<1x128x1xf32>
    %7 = vector.broadcast %6 : vector<1x128x1xf32> to vector<1x128x128xf32>
    %8 = arith.mulf %1, %7 : vector<1x128x128xf32>
    %9 = arith.truncf %8 : vector<1x128x128xf32> to vector<1x128x128xbf16>
    %c0_3 = arith.constant 0 : index
    %c0_4 = arith.constant 0 : index
    %c0_5 = arith.constant 0 : index
    %10 = vector.load %arg2[%c0_3, %c0_4, %c0_5] : memref<1x128x32xbf16, #tpu.memory_space<vmem>>, vector<1x128x32xbf16>
    %11 = vector.shape_cast %10 : vector<1x128x32xbf16> to vector<128x32xbf16>
    %c0_6 = arith.constant 0 : index
    %c0_7 = arith.constant 0 : index
    %c0_8 = arith.constant 0 : index
    %12 = vector.load %arg3[%c0_6, %c0_7, %c0_8] : memref<3x32x32xbf16, #tpu.memory_space<vmem>>, vector<1x32x32xbf16>
    %13 = vector.shape_cast %12 : vector<1x32x32xbf16> to vector<32x32xbf16>
    %c0_9 = arith.constant 0 : index
    %c0_10 = arith.constant 0 : index
    %c0_11 = arith.constant 0 : index
    %14 = vector.load %arg4[%c0_9, %c0_10, %c0_11] : memref<3x3x32xf32, #tpu.memory_space<vmem>>, vector<1x3x32xf32>
    %15 = vector.shape_cast %14 : vector<1x3x32xf32> to vector<3x32xf32>
    %16 = vector.extract_strided_slice %15 {offsets = [0, 0], sizes = [1, 32], strides = [1, 1]} : vector<3x32xf32> to vector<1x32xf32>
    %17 = vector.extract_strided_slice %15 {offsets = [1, 0], sizes = [1, 32], strides = [1, 1]} : vector<3x32xf32> to vector<1x32xf32>
    %18 = vector.extract_strided_slice %15 {offsets = [2, 0], sizes = [1, 32], strides = [1, 1]} : vector<3x32xf32> to vector<1x32xf32>
    %cst_12 = arith.constant dense<0.000000e+00> : vector<128x32xf32>
    %19 = tpu.matmul %11, %13, %cst_12 {dimension_numbers = #tpu.dot_dimension_numbers<[1], [0], [0], [1], [0, 0, 1, 1], [], []>} : vector<128x32xbf16>, vector<32x32xbf16>, vector<128x32xf32> -> vector<128x32xf32>
    %20 = vector.broadcast %16 : vector<1x32xf32> to vector<128x32xf32>
    %21 = arith.addf %19, %20 : vector<128x32xf32>
    %22 = arith.truncf %21 : vector<128x32xf32> to vector<128x32xbf16>
    %23 = vector.shape_cast %22 : vector<128x32xbf16> to vector<1x128x32xbf16>
    "tpu.trace_start"() <{level = 10 : i32, message = "bls,bsh->blh"}> : () -> ()
    %cst_13 = arith.constant dense<0.000000e+00> : vector<1x128x32xf32>
    %24 = tpu.matmul %9, %23, %cst_13 {dimension_numbers = #tpu.dot_dimension_numbers<[2], [1], [1], [2], [0, 0, 0, 1, 1, 2], [0], [0]>} : vector<1x128x128xbf16>, vector<1x128x32xbf16>, vector<1x128x32xf32> -> vector<1x128x32xf32>
    "tpu.trace_stop"() : () -> ()
    %25 = vector.shape_cast %24 : vector<1x128x32xf32> to vector<128x32xf32>
    %cst_14 = arith.constant dense<0.000000e+00> : vector<128xf32>
    %26 = vector.multi_reduction <add>, %25, %cst_14 [1] : vector<128x32xf32> to vector<128xf32>
    %27 = vector.shape_cast %26 : vector<128xf32> to vector<128x1xf32>
    %28 = arith.mulf %25, %25 : vector<128x32xf32>
    %cst_15 = arith.constant dense<0.000000e+00> : vector<128xf32>
    %29 = vector.multi_reduction <add>, %28, %cst_15 [1] : vector<128x32xf32> to vector<128xf32>
    %30 = vector.shape_cast %29 : vector<128xf32> to vector<128x1xf32>
    %cst_16 = arith.constant 3.125000e-02 : f32
    %31 = vector.broadcast %cst_16 : f32 to vector<128x1xf32>
    %32 = arith.mulf %27, %31 : vector<128x1xf32>
    %33 = arith.mulf %32, %27 : vector<128x1xf32>
    %34 = arith.subf %30, %33 : vector<128x1xf32>
    %cst_17 = arith.constant 0.000000e+00 : f32
    %35 = vector.broadcast %cst_17 : f32 to vector<128x1xf32>
    %36 = arith.maximumf %34, %35 : vector<128x1xf32>
    %cst_18 = arith.constant 0.0322580636 : f32
    %37 = vector.broadcast %cst_18 : f32 to vector<128x1xf32>
    %38 = arith.mulf %36, %37 : vector<128x1xf32>
    %39 = math.sqrt %38 : vector<128x1xf32>
    %cst_19 = arith.constant 1.000000e-03 : f32
    %40 = vector.broadcast %cst_19 : f32 to vector<128x1xf32>
    %41 = arith.addf %39, %40 : vector<128x1xf32>
    %42 = tpu.reciprocal %41 : vector<128x1xf32> -> vector<128x1xf32>
    %43 = vector.broadcast %32 : vector<128x1xf32> to vector<128x32xf32>
    %44 = arith.subf %25, %43 : vector<128x32xf32>
    %45 = vector.broadcast %42 : vector<128x1xf32> to vector<128x32xf32>
    %46 = arith.mulf %44, %45 : vector<128x32xf32>
    %47 = vector.broadcast %17 : vector<1x32xf32> to vector<128x32xf32>
    %48 = arith.mulf %46, %47 : vector<128x32xf32>
    %49 = vector.broadcast %18 : vector<1x32xf32> to vector<128x32xf32>
    %50 = arith.addf %48, %49 : vector<128x32xf32>
    %cst_20 = arith.constant 0.000000e+00 : f32
    %51 = vector.broadcast %cst_20 : f32 to vector<128x32xf32>
    %52 = arith.maximumf %50, %51 : vector<128x32xf32>
    %53 = arith.truncf %52 : vector<128x32xf32> to vector<128x32xbf16>
    %c1 = arith.constant 1 : index
    %c0_21 = arith.constant 0 : index
    %c0_22 = arith.constant 0 : index
    %54 = vector.load %arg3[%c1, %c0_21, %c0_22] : memref<3x32x32xbf16, #tpu.memory_space<vmem>>, vector<1x32x32xbf16>
    %55 = vector.shape_cast %54 : vector<1x32x32xbf16> to vector<32x32xbf16>
    %c1_23 = arith.constant 1 : index
    %c0_24 = arith.constant 0 : index
    %c0_25 = arith.constant 0 : index
    %56 = vector.load %arg4[%c1_23, %c0_24, %c0_25] : memref<3x3x32xf32, #tpu.memory_space<vmem>>, vector<1x3x32xf32>
    %57 = vector.shape_cast %56 : vector<1x3x32xf32> to vector<3x32xf32>
    %58 = vector.extract_strided_slice %57 {offsets = [0, 0], sizes = [1, 32], strides = [1, 1]} : vector<3x32xf32> to vector<1x32xf32>
    %59 = vector.extract_strided_slice %57 {offsets = [1, 0], sizes = [1, 32], strides = [1, 1]} : vector<3x32xf32> to vector<1x32xf32>
    %60 = vector.extract_strided_slice %57 {offsets = [2, 0], sizes = [1, 32], strides = [1, 1]} : vector<3x32xf32> to vector<1x32xf32>
    %cst_26 = arith.constant dense<0.000000e+00> : vector<128x32xf32>
    %61 = tpu.matmul %53, %55, %cst_26 {dimension_numbers = #tpu.dot_dimension_numbers<[1], [0], [0], [1], [0, 0, 1, 1], [], []>} : vector<128x32xbf16>, vector<32x32xbf16>, vector<128x32xf32> -> vector<128x32xf32>
    %62 = vector.broadcast %58 : vector<1x32xf32> to vector<128x32xf32>
    %63 = arith.addf %61, %62 : vector<128x32xf32>
    %64 = arith.truncf %63 : vector<128x32xf32> to vector<128x32xbf16>
    %65 = vector.shape_cast %64 : vector<128x32xbf16> to vector<1x128x32xbf16>
    "tpu.trace_start"() <{level = 10 : i32, message = "bls,bsh->blh"}> : () -> ()
    %cst_27 = arith.constant dense<0.000000e+00> : vector<1x128x32xf32>
    %66 = tpu.matmul %9, %65, %cst_27 {dimension_numbers = #tpu.dot_dimension_numbers<[2], [1], [1], [2], [0, 0, 0, 1, 1, 2], [0], [0]>} : vector<1x128x128xbf16>, vector<1x128x32xbf16>, vector<1x128x32xf32> -> vector<1x128x32xf32>
    "tpu.trace_stop"() : () -> ()
    %67 = vector.shape_cast %66 : vector<1x128x32xf32> to vector<128x32xf32>
    %cst_28 = arith.constant dense<0.000000e+00> : vector<128xf32>
    %68 = vector.multi_reduction <add>, %67, %cst_28 [1] : vector<128x32xf32> to vector<128xf32>
    %69 = vector.shape_cast %68 : vector<128xf32> to vector<128x1xf32>
    %70 = arith.mulf %67, %67 : vector<128x32xf32>
    %cst_29 = arith.constant dense<0.000000e+00> : vector<128xf32>
    %71 = vector.multi_reduction <add>, %70, %cst_29 [1] : vector<128x32xf32> to vector<128xf32>
    %72 = vector.shape_cast %71 : vector<128xf32> to vector<128x1xf32>
    %cst_30 = arith.constant 3.125000e-02 : f32
    %73 = vector.broadcast %cst_30 : f32 to vector<128x1xf32>
    %74 = arith.mulf %69, %73 : vector<128x1xf32>
    %75 = arith.mulf %74, %69 : vector<128x1xf32>
    %76 = arith.subf %72, %75 : vector<128x1xf32>
    %cst_31 = arith.constant 0.000000e+00 : f32
    %77 = vector.broadcast %cst_31 : f32 to vector<128x1xf32>
    %78 = arith.maximumf %76, %77 : vector<128x1xf32>
    %cst_32 = arith.constant 0.0322580636 : f32
    %79 = vector.broadcast %cst_32 : f32 to vector<128x1xf32>
    %80 = arith.mulf %78, %79 : vector<128x1xf32>
    %81 = math.sqrt %80 : vector<128x1xf32>
    %cst_33 = arith.constant 1.000000e-03 : f32
    %82 = vector.broadcast %cst_33 : f32 to vector<128x1xf32>
    %83 = arith.addf %81, %82 : vector<128x1xf32>
    %84 = tpu.reciprocal %83 : vector<128x1xf32> -> vector<128x1xf32>
    %85 = vector.broadcast %74 : vector<128x1xf32> to vector<128x32xf32>
    %86 = arith.subf %67, %85 : vector<128x32xf32>
    %87 = vector.broadcast %84 : vector<128x1xf32> to vector<128x32xf32>
    %88 = arith.mulf %86, %87 : vector<128x32xf32>
    %89 = vector.broadcast %59 : vector<1x32xf32> to vector<128x32xf32>
    %90 = arith.mulf %88, %89 : vector<128x32xf32>
    %91 = vector.broadcast %60 : vector<1x32xf32> to vector<128x32xf32>
    %92 = arith.addf %90, %91 : vector<128x32xf32>
    %cst_34 = arith.constant 0.000000e+00 : f32
    %93 = vector.broadcast %cst_34 : f32 to vector<128x32xf32>
    %94 = arith.maximumf %92, %93 : vector<128x32xf32>
    %95 = arith.truncf %94 : vector<128x32xf32> to vector<128x32xbf16>
    %c2 = arith.constant 2 : index
    %c0_35 = arith.constant 0 : index
    %c0_36 = arith.constant 0 : index
    %96 = vector.load %arg3[%c2, %c0_35, %c0_36] : memref<3x32x32xbf16, #tpu.memory_space<vmem>>, vector<1x32x32xbf16>
    %97 = vector.shape_cast %96 : vector<1x32x32xbf16> to vector<32x32xbf16>
    %c2_37 = arith.constant 2 : index
    %c0_38 = arith.constant 0 : index
    %c0_39 = arith.constant 0 : index
    %98 = vector.load %arg4[%c2_37, %c0_38, %c0_39] : memref<3x3x32xf32, #tpu.memory_space<vmem>>, vector<1x3x32xf32>
    %99 = vector.shape_cast %98 : vector<1x3x32xf32> to vector<3x32xf32>
    %100 = vector.extract_strided_slice %99 {offsets = [0, 0], sizes = [1, 32], strides = [1, 1]} : vector<3x32xf32> to vector<1x32xf32>
    %101 = vector.extract_strided_slice %99 {offsets = [1, 0], sizes = [1, 32], strides = [1, 1]} : vector<3x32xf32> to vector<1x32xf32>
    %102 = vector.extract_strided_slice %99 {offsets = [2, 0], sizes = [1, 32], strides = [1, 1]} : vector<3x32xf32> to vector<1x32xf32>
    %cst_40 = arith.constant dense<0.000000e+00> : vector<128x32xf32>
    %103 = tpu.matmul %95, %97, %cst_40 {dimension_numbers = #tpu.dot_dimension_numbers<[1], [0], [0], [1], [0, 0, 1, 1], [], []>} : vector<128x32xbf16>, vector<32x32xbf16>, vector<128x32xf32> -> vector<128x32xf32>
    %104 = vector.broadcast %100 : vector<1x32xf32> to vector<128x32xf32>
    %105 = arith.addf %103, %104 : vector<128x32xf32>
    %106 = arith.truncf %105 : vector<128x32xf32> to vector<128x32xbf16>
    %107 = vector.shape_cast %106 : vector<128x32xbf16> to vector<1x128x32xbf16>
    "tpu.trace_start"() <{level = 10 : i32, message = "bls,bsh->blh"}> : () -> ()
    %cst_41 = arith.constant dense<0.000000e+00> : vector<1x128x32xf32>
    %108 = tpu.matmul %9, %107, %cst_41 {dimension_numbers = #tpu.dot_dimension_numbers<[2], [1], [1], [2], [0, 0, 0, 1, 1, 2], [0], [0]>} : vector<1x128x128xbf16>, vector<1x128x32xbf16>, vector<1x128x32xf32> -> vector<1x128x32xf32>
    "tpu.trace_stop"() : () -> ()
    %109 = vector.shape_cast %108 : vector<1x128x32xf32> to vector<128x32xf32>
    %cst_42 = arith.constant dense<0.000000e+00> : vector<128xf32>
    %110 = vector.multi_reduction <add>, %109, %cst_42 [1] : vector<128x32xf32> to vector<128xf32>
    %111 = vector.shape_cast %110 : vector<128xf32> to vector<128x1xf32>
    %112 = arith.mulf %109, %109 : vector<128x32xf32>
    %cst_43 = arith.constant dense<0.000000e+00> : vector<128xf32>
    %113 = vector.multi_reduction <add>, %112, %cst_43 [1] : vector<128x32xf32> to vector<128xf32>
    %114 = vector.shape_cast %113 : vector<128xf32> to vector<128x1xf32>
    %cst_44 = arith.constant 3.125000e-02 : f32
    %115 = vector.broadcast %cst_44 : f32 to vector<128x1xf32>
    %116 = arith.mulf %111, %115 : vector<128x1xf32>
    %117 = arith.mulf %116, %111 : vector<128x1xf32>
    %118 = arith.subf %114, %117 : vector<128x1xf32>
    %cst_45 = arith.constant 0.000000e+00 : f32
    %119 = vector.broadcast %cst_45 : f32 to vector<128x1xf32>
    %120 = arith.maximumf %118, %119 : vector<128x1xf32>
    %cst_46 = arith.constant 0.0322580636 : f32
    %121 = vector.broadcast %cst_46 : f32 to vector<128x1xf32>
    %122 = arith.mulf %120, %121 : vector<128x1xf32>
    %123 = math.sqrt %122 : vector<128x1xf32>
    %cst_47 = arith.constant 1.000000e-03 : f32
    %124 = vector.broadcast %cst_47 : f32 to vector<128x1xf32>
    %125 = arith.addf %123, %124 : vector<128x1xf32>
    %126 = tpu.reciprocal %125 : vector<128x1xf32> -> vector<128x1xf32>
    %127 = vector.broadcast %116 : vector<128x1xf32> to vector<128x32xf32>
    %128 = arith.subf %109, %127 : vector<128x32xf32>
    %129 = vector.broadcast %126 : vector<128x1xf32> to vector<128x32xf32>
    %130 = arith.mulf %128, %129 : vector<128x32xf32>
    %131 = vector.broadcast %101 : vector<1x32xf32> to vector<128x32xf32>
    %132 = arith.mulf %130, %131 : vector<128x32xf32>
    %133 = vector.broadcast %102 : vector<1x32xf32> to vector<128x32xf32>
    %134 = arith.addf %132, %133 : vector<128x32xf32>
    %cst_48 = arith.constant 0.000000e+00 : f32
    %135 = vector.broadcast %cst_48 : f32 to vector<128x32xf32>
    %136 = arith.maximumf %134, %135 : vector<128x32xf32>
    %137 = arith.truncf %136 : vector<128x32xf32> to vector<128x32xbf16>
    %c0_49 = arith.constant 0 : index
    %c0_50 = arith.constant 0 : index
    %138 = vector.load %arg5[%c0_49, %c0_50] : memref<32x128xbf16, #tpu.memory_space<vmem>>, vector<32x128xbf16>
    %cst_51 = arith.constant dense<0.000000e+00> : vector<128x128xf32>
    %139 = tpu.matmul %137, %138, %cst_51 {dimension_numbers = #tpu.dot_dimension_numbers<[1], [0], [0], [1], [0, 0, 1, 1], [], []>} : vector<128x32xbf16>, vector<32x128xbf16>, vector<128x128xf32> -> vector<128x128xf32>
    %140 = vector.shape_cast %139 : vector<128x128xf32> to vector<1x128x128xf32>
    %141 = arith.truncf %140 : vector<1x128x128xf32> to vector<1x128x128xbf16>
    %c0_52 = arith.constant 0 : index
    %c0_53 = arith.constant 0 : index
    %c0_54 = arith.constant 0 : index
    %142 = vector.load %arg6[%c0_52, %c0_53, %c0_54] : memref<1x128x128xbf16, #tpu.memory_space<vmem>>, vector<1x128x128xbf16>
    tpu.vector_store %arg6[%c0_52, %c0_53, %c0_54], %141 {strides = array<i32>} : memref<1x128x128xbf16, #tpu.memory_space<vmem>>, vector<1x128x128xbf16>,
    return
  }
  func.func @transform_0(%arg0: i32) -> (i32, i32, i32) {
    %c0_i32 = arith.constant 0 : i32
    %c0_i32_0 = arith.constant 0 : i32
    %c0_i32_1 = arith.constant 0 : i32
    return %arg0, %c0_i32, %c0_i32_0 : i32, i32, i32
  }
  func.func @transform_1(%arg0: i32) -> (i32, i32, i32) {
    %c0_i32 = arith.constant 0 : i32
    %c0_i32_0 = arith.constant 0 : i32
    %c0_i32_1 = arith.constant 0 : i32
    return %arg0, %c0_i32, %c0_i32_0 : i32, i32, i32
  }
  func.func @transform_2(%arg0: i32) -> (i32, i32, i32) {
    %c0_i32 = arith.constant 0 : i32
    %c0_i32_0 = arith.constant 0 : i32
    %c0_i32_1 = arith.constant 0 : i32
    %c0_i32_2 = arith.constant 0 : i32
    return %c0_i32, %c0_i32_0, %c0_i32_1 : i32, i32, i32
  }
  func.func @transform_3(%arg0: i32) -> (i32, i32, i32) {
    %c0_i32 = arith.constant 0 : i32
    %c0_i32_0 = arith.constant 0 : i32
    %c0_i32_1 = arith.constant 0 : i32
    %c0_i32_2 = arith.constant 0 : i32
    return %c0_i32, %c0_i32_0, %c0_i32_1 : i32, i32, i32
  }
  func.func @transform_4(%arg0: i32) -> (i32, i32) {
    %c0_i32 = arith.constant 0 : i32
    %c0_i32_0 = arith.constant 0 : i32
    %c0_i32_1 = arith.constant 0 : i32
    return %c0_i32, %c0_i32_0 : i32, i32
  }
  func.func @transform_5(%arg0: i32) -> (i32, i32, i32) {
    %c0_i32 = arith.constant 0 : i32
    %c0_i32_0 = arith.constant 0 : i32
    %c0_i32_1 = arith.constant 0 : i32
    return %arg0, %c0_i32, %c0_i32_0 : i32, i32, i32
  }
}

</mosaic_0001>

<llo_original>
// kernel: tpu_custom_call.1
$region0: #{tpu_custom_call.1}
  #allocation0 [shape = 'u32[]', space=smem, size = 0x4, offset = 0x4, fixed_abs, tag = 'smem constant byte address 0x4 - core index']
  #allocation1 [shape = 'u32[72,128]{1,0:T(1,128)}', space=vmem, size = 0x9000, scoped, tag = 'internal scratch']
  %s0 = inlined_call_operand.vmem [shape: bf16[2,128,128], index: 0, kind: input, shape index: {}]
  %s1 = inlined_call_operand.vmem [shape: bf16[2,128,32], index: 1, kind: input, shape index: {}]
  %s2 = inlined_call_operand.hbm [shape: bf16[3,32,32], index: 2, kind: input, shape index: {}]
  %s3 = inlined_call_operand.vmem [shape: f32[3,3,32], index: 3, kind: input, shape index: {}]
  %s4 = inlined_call_operand.vmem [shape: bf16[32,128], index: 4, kind: input, shape index: {}]
  %s5 = inlined_call_operand.hbm [shape: bf16[2,128,128], index: 5, kind: output, shape index: {}]
  %s6 = sld [smem:[#allocation0]]
  $region57: #{tpu_custom_call.1} parent=0
    _
  %s8 = ssub.s32 1, %s6
  %s9 = scalar_select 0, %s8, %s6
  $region1: #{tpu_custom_call.1} parent=0
    #allocation2 [shape = 'u8[24576]{0}', space=vmem, size = 0x6000, scoped, tag = 'input window, operand 2, single buffered']
    #allocation3 [shape = 's32[2]{0}', space=sflag, size = 0x8, scoped, tag = 'scoped memory for tpu_custom_call.1']
    #allocation4 [shape = 's32[2]{0}', space=sflag, size = 0x8, scoped, tag = 'scoped memory for tpu_custom_call.1']
    #allocation5 [shape = 'u8[65536]{0}', space=vmem, size = 0x10000, scoped, tag = 'output window, operand 0']
    %10 = vsyncpa [#allocation3], 0
    %11 = vsyncpa [#allocation4], 0
    %s12 = scalar_lea.sflag [#allocation4], 1
    %13 = vsyncpa %s12, 0
    loop: start=0, step=1, limit=4
    $region2: #{tpu_custom_call.1} parent=1 // loop_pre_header
      _
    $region3: #{tpu_custom_call.1} parent=1 // loop_header
      %s15 = sphi 0, %s19
      %p16 = scmp.ge.s32.totalorder %s15, 4
      %s25 = sphi 0, %s27
      %s28 = sphi 0, %s25
      %s29 = sphi 0, %s28
      %s45 = sphi 0, %s29
      %s51 = sphi 0, %s53
      %s54 = sphi 0, %s51
      %s55 = sphi 0, %s54
      %s71 = sphi 0, %s55
      %s75 = sphi 0, %s75
      %s77 = sphi 0, %s75
      %s78 = sphi 0, %s77
      %s92 = sphi 0, %s78
      %s96 = sphi 0, %s96
      %s98 = sphi 0, %s96
      %s99 = sphi 0, %s98
      %s113 = sphi 0, %s99
      %s117 = sphi 0, %s117
      %s119 = sphi 0, %s117
      %s120 = sphi 0, %s119
      %s134 = sphi 0, %s120
      %s140 = sphi 0, %s142
      %s143 = sphi 0, %s140
      %s144 = sphi 0, %s143
      %s160 = sphi 0, %s144
    $region4: #{tpu_custom_call.1} parent=1 // loop_header_branch
      %18 = sbr.rel (%p16) target = $region8
    $region5: #{tpu_custom_call.1} parent=1 // loop_body
      %s20 = ssub.s32 %s15, 1
      %s21 = ssub.s32 %s15, 2
      %s22 = sadd.s32 %s15, 1
      %s23 = ssub.s32 %s15, %s22
      %p24 = scmp.eq.s32.totalorder %s23, 0
      %s26 = sadd.s32 %s25, 1
      %s27 = scalar_select %p24, %s25, %s26
      %p30 = pneg %p24
      %p31 = scmp.eq.s32.totalorder %s15, 1
      %p32 = por %p30, %p31
      %p33 = scmp.ne.s32.totalorder %s25, %s28
      %p34 = scmp.eq.s32.totalorder %s15, 0
      %p35 = por %p33, %p34
      %p36 = scmp.ne.s32.totalorder %s25, %s28
      %p37 = scmp.eq.s32.totalorder %s20, 1
      %p38 = por %p36, %p37
      %p39 = scmp.ne.s32.totalorder %s28, %s29
      %p40 = scmp.eq.s32.totalorder %s20, 0
      %p41 = por %p39, %p40
      %p42 = scmp.ne.s32.totalorder %s28, %s29
      %p43 = scmp.eq.s32.totalorder %s21, 1
      %p44 = por %p42, %p43
      %p46 = scmp.ne.s32.totalorder %s29, %s45
      %p47 = scmp.eq.s32.totalorder %s21, 0
      %p48 = por %p46, %p47
      %s49 = ssub.s32 %s15, %s22
      %p50 = scmp.eq.s32.totalorder %s49, 0
      %s52 = sadd.s32 %s51, 1
      %s53 = scalar_select %p50, %s51, %s52
      %p56 = pneg %p50
      %p57 = scmp.eq.s32.totalorder %s15, 1
      %p58 = por %p56, %p57
      %p59 = scmp.ne.s32.totalorder %s51, %s54
      %p60 = scmp.eq.s32.totalorder %s15, 0
      %p61 = por %p59, %p60
      %p62 = scmp.ne.s32.totalorder %s51, %s54
      %p63 = scmp.eq.s32.totalorder %s20, 1
      %p64 = por %p62, %p63
      %p65 = scmp.ne.s32.totalorder %s54, %s55
      %p66 = scmp.eq.s32.totalorder %s20, 0
      %p67 = por %p65, %p66
      %p68 = scmp.ne.s32.totalorder %s54, %s55
      %p69 = scmp.eq.s32.totalorder %s21, 1
      %p70 = por %p68, %p69
      %p72 = scmp.ne.s32.totalorder %s55, %s71
      %p73 = scmp.eq.s32.totalorder %s21, 0
      %p74 = por %p72, %p73
      %s76 = sadd.s32 %s75, 1
      %p79 = scmp.eq.s32.totalorder %s15, 1
      %p80 = scmp.ne.s32.totalorder %s75, %s77
      %p81 = scmp.eq.s32.totalorder %s15, 0
      %p82 = por %p80, %p81
      %p83 = scmp.ne.s32.totalorder %s75, %s77
      %p84 = scmp.eq.s32.totalorder %s20, 1
      %p85 = por %p83, %p84
      %p86 = scmp.ne.s32.totalorder %s77, %s78
      %p87 = scmp.eq.s32.totalorder %s20, 0
      %p88 = por %p86, %p87
      %p89 = scmp.ne.s32.totalorder %s77, %s78
      %p90 = scmp.eq.s32.totalorder %s21, 1
      %p91 = por %p89, %p90
      %p93 = scmp.ne.s32.totalorder %s78, %s92
      %p94 = scmp.eq.s32.totalorder %s21, 0
      %p95 = por %p93, %p94
      %s97 = sadd.s32 %s96, 1
      %p100 = scmp.eq.s32.totalorder %s15, 1
      %p101 = scmp.ne.s32.totalorder %s96, %s98
      %p102 = scmp.eq.s32.totalorder %s15, 0
      %p103 = por %p101, %p102
      %p104 = scmp.ne.s32.totalorder %s96, %s98
      %p105 = scmp.eq.s32.totalorder %s20, 1
      %p106 = por %p104, %p105
      %p107 = scmp.ne.s32.totalorder %s98, %s99
      %p108 = scmp.eq.s32.totalorder %s20, 0
      %p109 = por %p107, %p108
      %p110 = scmp.ne.s32.totalorder %s98, %s99
      %p111 = scmp.eq.s32.totalorder %s21, 1
      %p112 = por %p110, %p111
      %p114 = scmp.ne.s32.totalorder %s99, %s113
      %p115 = scmp.eq.s32.totalorder %s21, 0
      %p116 = por %p114, %p115
      %s118 = sadd.s32 %s117, 1
      %p121 = scmp.eq.s32.totalorder %s15, 1
      %p122 = scmp.ne.s32.totalorder %s117, %s119
      %p123 = scmp.eq.s32.totalorder %s15, 0
      %p124 = por %p122, %p123
      %p125 = scmp.ne.s32.totalorder %s117, %s119
      %p126 = scmp.eq.s32.totalorder %s20, 1
      %p127 = por %p125, %p126
      %p128 = scmp.ne.s32.totalorder %s119, %s120
      %p129 = scmp.eq.s32.totalorder %s20, 0
      %p130 = por %p128, %p129
      %p131 = scmp.ne.s32.totalorder %s119, %s120
      %p132 = scmp.eq.s32.totalorder %s21, 1
      %p133 = por %p131, %p132
      %p135 = scmp.ne.s32.totalorder %s120, %s134
      %p136 = scmp.eq.s32.totalorder %s21, 0
      %p137 = por %p135, %p136
      %s138 = ssub.s32 %s15, %s22
      %p139 = scmp.eq.s32.totalorder %s138, 0
      %s141 = sadd.s32 %s140, 1
      %s142 = scalar_select %p139, %s140, %s141
      %p145 = pneg %p139
      %p146 = scmp.eq.s32.totalorder %s15, 1
      %p147 = por %p145, %p146
      %p148 = scmp.ne.s32.totalorder %s140, %s143
      %p149 = scmp.eq.s32.totalorder %s15, 0
      %p150 = por %p148, %p149
      %p151 = scmp.ne.s32.totalorder %s140, %s143
      %p152 = scmp.eq.s32.totalorder %s20, 1
      %p153 = por %p151, %p152
      %p154 = scmp.ne.s32.totalorder %s143, %s144
      %p155 = scmp.eq.s32.totalorder %s20, 0
      %p156 = por %p154, %p155
      %p157 = scmp.ne.s32.totalorder %s143, %s144
      %p158 = scmp.eq.s32.totalorder %s21, 1
      %p159 = por %p157, %p158
      %p161 = scmp.ne.s32.totalorder %s144, %s160
      %p162 = scmp.eq.s32.totalorder %s21, 0
      %p163 = por %p161, %p162
      %p164 = scmp.le.s32.totalorder 1, %s15
      %p165 = scmp.lt.s32.totalorder %s15, 3
      %p166 = pnand %p164, %p165
      %p167 = pneg %p166
      // Predicated region
      $region9: #{tpu_custom_call.1} parent=5 // pred_check
        _
      $region10: #{tpu_custom_call.1} parent=5 // pred_check_branch
        %169 = sbr.rel (%p166) target = $region12
      $region11: #{tpu_custom_call.1} parent=5 // pred_region
        %s170 = ssub.s32 %s15, 1
        // Predicated region
        $region13: #{tpu_custom_call.1} parent=11 // pred_check
          %p171 = pneg %p88
        $region14: #{tpu_custom_call.1} parent=11 // pred_check_branch
          %173 = sbr.rel (%p171) target = $region16
        $region15: #{tpu_custom_call.1} parent=11 // pred_region
          %175 = vsyncadd [#allocation3], 0
          %s176 = sshll.u32 %s2, 4
          %s177 = int_to_ptr.hbm [resolvable:$true] %s176
          %s178 = sshll.u32 [#allocation2], 4
          %s179 = int_to_ptr.vmem [resolvable:$true] %s178
          %184 = dma.hbm_to_vmem [thread:$0]  %s177, 768, %s179, [#allocation3], 64, 64, 4
        $region16: #{tpu_custom_call.1} parent=11 // pred_fallthru
          _
        // Predicated region
        $region17: #{tpu_custom_call.1} parent=11 // pred_check
          %p185 = pneg %p109
        $region18: #{tpu_custom_call.1} parent=11 // pred_check_branch
          %187 = sbr.rel (%p185) target = $region20
        $region19: #{tpu_custom_call.1} parent=11 // pred_region
          _
        $region20: #{tpu_custom_call.1} parent=11 // pred_fallthru
          _
        // Predicated region
        $region21: #{tpu_custom_call.1} parent=11 // pred_check
          %p188 = pneg %p130
        $region22: #{tpu_custom_call.1} parent=11 // pred_check_branch
          %190 = sbr.rel (%p188) target = $region24
        $region23: #{tpu_custom_call.1} parent=11 // pred_region
          _
        $region24: #{tpu_custom_call.1} parent=11 // pred_fallthru
          _
      $region12: #{tpu_custom_call.1} parent=5 // pred_fallthru
        _
      %p191 = scmp.lt.s32.totalorder %s15, 2
      // Predicated region
      $region25: #{tpu_custom_call.1} parent=5 // pred_check
        %p192 = pneg %p191
      $region26: #{tpu_custom_call.1} parent=5 // pred_check_branch
        %194 = sbr.rel (%p192) target = $region28
      $region27: #{tpu_custom_call.1} parent=5 // pred_region
        // Predicated region
        $region29: #{tpu_custom_call.1} parent=27 // pred_check
          %p195 = pneg %p35
        $region30: #{tpu_custom_call.1} parent=27 // pred_check_branch
          %197 = sbr.rel (%p195) target = $region32
        $region31: #{tpu_custom_call.1} parent=27 // pred_region
          %p198 = scmp.lt.s32.totalorder %s15, 1
          %s199 = scalar_select %p198, %s15, 1
          %s200 = smul.addr %s199, 16
          %s201 = smul.addr %s200, 4
          %s202 = scalar_lea.vmem %s0, %s201
        $region32: #{tpu_custom_call.1} parent=27 // pred_fallthru
          _
        // Predicated region
        $region33: #{tpu_custom_call.1} parent=27 // pred_check
          %p203 = pneg %p61
        $region34: #{tpu_custom_call.1} parent=27 // pred_check_branch
          %205 = sbr.rel (%p203) target = $region36
        $region35: #{tpu_custom_call.1} parent=27 // pred_region
          %p206 = scmp.lt.s32.totalorder %s15, 1
          %s207 = scalar_select %p206, %s15, 1
          %s208 = smul.addr %s207, 16
          %s209 = smul.addr %s208, 4
          %s210 = scalar_lea.vmem %s1, %s209
        $region36: #{tpu_custom_call.1} parent=27 // pred_fallthru
          _
      $region28: #{tpu_custom_call.1} parent=5 // pred_fallthru
        _
      %p211 = scmp.le.s32.totalorder 1, %s15
      %p212 = scmp.lt.s32.totalorder %s15, 3
      %p213 = pnand %p211, %p212
      %p214 = pneg %p213
      // Predicated region
      $region37: #{tpu_custom_call.1} parent=5 // pred_check
        _
      $region38: #{tpu_custom_call.1} parent=5 // pred_check_branch
        %216 = sbr.rel (%p213) target = $region40
      $region39: #{tpu_custom_call.1} parent=5 // pred_region
        %s217 = ssub.s32 %s15, 1
        // Predicated region
        $region41: #{tpu_custom_call.1} parent=39 // pred_check
          %p218 = pneg %p88
        $region42: #{tpu_custom_call.1} parent=39 // pred_check_branch
          %220 = sbr.rel (%p218) target = $region44
        $region43: #{tpu_custom_call.1} parent=39 // pred_region
          %222 = dma.done [#allocation3], 768
        $region44: #{tpu_custom_call.1} parent=39 // pred_fallthru
          _
        %p223 = scmp.lt.s32.totalorder %s20, 1
        %s224 = scalar_select %p223, %s20, 1
        %s225 = smul.addr %s224, 16
        %s226 = smul.addr %s225, 4
        %s227 = scalar_lea.vmem %s0, %s226
        %p228 = pneg %p41
        %p229 = pneg %p38
        %p230 = scmp.lt.s32.totalorder %s20, 1
        %s231 = scalar_select %p230, %s20, 1
        %s232 = smul.addr %s231, 16
        %s233 = smul.addr %s232, 4
        %s234 = scalar_lea.vmem %s1, %s233
        %p235 = pneg %p67
        %p236 = pneg %p64
        %p237 = pneg %p88
        %p238 = pneg %p85
        %p239 = pneg %p109
        %p240 = pneg %p106
        %p241 = pneg %p130
        %p242 = pneg %p127
        %p243 = pneg %p156
        %p244 = pneg %p153
        %s245 = sand.u32 %s143, 1
        %s246 = scalar_lea.sflag [#allocation4], %s245
        %s247 = sand.u32 %s143, 1
        %s248 = smul.addr %s247, 64
        %s249 = scalar_lea.vmem [#allocation5], %s248
        %p250 = scmp.lt.s32.totalorder %s20, 1
        %s251 = scalar_select %p250, %s20, 1
        %s252 = smul.addr %s251, 16
        %s253 = smul.addr %s252, 4
        %s254 = scalar_lea.vmem %s0, %s253
        %p255 = scmp.lt.s32.totalorder %s20, 1
        %s256 = scalar_select %p255, %s20, 1
        %s257 = smul.addr %s256, 16
        %s258 = smul.addr %s257, 4
        %s259 = scalar_lea.vmem %s1, %s258
        %v261 = vld [vmem:[%s254] sm:$0xf]
        %v262 = vld [vmem:[%s254 + $0x4] sm:$0xf]
        %v263 = vld [vmem:[%s254 + $0x8] sm:$0xf]
        %v264 = vld [vmem:[%s254 + $0xc] sm:$0xf]
        %v265 = vld [vmem:[%s254 + $0x10] sm:$0xf]
        %v266 = vld [vmem:[%s254 + $0x14] sm:$0xf]
        %v267 = vld [vmem:[%s254 + $0x18] sm:$0xf]
        %v268 = vld [vmem:[%s254 + $0x1c] sm:$0xf]
        %v269 = vld [vmem:[%s254 + $0x20] sm:$0xf]
        %v270 = vld [vmem:[%s254 + $0x24] sm:$0xf]
        %v271 = vld [vmem:[%s254 + $0x28] sm:$0xf]
        %v272 = vld [vmem:[%s254 + $0x2c] sm:$0xf]
        %v273 = vld [vmem:[%s254 + $0x30] sm:$0xf]
        %v274 = vld [vmem:[%s254 + $0x34] sm:$0xf]
        %v275 = vld [vmem:[%s254 + $0x38] sm:$0xf]
        %v276 = vld [vmem:[%s254 + $0x3c] sm:$0xf]
        %v277 = vunpack.c.l.bf16 %v261
        %v278 = vunpack.c.l.bf16 %v262
        %v279 = vunpack.c.l.bf16 %v263
        %v280 = vunpack.c.l.bf16 %v264
        %v281 = vunpack.c.l.bf16 %v265
        %v282 = vunpack.c.l.bf16 %v266
        %v283 = vunpack.c.l.bf16 %v267
        %v284 = vunpack.c.l.bf16 %v268
        %v285 = vunpack.c.l.bf16 %v269
        %v286 = vunpack.c.l.bf16 %v270
        %v287 = vunpack.c.l.bf16 %v271
        %v288 = vunpack.c.l.bf16 %v272
        %v289 = vunpack.c.l.bf16 %v273
        %v290 = vunpack.c.l.bf16 %v274
        %v291 = vunpack.c.l.bf16 %v275
        %v292 = vunpack.c.l.bf16 %v276
        %293 = vadd.xlane.f32.xlu0 %v277
        %v294 = vpop.xlane.xlu0 %293
        %295 = vadd.xlane.f32.xlu0 %v278
        %v296 = vpop.xlane.xlu0 %295
        %297 = vadd.xlane.f32.xlu0 %v279
        %v298 = vpop.xlane.xlu0 %297
        %299 = vadd.xlane.f32.xlu0 %v280
        %v300 = vpop.xlane.xlu0 %299
        %301 = vadd.xlane.f32.xlu0 %v281
        %v302 = vpop.xlane.xlu0 %301
        %303 = vadd.xlane.f32.xlu0 %v282
        %v304 = vpop.xlane.xlu0 %303
        %305 = vadd.xlane.f32.xlu0 %v283
        %v306 = vpop.xlane.xlu0 %305
        %307 = vadd.xlane.f32.xlu0 %v284
        %v308 = vpop.xlane.xlu0 %307
        %309 = vadd.xlane.f32.xlu0 %v285
        %v310 = vpop.xlane.xlu0 %309
        %311 = vadd.xlane.f32.xlu0 %v286
        %v312 = vpop.xlane.xlu0 %311
        %313 = vadd.xlane.f32.xlu0 %v287
        %v314 = vpop.xlane.xlu0 %313
        %315 = vadd.xlane.f32.xlu0 %v288
        %v316 = vpop.xlane.xlu0 %315
        %317 = vadd.xlane.f32.xlu0 %v289
        %v318 = vpop.xlane.xlu0 %317
        %319 = vadd.xlane.f32.xlu0 %v290
        %v320 = vpop.xlane.xlu0 %319
        %321 = vadd.xlane.f32.xlu0 %v291
        %v322 = vpop.xlane.xlu0 %321
        %323 = vadd.xlane.f32.xlu0 %v292
        %v324 = vpop.xlane.xlu0 %323
        %v325 = vadd.f32 %v294, 1e-10
        %v326 = vadd.f32 %v296, 1e-10
        %v327 = vadd.f32 %v298, 1e-10
        %v328 = vadd.f32 %v300, 1e-10
        %v329 = vadd.f32 %v302, 1e-10
        %v330 = vadd.f32 %v304, 1e-10
        %v331 = vadd.f32 %v306, 1e-10
        %v332 = vadd.f32 %v308, 1e-10
        %v333 = vadd.f32 %v310, 1e-10
        %v334 = vadd.f32 %v312, 1e-10
        %v335 = vadd.f32 %v314, 1e-10
        %v336 = vadd.f32 %v316, 1e-10
        %v337 = vadd.f32 %v318, 1e-10
        %v338 = vadd.f32 %v320, 1e-10
        %v339 = vadd.f32 %v322, 1e-10
        %v340 = vadd.f32 %v324, 1e-10
        %v341 = vrcp.pop %v325
        %v342 = vrcp.pop %v326
        %v343 = vrcp.pop %v327
        %v344 = vrcp.pop %v328
        %v345 = vrcp.pop %v329
        %v346 = vrcp.pop %v330
        %v347 = vrcp.pop %v331
        %v348 = vrcp.pop %v332
        %v349 = vrcp.pop %v333
        %v350 = vrcp.pop %v334
        %v351 = vrcp.pop %v335
        %v352 = vrcp.pop %v336
        %v353 = vrcp.pop %v337
        %v354 = vrcp.pop %v338
        %v355 = vrcp.pop %v339
        %v356 = vrcp.pop %v340
        %v357 = vmul.f32 %v277, %v341
        %v358 = vmul.f32 %v278, %v342
        %v359 = vmul.f32 %v279, %v343
        %v360 = vmul.f32 %v280, %v344
        %v361 = vmul.f32 %v281, %v345
        %v362 = vmul.f32 %v282, %v346
        %v363 = vmul.f32 %v283, %v347
        %v364 = vmul.f32 %v284, %v348
        %v365 = vmul.f32 %v285, %v349
        %v366 = vmul.f32 %v286, %v350
        %v367 = vmul.f32 %v287, %v351
        %v368 = vmul.f32 %v288, %v352
        %v369 = vmul.f32 %v289, %v353
        %v370 = vmul.f32 %v290, %v354
        %v371 = vmul.f32 %v291, %v355
        %v372 = vmul.f32 %v292, %v356
        %v373 = vpack.c.bf16 %v357, %v357
        %v374 = vpack.c.bf16 %v358, %v358
        %v375 = vpack.c.bf16 %v359, %v359
        %v376 = vpack.c.bf16 %v360, %v360
        %v377 = vpack.c.bf16 %v361, %v361
        %v378 = vpack.c.bf16 %v362, %v362
        %v379 = vpack.c.bf16 %v363, %v363
        %v380 = vpack.c.bf16 %v364, %v364
        %v381 = vpack.c.bf16 %v365, %v365
        %v382 = vpack.c.bf16 %v366, %v366
        %v383 = vpack.c.bf16 %v367, %v367
        %v384 = vpack.c.bf16 %v368, %v368
        %v385 = vpack.c.bf16 %v369, %v369
        %v386 = vpack.c.bf16 %v370, %v370
        %v387 = vpack.c.bf16 %v371, %v371
        %v388 = vpack.c.bf16 %v372, %v372
        %v389 = vld [vmem:[%s259] sm:$0xf]
        %v390 = vld [vmem:[%s259 + $0x4] sm:$0xf]
        %v391 = vld [vmem:[%s259 + $0x8] sm:$0xf]
        %v392 = vld [vmem:[%s259 + $0xc] sm:$0xf]
        %v393 = vld [vmem:[%s259 + $0x10] sm:$0xf]
        %v394 = vld [vmem:[%s259 + $0x14] sm:$0xf]
        %v395 = vld [vmem:[%s259 + $0x18] sm:$0xf]
        %v396 = vld [vmem:[%s259 + $0x1c] sm:$0xf]
        %v397 = vld [vmem:[%s259 + $0x20] sm:$0xf]
        %v398 = vld [vmem:[%s259 + $0x24] sm:$0xf]
        %v399 = vld [vmem:[%s259 + $0x28] sm:$0xf]
        %v400 = vld [vmem:[%s259 + $0x2c] sm:$0xf]
        %v401 = vld [vmem:[%s259 + $0x30] sm:$0xf]
        %v402 = vld [vmem:[%s259 + $0x34] sm:$0xf]
        %v403 = vld [vmem:[%s259 + $0x38] sm:$0xf]
        %v404 = vld [vmem:[%s259 + $0x3c] sm:$0xf]
        %v405 = vld [vmem:[#allocation2] sm:$0xf]
        %v406 = vld [vmem:[#allocation2 + $0x4] sm:$0xf]
        %v407 = vld [vmem:[#allocation2 + $0x8] sm:$0xf]
        %v408 = vld [vmem:[#allocation2 + $0xc] sm:$0xf]
        %v409 = vld [vmem:[%s3] sm:$0x7]
        %v410 = vperm.slane %v409, 0
        %v427 = vunpack.c.l.b16 %v389
        %v428 = vunpack.c.l.b16 %v390
        %v429 = vunpack.c.l.b16 %v391
        %v430 = vunpack.c.l.b16 %v392
        %v431 = vunpack.c.l.b16 %v393
        %v432 = vunpack.c.l.b16 %v394
        %v433 = vunpack.c.l.b16 %v395
        %v434 = vunpack.c.l.b16 %v396
        %v435 = vunpack.c.l.b16 %v397
        %v436 = vunpack.c.l.b16 %v398
        %v437 = vunpack.c.l.b16 %v399
        %v438 = vunpack.c.l.b16 %v400
        %v439 = vunpack.c.l.b16 %v401
        %v440 = vunpack.c.l.b16 %v402
        %v441 = vunpack.c.l.b16 %v403
        %v442 = vunpack.c.l.b16 %v404
        %v443 = vpack.c.b16 %v428, %v427
        %v444 = vpack.c.b16 %v430, %v429
        %v445 = vpack.c.b16 %v432, %v431
        %v446 = vpack.c.b16 %v434, %v433
        %v447 = vpack.c.b16 %v436, %v435
        %v448 = vpack.c.b16 %v438, %v437
        %v449 = vpack.c.b16 %v440, %v439
        %v450 = vpack.c.b16 %v442, %v441
        %v455 = vunpack.c.l.b16 %v405
        %v456 = vunpack.c.l.b16 %v406
        %v457 = vunpack.c.l.b16 %v407
        %v458 = vunpack.c.l.b16 %v408
        %v459 = vpack.c.b16 %v456, %v455
        %v460 = vpack.c.b16 %v458, %v457
        %vm463 = vcmask 261120
        %v465 = vsel %vm463, %v443, 0
        %v468 = vsel %vm463, %v444, 0
        %v471 = vsel %vm463, %v445, 0
        %v474 = vsel %vm463, %v446, 0
        %v477 = vsel %vm463, %v447, 0
        %v480 = vsel %vm463, %v448, 0
        %v483 = vsel %vm463, %v449, 0
        %v486 = vsel %vm463, %v450, 0
        %488 = vmatpush.bf16.msra.mxu0 0
        %489 = vmatpush.bf16.msra.mxu0 0
        %490 = vmatpush.bf16.msra.mxu0 0
        %491 = vmatpush.bf16.msra.mxu0 0
        %492 = vmatpush.bf16.msra.mxu0 0
        %493 = vmatpush.bf16.msra.mxu0 0
        %494 = vmatpush.bf16.msra.mxu0 %v460
        %495 = vmatpush.bf16.msra.mxu0 %v459
        %496 = vmatmul.bf16.gmra.mxu0 %v465
        %v497 = vpop.f32.mrf.mxu0
        %v498 = vadd.f32 %v410, %v497
        %v499 = vpop.f32.mrf.mxu0
        %v500 = vadd.f32 %v410, %v499
        %501 = vmatmul.bf16.gmra.mxu0 %v468
        %v502 = vpop.f32.mrf.mxu0
        %v503 = vadd.f32 %v410, %v502
        %v504 = vpop.f32.mrf.mxu0
        %v505 = vadd.f32 %v410, %v504
        %506 = vmatmul.bf16.gmra.mxu0 %v471
        %v507 = vpop.f32.mrf.mxu0
        %v508 = vadd.f32 %v410, %v507
        %v509 = vpop.f32.mrf.mxu0
        %v510 = vadd.f32 %v410, %v509
        %511 = vmatmul.bf16.gmra.mxu0 %v474
        %v512 = vpop.f32.mrf.mxu0
        %v513 = vadd.f32 %v410, %v512
        %v514 = vpop.f32.mrf.mxu0
        %v515 = vadd.f32 %v410, %v514
        %516 = vmatmul.bf16.gmra.mxu0 %v477
        %v517 = vpop.f32.mrf.mxu0
        %v518 = vadd.f32 %v410, %v517
        %v519 = vpop.f32.mrf.mxu0
        %v520 = vadd.f32 %v410, %v519
        %521 = vmatmul.bf16.gmra.mxu0 %v480
        %v522 = vpop.f32.mrf.mxu0
        %v523 = vadd.f32 %v410, %v522
        %v524 = vpop.f32.mrf.mxu0
        %v525 = vadd.f32 %v410, %v524
        %526 = vmatmul.bf16.gmra.mxu0 %v483
        %v527 = vpop.f32.mrf.mxu0
        %v528 = vadd.f32 %v410, %v527
        %v529 = vpop.f32.mrf.mxu0
        %v530 = vadd.f32 %v410, %v529
        %531 = vmatmul.bf16.gmra.mxu0 %v486
        %v532 = vpop.f32.mrf.mxu0
        %v533 = vadd.f32 %v410, %v532
        %v534 = vpop.f32.mrf.mxu0
        %v535 = vadd.f32 %v410, %v534
        %536 = vdwg.mxu0
        %v537 = vpack.c.bf16 %v498, %v498
        %v538 = vpack.c.bf16 %v500, %v500
        %v539 = vpack.c.bf16 %v503, %v503
        %v540 = vpack.c.bf16 %v505, %v505
        %v541 = vpack.c.bf16 %v508, %v508
        %v542 = vpack.c.bf16 %v510, %v510
        %v543 = vpack.c.bf16 %v513, %v513
        %v544 = vpack.c.bf16 %v515, %v515
        %v545 = vpack.c.bf16 %v518, %v518
        %v546 = vpack.c.bf16 %v520, %v520
        %v547 = vpack.c.bf16 %v523, %v523
        %v548 = vpack.c.bf16 %v525, %v525
        %v549 = vpack.c.bf16 %v528, %v528
        %v550 = vpack.c.bf16 %v530, %v530
        %v551 = vpack.c.bf16 %v533, %v533
        %v552 = vpack.c.bf16 %v535, %v535
        %v569 = vunpack.c.l.b16 %v373
        %v570 = vunpack.c.l.b16 %v374
        %v571 = vunpack.c.l.b16 %v375
        %v572 = vunpack.c.l.b16 %v376
        %v573 = vunpack.c.l.b16 %v377
        %v574 = vunpack.c.l.b16 %v378
        %v575 = vunpack.c.l.b16 %v379
        %v576 = vunpack.c.l.b16 %v380
        %v577 = vunpack.c.l.b16 %v381
        %v578 = vunpack.c.l.b16 %v382
        %v579 = vunpack.c.l.b16 %v383
        %v580 = vunpack.c.l.b16 %v384
        %v581 = vunpack.c.l.b16 %v385
        %v582 = vunpack.c.l.b16 %v386
        %v583 = vunpack.c.l.b16 %v387
        %v584 = vunpack.c.l.b16 %v388
        %v585 = vpack.c.b16 %v570, %v569
        %v586 = vpack.c.b16 %v572, %v571
        %v587 = vpack.c.b16 %v574, %v573
        %v588 = vpack.c.b16 %v576, %v575
        %v589 = vpack.c.b16 %v578, %v577
        %v590 = vpack.c.b16 %v580, %v579
        %v591 = vpack.c.b16 %v582, %v581
        %v592 = vpack.c.b16 %v584, %v583
        %v617 = vunpack.c.l.b16 %v537
        %v618 = vunpack.c.l.b16 %v538
        %v619 = vunpack.c.l.b16 %v539
        %v620 = vunpack.c.l.b16 %v540
        %v621 = vunpack.c.l.b16 %v541
        %v622 = vunpack.c.l.b16 %v542
        %v623 = vunpack.c.l.b16 %v543
        %v624 = vunpack.c.l.b16 %v544
        %v625 = vunpack.c.l.b16 %v545
        %v626 = vunpack.c.l.b16 %v546
        %v627 = vunpack.c.l.b16 %v547
        %v628 = vunpack.c.l.b16 %v548
        %v629 = vunpack.c.l.b16 %v549
        %v630 = vunpack.c.l.b16 %v550
        %v631 = vunpack.c.l.b16 %v551
        %v632 = vunpack.c.l.b16 %v552
        %v633 = vpack.c.b16 %v618, %v617
        %v634 = vpack.c.b16 %v620, %v619
        %v635 = vpack.c.b16 %v622, %v621
        %v636 = vpack.c.b16 %v624, %v623
        %v637 = vpack.c.b16 %v626, %v625
        %v638 = vpack.c.b16 %v628, %v627
        %v639 = vpack.c.b16 %v630, %v629
        %v640 = vpack.c.b16 %v632, %v631
        %649 = vmatpush.bf16.msra.mxu0 %v640
        %650 = vmatpush.bf16.msra.mxu0 %v639
        %651 = vmatpush.bf16.msra.mxu0 %v638
        %652 = vmatpush.bf16.msra.mxu0 %v637
        %653 = vmatpush.bf16.msra.mxu0 %v636
        %654 = vmatpush.bf16.msra.mxu0 %v635
        %655 = vmatpush.bf16.msra.mxu0 %v634
        %656 = vmatpush.bf16.msra.mxu0 %v633
        %657 = vmatmul.bf16.gmra.mxu0 %v585
        %v658 = vpop.f32.mrf.mxu0
        %v659 = vadd.f32 0.0, %v658
        %v660 = vpop.f32.mrf.mxu0
        %v661 = vadd.f32 0.0, %v660
        %662 = vmatmul.bf16.gmra.mxu0 %v586
        %v663 = vpop.f32.mrf.mxu0
        %v664 = vadd.f32 0.0, %v663
        %v665 = vpop.f32.mrf.mxu0
        %v666 = vadd.f32 0.0, %v665
        %667 = vmatmul.bf16.gmra.mxu0 %v587
        %v668 = vpop.f32.mrf.mxu0
        %v669 = vadd.f32 0.0, %v668
        %v670 = vpop.f32.mrf.mxu0
        %v671 = vadd.f32 0.0, %v670
        %672 = vmatmul.bf16.gmra.mxu0 %v588
        %v673 = vpop.f32.mrf.mxu0
        %v674 = vadd.f32 0.0, %v673
        %v675 = vpop.f32.mrf.mxu0
        %v676 = vadd.f32 0.0, %v675
        %677 = vmatmul.bf16.gmra.mxu0 %v589
        %v678 = vpop.f32.mrf.mxu0
        %v679 = vadd.f32 0.0, %v678
        %v680 = vpop.f32.mrf.mxu0
        %v681 = vadd.f32 0.0, %v680
        %682 = vmatmul.bf16.gmra.mxu0 %v590
        %v683 = vpop.f32.mrf.mxu0
        %v684 = vadd.f32 0.0, %v683
        %v685 = vpop.f32.mrf.mxu0
        %v686 = vadd.f32 0.0, %v685
        %687 = vmatmul.bf16.gmra.mxu0 %v591
        %v688 = vpop.f32.mrf.mxu0
        %v689 = vadd.f32 0.0, %v688
        %v690 = vpop.f32.mrf.mxu0
        %v691 = vadd.f32 0.0, %v690
        %692 = vmatmul.bf16.gmra.mxu0 %v592
        %v693 = vpop.f32.mrf.mxu0
        %v694 = vadd.f32 0.0, %v693
        %v695 = vpop.f32.mrf.mxu0
        %v696 = vadd.f32 0.0, %v695
        %697 = vdwg.mxu0
        %v698 = vsel %vm463, %v659, 0.0
        %699 = vadd.xlane.f32.xlu0 %v698
        %v700 = vpop.xlane.xlu0 %699
        %v701 = vsel %vm463, %v661, 0.0
        %702 = vadd.xlane.f32.xlu0 %v701
        %v703 = vpop.xlane.xlu0 %702
        %v704 = vsel %vm463, %v664, 0.0
        %705 = vadd.xlane.f32.xlu0 %v704
        %v706 = vpop.xlane.xlu0 %705
        %v707 = vsel %vm463, %v666, 0.0
        %708 = vadd.xlane.f32.xlu0 %v707
        %v709 = vpop.xlane.xlu0 %708
        %v710 = vsel %vm463, %v669, 0.0
        %711 = vadd.xlane.f32.xlu0 %v710
        %v712 = vpop.xlane.xlu0 %711
        %v713 = vsel %vm463, %v671, 0.0
        %714 = vadd.xlane.f32.xlu0 %v713
        %v715 = vpop.xlane.xlu0 %714
        %v716 = vsel %vm463, %v674, 0.0
        %717 = vadd.xlane.f32.xlu0 %v716
        %v718 = vpop.xlane.xlu0 %717
        %v719 = vsel %vm463, %v676, 0.0
        %720 = vadd.xlane.f32.xlu0 %v719
        %v721 = vpop.xlane.xlu0 %720
        %v722 = vsel %vm463, %v679, 0.0
        %723 = vadd.xlane.f32.xlu0 %v722
        %v724 = vpop.xlane.xlu0 %723
        %v725 = vsel %vm463, %v681, 0.0
        %726 = vadd.xlane.f32.xlu0 %v725
        %v727 = vpop.xlane.xlu0 %726
        %v728 = vsel %vm463, %v684, 0.0
        %729 = vadd.xlane.f32.xlu0 %v728
        %v730 = vpop.xlane.xlu0 %729
        %v731 = vsel %vm463, %v686, 0.0
        %732 = vadd.xlane.f32.xlu0 %v731
        %v733 = vpop.xlane.xlu0 %732
        %v734 = vsel %vm463, %v689, 0.0
        %735 = vadd.xlane.f32.xlu0 %v734
        %v736 = vpop.xlane.xlu0 %735
        %v737 = vsel %vm463, %v691, 0.0
        %738 = vadd.xlane.f32.xlu0 %v737
        %v739 = vpop.xlane.xlu0 %738
        %v740 = vsel %vm463, %v694, 0.0
        %741 = vadd.xlane.f32.xlu0 %v740
        %v742 = vpop.xlane.xlu0 %741
        %v743 = vsel %vm463, %v696, 0.0
        %744 = vadd.xlane.f32.xlu0 %v743
        %v745 = vpop.xlane.xlu0 %744
        %v746 = vmul.f32 %v659, %v659
        %v747 = vmul.f32 %v661, %v661
        %v748 = vmul.f32 %v664, %v664
        %v749 = vmul.f32 %v666, %v666
        %v750 = vmul.f32 %v669, %v669
        %v751 = vmul.f32 %v671, %v671
        %v752 = vmul.f32 %v674, %v674
        %v753 = vmul.f32 %v676, %v676
        %v754 = vmul.f32 %v679, %v679
        %v755 = vmul.f32 %v681, %v681
        %v756 = vmul.f32 %v684, %v684
        %v757 = vmul.f32 %v686, %v686
        %v758 = vmul.f32 %v689, %v689
        %v759 = vmul.f32 %v691, %v691
        %v760 = vmul.f32 %v694, %v694
        %v761 = vmul.f32 %v696, %v696
        %v762 = vsel %vm463, %v746, 0.0
        %763 = vadd.xlane.f32.xlu0 %v762
        %v764 = vpop.xlane.xlu0 %763
        %v765 = vsel %vm463, %v747, 0.0
        %766 = vadd.xlane.f32.xlu0 %v765
        %v767 = vpop.xlane.xlu0 %766
        %v768 = vsel %vm463, %v748, 0.0
        %769 = vadd.xlane.f32.xlu0 %v768
        %v770 = vpop.xlane.xlu0 %769
        %v771 = vsel %vm463, %v749, 0.0
        %772 = vadd.xlane.f32.xlu0 %v771
        %v773 = vpop.xlane.xlu0 %772
        %v774 = vsel %vm463, %v750, 0.0
        %775 = vadd.xlane.f32.xlu0 %v774
        %v776 = vpop.xlane.xlu0 %775
        %v777 = vsel %vm463, %v751, 0.0
        %778 = vadd.xlane.f32.xlu0 %v777
        %v779 = vpop.xlane.xlu0 %778
        %v780 = vsel %vm463, %v752, 0.0
        %781 = vadd.xlane.f32.xlu0 %v780
        %v782 = vpop.xlane.xlu0 %781
        %v783 = vsel %vm463, %v753, 0.0
        %784 = vadd.xlane.f32.xlu0 %v783
        %v785 = vpop.xlane.xlu0 %784
        %v786 = vsel %vm463, %v754, 0.0
        %787 = vadd.xlane.f32.xlu0 %v786
        %v788 = vpop.xlane.xlu0 %787
        %v789 = vsel %vm463, %v755, 0.0
        %790 = vadd.xlane.f32.xlu0 %v789
        %v791 = vpop.xlane.xlu0 %790
        %v792 = vsel %vm463, %v756, 0.0
        %793 = vadd.xlane.f32.xlu0 %v792
        %v794 = vpop.xlane.xlu0 %793
        %v795 = vsel %vm463, %v757, 0.0
        %796 = vadd.xlane.f32.xlu0 %v795
        %v797 = vpop.xlane.xlu0 %796
        %v798 = vsel %vm463, %v758, 0.0
        %799 = vadd.xlane.f32.xlu0 %v798
        %v800 = vpop.xlane.xlu0 %799
        %v801 = vsel %vm463, %v759, 0.0
        %802 = vadd.xlane.f32.xlu0 %v801
        %v803 = vpop.xlane.xlu0 %802
        %v804 = vsel %vm463, %v760, 0.0
        %805 = vadd.xlane.f32.xlu0 %v804
        %v806 = vpop.xlane.xlu0 %805
        %v807 = vsel %vm463, %v761, 0.0
        %808 = vadd.xlane.f32.xlu0 %v807
        %v809 = vpop.xlane.xlu0 %808
        %v810 = vmul.f32 %v700, 0.03125
        %v811 = vmul.f32 %v703, 0.03125
        %v812 = vmul.f32 %v706, 0.03125
        %v813 = vmul.f32 %v709, 0.03125
        %v814 = vmul.f32 %v712, 0.03125
        %v815 = vmul.f32 %v715, 0.03125
        %v816 = vmul.f32 %v718, 0.03125
        %v817 = vmul.f32 %v721, 0.03125
        %v818 = vmul.f32 %v724, 0.03125
        %v819 = vmul.f32 %v727, 0.03125
        %v820 = vmul.f32 %v730, 0.03125
        %v821 = vmul.f32 %v733, 0.03125
        %v822 = vmul.f32 %v736, 0.03125
        %v823 = vmul.f32 %v739, 0.03125
        %v824 = vmul.f32 %v742, 0.03125
        %v825 = vmul.f32 %v745, 0.03125
        %v826 = vmul.f32 %v810, %v700
        %v827 = vmul.f32 %v811, %v703
        %v828 = vmul.f32 %v812, %v706
        %v829 = vmul.f32 %v813, %v709
        %v830 = vmul.f32 %v814, %v712
        %v831 = vmul.f32 %v815, %v715
        %v832 = vmul.f32 %v816, %v718
        %v833 = vmul.f32 %v817, %v721
        %v834 = vmul.f32 %v818, %v724
        %v835 = vmul.f32 %v819, %v727
        %v836 = vmul.f32 %v820, %v730
        %v837 = vmul.f32 %v821, %v733
        %v838 = vmul.f32 %v822, %v736
        %v839 = vmul.f32 %v823, %v739
        %v840 = vmul.f32 %v824, %v742
        %v841 = vmul.f32 %v825, %v745
        %v842 = vsub.f32 %v764, %v826
        %v843 = vsub.f32 %v767, %v827
        %v844 = vsub.f32 %v770, %v828
        %v845 = vsub.f32 %v773, %v829
        %v846 = vsub.f32 %v776, %v830
        %v847 = vsub.f32 %v779, %v831
        %v848 = vsub.f32 %v782, %v832
        %v849 = vsub.f32 %v785, %v833
        %v850 = vsub.f32 %v788, %v834
        %v851 = vsub.f32 %v791, %v835
        %v852 = vsub.f32 %v794, %v836
        %v853 = vsub.f32 %v797, %v837
        %v854 = vsub.f32 %v800, %v838
        %v855 = vsub.f32 %v803, %v839
        %v856 = vsub.f32 %v806, %v840
        %v857 = vsub.f32 %v809, %v841
        %v858 = vmax.f32 %v842, 0.0
        %v859 = vmax.f32 %v843, 0.0
        %v860 = vmax.f32 %v844, 0.0
        %v861 = vmax.f32 %v845, 0.0
        %v862 = vmax.f32 %v846, 0.0
        %v863 = vmax.f32 %v847, 0.0
        %v864 = vmax.f32 %v848, 0.0
        %v865 = vmax.f32 %v849, 0.0
        %v866 = vmax.f32 %v850, 0.0
        %v867 = vmax.f32 %v851, 0.0
        %v868 = vmax.f32 %v852, 0.0
        %v869 = vmax.f32 %v853, 0.0
        %v870 = vmax.f32 %v854, 0.0
        %v871 = vmax.f32 %v855, 0.0
        %v872 = vmax.f32 %v856, 0.0
        %v873 = vmax.f32 %v857, 0.0
        %v874 = vmul.f32 %v858, 0.032258064
        %v875 = vmul.f32 %v859, 0.032258064
        %v876 = vmul.f32 %v860, 0.032258064
        %v877 = vmul.f32 %v861, 0.032258064
        %v878 = vmul.f32 %v862, 0.032258064
        %v879 = vmul.f32 %v863, 0.032258064
        %v880 = vmul.f32 %v864, 0.032258064
        %v881 = vmul.f32 %v865, 0.032258064
        %v882 = vmul.f32 %v866, 0.032258064
        %v883 = vmul.f32 %v867, 0.032258064
        %v884 = vmul.f32 %v868, 0.032258064
        %v885 = vmul.f32 %v869, 0.032258064
        %v886 = vmul.f32 %v870, 0.032258064
        %v887 = vmul.f32 %v871, 0.032258064
        %v888 = vmul.f32 %v872, 0.032258064
        %v889 = vmul.f32 %v873, 0.032258064
        %v890 = vrsqrt.pop %v874
        %v891 = vmul.f32 %v890, %v874
        %v892 = vmul.f32 %v891, %v890
        %v893 = vmul.f32 0.5, %v892
        %v894 = vsub.f32 1.5, %v893
        %v895 = vmul.f32 %v890, %v894
        %v896 = vmul.f32 %v874, %v895
        %vm897 = vcmp.eq.f32.partialorder %v874, inf
        %v898 = vsel %vm897, %v874, %v896
        %vm899 = vcmp.eq.f32.partialorder %v874, 0.0
        %v900 = vand.u32 %v874, 2147483648
        %v901 = vsel %vm899, %v900, %v898
        %v902 = vrsqrt.pop %v875
        %v903 = vmul.f32 %v902, %v875
        %v904 = vmul.f32 %v903, %v902
        %v905 = vmul.f32 0.5, %v904
        %v906 = vsub.f32 1.5, %v905
        %v907 = vmul.f32 %v902, %v906
        %v908 = vmul.f32 %v875, %v907
        %vm909 = vcmp.eq.f32.partialorder %v875, inf
        %v910 = vsel %vm909, %v875, %v908
        %vm911 = vcmp.eq.f32.partialorder %v875, 0.0
        %v912 = vand.u32 %v875, 2147483648
        %v913 = vsel %vm911, %v912, %v910
        %v914 = vrsqrt.pop %v876
        %v915 = vmul.f32 %v914, %v876
        %v916 = vmul.f32 %v915, %v914
        %v917 = vmul.f32 0.5, %v916
        %v918 = vsub.f32 1.5, %v917
        %v919 = vmul.f32 %v914, %v918
        %v920 = vmul.f32 %v876, %v919
        %vm921 = vcmp.eq.f32.partialorder %v876, inf
        %v922 = vsel %vm921, %v876, %v920
        %vm923 = vcmp.eq.f32.partialorder %v876, 0.0
        %v924 = vand.u32 %v876, 2147483648
        %v925 = vsel %vm923, %v924, %v922
        %v926 = vrsqrt.pop %v877
        %v927 = vmul.f32 %v926, %v877
        %v928 = vmul.f32 %v927, %v926
        %v929 = vmul.f32 0.5, %v928
        %v930 = vsub.f32 1.5, %v929
        %v931 = vmul.f32 %v926, %v930
        %v932 = vmul.f32 %v877, %v931
        %vm933 = vcmp.eq.f32.partialorder %v877, inf
        %v934 = vsel %vm933, %v877, %v932
        %vm935 = vcmp.eq.f32.partialorder %v877, 0.0
        %v936 = vand.u32 %v877, 2147483648
        %v937 = vsel %vm935, %v936, %v934
        %v938 = vrsqrt.pop %v878
        %v939 = vmul.f32 %v938, %v878
        %v940 = vmul.f32 %v939, %v938
        %v941 = vmul.f32 0.5, %v940
        %v942 = vsub.f32 1.5, %v941
        %v943 = vmul.f32 %v938, %v942
        %v944 = vmul.f32 %v878, %v943
        %vm945 = vcmp.eq.f32.partialorder %v878, inf
        %v946 = vsel %vm945, %v878, %v944
        %vm947 = vcmp.eq.f32.partialorder %v878, 0.0
        %v948 = vand.u32 %v878, 2147483648
        %v949 = vsel %vm947, %v948, %v946
        %v950 = vrsqrt.pop %v879
        %v951 = vmul.f32 %v950, %v879
        %v952 = vmul.f32 %v951, %v950
        %v953 = vmul.f32 0.5, %v952
        %v954 = vsub.f32 1.5, %v953
        %v955 = vmul.f32 %v950, %v954
        %v956 = vmul.f32 %v879, %v955
        %vm957 = vcmp.eq.f32.partialorder %v879, inf
        %v958 = vsel %vm957, %v879, %v956
        %vm959 = vcmp.eq.f32.partialorder %v879, 0.0
        %v960 = vand.u32 %v879, 2147483648
        %v961 = vsel %vm959, %v960, %v958
        %v962 = vrsqrt.pop %v880
        %v963 = vmul.f32 %v962, %v880
        %v964 = vmul.f32 %v963, %v962
        %v965 = vmul.f32 0.5, %v964
        %v966 = vsub.f32 1.5, %v965
        %v967 = vmul.f32 %v962, %v966
        %v968 = vmul.f32 %v880, %v967
        %vm969 = vcmp.eq.f32.partialorder %v880, inf
        %v970 = vsel %vm969, %v880, %v968
        %vm971 = vcmp.eq.f32.partialorder %v880, 0.0
        %v972 = vand.u32 %v880, 2147483648
        %v973 = vsel %vm971, %v972, %v970
        %v974 = vrsqrt.pop %v881
        %v975 = vmul.f32 %v974, %v881
        %v976 = vmul.f32 %v975, %v974
        %v977 = vmul.f32 0.5, %v976
        %v978 = vsub.f32 1.5, %v977
        %v979 = vmul.f32 %v974, %v978
        %v980 = vmul.f32 %v881, %v979
        %vm981 = vcmp.eq.f32.partialorder %v881, inf
        %v982 = vsel %vm981, %v881, %v980
        %vm983 = vcmp.eq.f32.partialorder %v881, 0.0
        %v984 = vand.u32 %v881, 2147483648
        %v985 = vsel %vm983, %v984, %v982
        %v986 = vrsqrt.pop %v882
        %v987 = vmul.f32 %v986, %v882
        %v988 = vmul.f32 %v987, %v986
        %v989 = vmul.f32 0.5, %v988
        %v990 = vsub.f32 1.5, %v989
        %v991 = vmul.f32 %v986, %v990
        %v992 = vmul.f32 %v882, %v991
        %vm993 = vcmp.eq.f32.partialorder %v882, inf
        %v994 = vsel %vm993, %v882, %v992
        %vm995 = vcmp.eq.f32.partialorder %v882, 0.0
        %v996 = vand.u32 %v882, 2147483648
        %v997 = vsel %vm995, %v996, %v994
        %v998 = vrsqrt.pop %v883
        %v999 = vmul.f32 %v998, %v883
        %v1000 = vmul.f32 %v999, %v998
        %v1001 = vmul.f32 0.5, %v1000
        %v1002 = vsub.f32 1.5, %v1001
        %v1003 = vmul.f32 %v998, %v1002
        %v1004 = vmul.f32 %v883, %v1003
        %vm1005 = vcmp.eq.f32.partialorder %v883, inf
        %v1006 = vsel %vm1005, %v883, %v1004
        %vm1007 = vcmp.eq.f32.partialorder %v883, 0.0
        %v1008 = vand.u32 %v883, 2147483648
        %v1009 = vsel %vm1007, %v1008, %v1006
        %v1010 = vrsqrt.pop %v884
        %v1011 = vmul.f32 %v1010, %v884
        %v1012 = vmul.f32 %v1011, %v1010
        %v1013 = vmul.f32 0.5, %v1012
        %v1014 = vsub.f32 1.5, %v1013
        %v1015 = vmul.f32 %v1010, %v1014
        %v1016 = vmul.f32 %v884, %v1015
        %vm1017 = vcmp.eq.f32.partialorder %v884, inf
        %v1018 = vsel %vm1017, %v884, %v1016
        %vm1019 = vcmp.eq.f32.partialorder %v884, 0.0
        %v1020 = vand.u32 %v884, 2147483648
        %v1021 = vsel %vm1019, %v1020, %v1018
        %v1022 = vrsqrt.pop %v885
        %v1023 = vmul.f32 %v1022, %v885
        %v1024 = vmul.f32 %v1023, %v1022
        %v1025 = vmul.f32 0.5, %v1024
        %v1026 = vsub.f32 1.5, %v1025
        %v1027 = vmul.f32 %v1022, %v1026
        %v1028 = vmul.f32 %v885, %v1027
        %vm1029 = vcmp.eq.f32.partialorder %v885, inf
        %v1030 = vsel %vm1029, %v885, %v1028
        %vm1031 = vcmp.eq.f32.partialorder %v885, 0.0
        %v1032 = vand.u32 %v885, 2147483648
        %v1033 = vsel %vm1031, %v1032, %v1030
        %v1034 = vrsqrt.pop %v886
        %v1035 = vmul.f32 %v1034, %v886
        %v1036 = vmul.f32 %v1035, %v1034
        %v1037 = vmul.f32 0.5, %v1036
        %v1038 = vsub.f32 1.5, %v1037
        %v1039 = vmul.f32 %v1034, %v1038
        %v1040 = vmul.f32 %v886, %v1039
        %vm1041 = vcmp.eq.f32.partialorder %v886, inf
        %v1042 = vsel %vm1041, %v886, %v1040
        %vm1043 = vcmp.eq.f32.partialorder %v886, 0.0
        %v1044 = vand.u32 %v886, 2147483648
        %v1045 = vsel %vm1043, %v1044, %v1042
        %v1046 = vrsqrt.pop %v887
        %v1047 = vmul.f32 %v1046, %v887
        %v1048 = vmul.f32 %v1047, %v1046
        %v1049 = vmul.f32 0.5, %v1048
        %v1050 = vsub.f32 1.5, %v1049
        %v1051 = vmul.f32 %v1046, %v1050
        %v1052 = vmul.f32 %v887, %v1051
        %vm1053 = vcmp.eq.f32.partialorder %v887, inf
        %v1054 = vsel %vm1053, %v887, %v1052
        %vm1055 = vcmp.eq.f32.partialorder %v887, 0.0
        %v1056 = vand.u32 %v887, 2147483648
        %v1057 = vsel %vm1055, %v1056, %v1054
        %v1058 = vrsqrt.pop %v888
        %v1059 = vmul.f32 %v1058, %v888
        %v1060 = vmul.f32 %v1059, %v1058
        %v1061 = vmul.f32 0.5, %v1060
        %v1062 = vsub.f32 1.5, %v1061
        %v1063 = vmul.f32 %v1058, %v1062
        %v1064 = vmul.f32 %v888, %v1063
        %vm1065 = vcmp.eq.f32.partialorder %v888, inf
        %v1066 = vsel %vm1065, %v888, %v1064
        %vm1067 = vcmp.eq.f32.partialorder %v888, 0.0
        %v1068 = vand.u32 %v888, 2147483648
        %v1069 = vsel %vm1067, %v1068, %v1066
        %v1070 = vrsqrt.pop %v889
        %v1071 = vmul.f32 %v1070, %v889
        %v1072 = vmul.f32 %v1071, %v1070
        %v1073 = vmul.f32 0.5, %v1072
        %v1074 = vsub.f32 1.5, %v1073
        %v1075 = vmul.f32 %v1070, %v1074
        %v1076 = vmul.f32 %v889, %v1075
        %vm1077 = vcmp.eq.f32.partialorder %v889, inf
        %v1078 = vsel %vm1077, %v889, %v1076
        %vm1079 = vcmp.eq.f32.partialorder %v889, 0.0
        %v1080 = vand.u32 %v889, 2147483648
        %v1081 = vsel %vm1079, %v1080, %v1078
        %v1082 = vadd.f32 %v901, 0.001
        %v1083 = vadd.f32 %v913, 0.001
        %v1084 = vadd.f32 %v925, 0.001
        %v1085 = vadd.f32 %v937, 0.001
        %v1086 = vadd.f32 %v949, 0.001
        %v1087 = vadd.f32 %v961, 0.001
        %v1088 = vadd.f32 %v973, 0.001
        %v1089 = vadd.f32 %v985, 0.001
        %v1090 = vadd.f32 %v997, 0.001
        %v1091 = vadd.f32 %v1009, 0.001
        %v1092 = vadd.f32 %v1021, 0.001
        %v1093 = vadd.f32 %v1033, 0.001
        %v1094 = vadd.f32 %v1045, 0.001
        %v1095 = vadd.f32 %v1057, 0.001
        %v1096 = vadd.f32 %v1069, 0.001
        %v1097 = vadd.f32 %v1081, 0.001
        %v1098 = vrcp.pop %v1082
        %v1099 = vmul.f32 %v1082, %v1098
        %v1100 = vsub.f32 1.0, %v1099
        %v1101 = vmul.f32 %v1098, %v1100
        %v1102 = vadd.f32 %v1098, %v1101
        %vm1103 = vweird.f32 %v1082
        %vm1104 = vweird.f32 %v1098
        %vm1105 = vmor %vm1103, %vm1104
        %v1106 = vsel %vm1105, %v1098, %v1102
        %v1107 = vand.u32 2147483647, %v1082
        %vm1108 = vcmp.eq.f32.partialorder %v1107, 8.507059e+37
        %v1109 = vand.u32 %v1082, 2147483648
        %v1110 = vor.u32 1.1754944e-38, %v1109
        %v1111 = vsel %vm1108, %v1110, %v1106
        %v1112 = vrcp.pop %v1083
        %v1113 = vmul.f32 %v1083, %v1112
        %v1114 = vsub.f32 1.0, %v1113
        %v1115 = vmul.f32 %v1112, %v1114
        %v1116 = vadd.f32 %v1112, %v1115
        %vm1117 = vweird.f32 %v1083
        %vm1118 = vweird.f32 %v1112
        %vm1119 = vmor %vm1117, %vm1118
        %v1120 = vsel %vm1119, %v1112, %v1116
        %v1121 = vand.u32 2147483647, %v1083
        %vm1122 = vcmp.eq.f32.partialorder %v1121, 8.507059e+37
        %v1123 = vand.u32 %v1083, 2147483648
        %v1124 = vor.u32 1.1754944e-38, %v1123
        %v1125 = vsel %vm1122, %v1124, %v1120
        %v1126 = vrcp.pop %v1084
        %v1127 = vmul.f32 %v1084, %v1126
        %v1128 = vsub.f32 1.0, %v1127
        %v1129 = vmul.f32 %v1126, %v1128
        %v1130 = vadd.f32 %v1126, %v1129
        %vm1131 = vweird.f32 %v1084
        %vm1132 = vweird.f32 %v1126
        %vm1133 = vmor %vm1131, %vm1132
        %v1134 = vsel %vm1133, %v1126, %v1130
        %v1135 = vand.u32 2147483647, %v1084
        %vm1136 = vcmp.eq.f32.partialorder %v1135, 8.507059e+37
        %v1137 = vand.u32 %v1084, 2147483648
        %v1138 = vor.u32 1.1754944e-38, %v1137
        %v1139 = vsel %vm1136, %v1138, %v1134
        %v1140 = vrcp.pop %v1085
        %v1141 = vmul.f32 %v1085, %v1140
        %v1142 = vsub.f32 1.0, %v1141
        %v1143 = vmul.f32 %v1140, %v1142
        %v1144 = vadd.f32 %v1140, %v1143
        %vm1145 = vweird.f32 %v1085
        %vm1146 = vweird.f32 %v1140
        %vm1147 = vmor %vm1145, %vm1146
        %v1148 = vsel %vm1147, %v1140, %v1144
        %v1149 = vand.u32 2147483647, %v1085
        %vm1150 = vcmp.eq.f32.partialorder %v1149, 8.507059e+37
        %v1151 = vand.u32 %v1085, 2147483648
        %v1152 = vor.u32 1.1754944e-38, %v1151
        %v1153 = vsel %vm1150, %v1152, %v1148
        %v1154 = vrcp.pop %v1086
        %v1155 = vmul.f32 %v1086, %v1154
        %v1156 = vsub.f32 1.0, %v1155
        %v1157 = vmul.f32 %v1154, %v1156
        %v1158 = vadd.f32 %v1154, %v1157
        %vm1159 = vweird.f32 %v1086
        %vm1160 = vweird.f32 %v1154
        %vm1161 = vmor %vm1159, %vm1160
        %v1162 = vsel %vm1161, %v1154, %v1158
        %v1163 = vand.u32 2147483647, %v1086
        %vm1164 = vcmp.eq.f32.partialorder %v1163, 8.507059e+37
        %v1165 = vand.u32 %v1086, 2147483648
        %v1166 = vor.u32 1.1754944e-38, %v1165
        %v1167 = vsel %vm1164, %v1166, %v1162
        %v1168 = vrcp.pop %v1087
        %v1169 = vmul.f32 %v1087, %v1168
        %v1170 = vsub.f32 1.0, %v1169
        %v1171 = vmul.f32 %v1168, %v1170
        %v1172 = vadd.f32 %v1168, %v1171
        %vm1173 = vweird.f32 %v1087
        %vm1174 = vweird.f32 %v1168
        %vm1175 = vmor %vm1173, %vm1174
        %v1176 = vsel %vm1175, %v1168, %v1172
        %v1177 = vand.u32 2147483647, %v1087
        %vm1178 = vcmp.eq.f32.partialorder %v1177, 8.507059e+37
        %v1179 = vand.u32 %v1087, 2147483648
        %v1180 = vor.u32 1.1754944e-38, %v1179
        %v1181 = vsel %vm1178, %v1180, %v1176
        %v1182 = vrcp.pop %v1088
        %v1183 = vmul.f32 %v1088, %v1182
        %v1184 = vsub.f32 1.0, %v1183
        %v1185 = vmul.f32 %v1182, %v1184
        %v1186 = vadd.f32 %v1182, %v1185
        %vm1187 = vweird.f32 %v1088
        %vm1188 = vweird.f32 %v1182
        %vm1189 = vmor %vm1187, %vm1188
        %v1190 = vsel %vm1189, %v1182, %v1186
        %v1191 = vand.u32 2147483647, %v1088
        %vm1192 = vcmp.eq.f32.partialorder %v1191, 8.507059e+37
        %v1193 = vand.u32 %v1088, 2147483648
        %v1194 = vor.u32 1.1754944e-38, %v1193
        %v1195 = vsel %vm1192, %v1194, %v1190
        %v1196 = vrcp.pop %v1089
        %v1197 = vmul.f32 %v1089, %v1196
        %v1198 = vsub.f32 1.0, %v1197
        %v1199 = vmul.f32 %v1196, %v1198
        %v1200 = vadd.f32 %v1196, %v1199
        %vm1201 = vweird.f32 %v1089
        %vm1202 = vweird.f32 %v1196
        %vm1203 = vmor %vm1201, %vm1202
        %v1204 = vsel %vm1203, %v1196, %v1200
        %v1205 = vand.u32 2147483647, %v1089
        %vm1206 = vcmp.eq.f32.partialorder %v1205, 8.507059e+37
        %v1207 = vand.u32 %v1089, 2147483648
        %v1208 = vor.u32 1.1754944e-38, %v1207
        %v1209 = vsel %vm1206, %v1208, %v1204
        %v1210 = vrcp.pop %v1090
        %v1211 = vmul.f32 %v1090, %v1210
        %v1212 = vsub.f32 1.0, %v1211
        %v1213 = vmul.f32 %v1210, %v1212
        %v1214 = vadd.f32 %v1210, %v1213
        %vm1215 = vweird.f32 %v1090
        %vm1216 = vweird.f32 %v1210
        %vm1217 = vmor %vm1215, %vm1216
        %v1218 = vsel %vm1217, %v1210, %v1214
        %v1219 = vand.u32 2147483647, %v1090
        %vm1220 = vcmp.eq.f32.partialorder %v1219, 8.507059e+37
        %v1221 = vand.u32 %v1090, 2147483648
        %v1222 = vor.u32 1.1754944e-38, %v1221
        %v1223 = vsel %vm1220, %v1222, %v1218
        %v1224 = vrcp.pop %v1091
        %v1225 = vmul.f32 %v1091, %v1224
        %v1226 = vsub.f32 1.0, %v1225
        %v1227 = vmul.f32 %v1224, %v1226
        %v1228 = vadd.f32 %v1224, %v1227
        %vm1229 = vweird.f32 %v1091
        %vm1230 = vweird.f32 %v1224
        %vm1231 = vmor %vm1229, %vm1230
        %v1232 = vsel %vm1231, %v1224, %v1228
        %v1233 = vand.u32 2147483647, %v1091
        %vm1234 = vcmp.eq.f32.partialorder %v1233, 8.507059e+37
        %v1235 = vand.u32 %v1091, 2147483648
        %v1236 = vor.u32 1.1754944e-38, %v1235
        %v1237 = vsel %vm1234, %v1236, %v1232
        %v1238 = vrcp.pop %v1092
        %v1239 = vmul.f32 %v1092, %v1238
        %v1240 = vsub.f32 1.0, %v1239
        %v1241 = vmul.f32 %v1238, %v1240
        %v1242 = vadd.f32 %v1238, %v1241
        %vm1243 = vweird.f32 %v1092
        %vm1244 = vweird.f32 %v1238
        %vm1245 = vmor %vm1243, %vm1244
        %v1246 = vsel %vm1245, %v1238, %v1242
        %v1247 = vand.u32 2147483647, %v1092
        %vm1248 = vcmp.eq.f32.partialorder %v1247, 8.507059e+37
        %v1249 = vand.u32 %v1092, 2147483648
        %v1250 = vor.u32 1.1754944e-38, %v1249
        %v1251 = vsel %vm1248, %v1250, %v1246
        %v1252 = vrcp.pop %v1093
        %v1253 = vmul.f32 %v1093, %v1252
        %v1254 = vsub.f32 1.0, %v1253
        %v1255 = vmul.f32 %v1252, %v1254
        %v1256 = vadd.f32 %v1252, %v1255
        %vm1257 = vweird.f32 %v1093
        %vm1258 = vweird.f32 %v1252
        %vm1259 = vmor %vm1257, %vm1258
        %v1260 = vsel %vm1259, %v1252, %v1256
        %v1261 = vand.u32 2147483647, %v1093
        %vm1262 = vcmp.eq.f32.partialorder %v1261, 8.507059e+37
        %v1263 = vand.u32 %v1093, 2147483648
        %v1264 = vor.u32 1.1754944e-38, %v1263
        %v1265 = vsel %vm1262, %v1264, %v1260
        %v1266 = vrcp.pop %v1094
        %v1267 = vmul.f32 %v1094, %v1266
        %v1268 = vsub.f32 1.0, %v1267
        %v1269 = vmul.f32 %v1266, %v1268
        %v1270 = vadd.f32 %v1266, %v1269
        %vm1271 = vweird.f32 %v1094
        %vm1272 = vweird.f32 %v1266
        %vm1273 = vmor %vm1271, %vm1272
        %v1274 = vsel %vm1273, %v1266, %v1270
        %v1275 = vand.u32 2147483647, %v1094
        %vm1276 = vcmp.eq.f32.partialorder %v1275, 8.507059e+37
        %v1277 = vand.u32 %v1094, 2147483648
        %v1278 = vor.u32 1.1754944e-38, %v1277
        %v1279 = vsel %vm1276, %v1278, %v1274
        %v1280 = vrcp.pop %v1095
        %v1281 = vmul.f32 %v1095, %v1280
        %v1282 = vsub.f32 1.0, %v1281
        %v1283 = vmul.f32 %v1280, %v1282
        %v1284 = vadd.f32 %v1280, %v1283
        %vm1285 = vweird.f32 %v1095
        %vm1286 = vweird.f32 %v1280
        %vm1287 = vmor %vm1285, %vm1286
        %v1288 = vsel %vm1287, %v1280, %v1284
        %v1289 = vand.u32 2147483647, %v1095
        %vm1290 = vcmp.eq.f32.partialorder %v1289, 8.507059e+37
        %v1291 = vand.u32 %v1095, 2147483648
        %v1292 = vor.u32 1.1754944e-38, %v1291
        %v1293 = vsel %vm1290, %v1292, %v1288
        %v1294 = vrcp.pop %v1096
        %v1295 = vmul.f32 %v1096, %v1294
        %v1296 = vsub.f32 1.0, %v1295
        %v1297 = vmul.f32 %v1294, %v1296
        %v1298 = vadd.f32 %v1294, %v1297
        %vm1299 = vweird.f32 %v1096
        %vm1300 = vweird.f32 %v1294
        %vm1301 = vmor %vm1299, %vm1300
        %v1302 = vsel %vm1301, %v1294, %v1298
        %v1303 = vand.u32 2147483647, %v1096
        %vm1304 = vcmp.eq.f32.partialorder %v1303, 8.507059e+37
        %v1305 = vand.u32 %v1096, 2147483648
        %v1306 = vor.u32 1.1754944e-38, %v1305
        %v1307 = vsel %vm1304, %v1306, %v1302
        %v1308 = vrcp.pop %v1097
        %v1309 = vmul.f32 %v1097, %v1308
        %v1310 = vsub.f32 1.0, %v1309
        %v1311 = vmul.f32 %v1308, %v1310
        %v1312 = vadd.f32 %v1308, %v1311
        %vm1313 = vweird.f32 %v1097
        %vm1314 = vweird.f32 %v1308
        %vm1315 = vmor %vm1313, %vm1314
        %v1316 = vsel %vm1315, %v1308, %v1312
        %v1317 = vand.u32 2147483647, %v1097
        %vm1318 = vcmp.eq.f32.partialorder %v1317, 8.507059e+37
        %v1319 = vand.u32 %v1097, 2147483648
        %v1320 = vor.u32 1.1754944e-38, %v1319
        %v1321 = vsel %vm1318, %v1320, %v1316
        %v1322 = vsub.f32 %v659, %v810
        %v1323 = vsub.f32 %v661, %v811
        %v1324 = vsub.f32 %v664, %v812
        %v1325 = vsub.f32 %v666, %v813
        %v1326 = vsub.f32 %v669, %v814
        %v1327 = vsub.f32 %v671, %v815
        %v1328 = vsub.f32 %v674, %v816
        %v1329 = vsub.f32 %v676, %v817
        %v1330 = vsub.f32 %v679, %v818
        %v1331 = vsub.f32 %v681, %v819
        %v1332 = vsub.f32 %v684, %v820
        %v1333 = vsub.f32 %v686, %v821
        %v1334 = vsub.f32 %v689, %v822
        %v1335 = vsub.f32 %v691, %v823
        %v1336 = vsub.f32 %v694, %v824
        %v1337 = vsub.f32 %v696, %v825
        %v1338 = vmul.f32 %v1322, %v1111
        %v1339 = vmul.f32 %v1323, %v1125
        %v1340 = vmul.f32 %v1324, %v1139
        %v1341 = vmul.f32 %v1325, %v1153
        %v1342 = vmul.f32 %v1326, %v1167
        %v1343 = vmul.f32 %v1327, %v1181
        %v1344 = vmul.f32 %v1328, %v1195
        %v1345 = vmul.f32 %v1329, %v1209
        %v1346 = vmul.f32 %v1330, %v1223
        %v1347 = vmul.f32 %v1331, %v1237
        %v1348 = vmul.f32 %v1332, %v1251
        %v1349 = vmul.f32 %v1333, %v1265
        %v1350 = vmul.f32 %v1334, %v1279
        %v1351 = vmul.f32 %v1335, %v1293
        %v1352 = vmul.f32 %v1336, %v1307
        %v1353 = vmul.f32 %v1337, %v1321
        %v1354 = vperm.slane %v409, 1
        %v1355 = vmul.f32 %v1338, %v1354
        %v1356 = vmul.f32 %v1339, %v1354
        %v1357 = vmul.f32 %v1340, %v1354
        %v1358 = vmul.f32 %v1341, %v1354
        %v1359 = vmul.f32 %v1342, %v1354
        %v1360 = vmul.f32 %v1343, %v1354
        %v1361 = vmul.f32 %v1344, %v1354
        %v1362 = vmul.f32 %v1345, %v1354
        %v1363 = vmul.f32 %v1346, %v1354
        %v1364 = vmul.f32 %v1347, %v1354
        %v1365 = vmul.f32 %v1348, %v1354
        %v1366 = vmul.f32 %v1349, %v1354
        %v1367 = vmul.f32 %v1350, %v1354
        %v1368 = vmul.f32 %v1351, %v1354
        %v1369 = vmul.f32 %v1352, %v1354
        %v1370 = vmul.f32 %v1353, %v1354
        %v1371 = vperm.slane %v409, 2
        %v1372 = vadd.f32 %v1355, %v1371
        %v1373 = vadd.f32 %v1356, %v1371
        %v1374 = vadd.f32 %v1357, %v1371
        %v1375 = vadd.f32 %v1358, %v1371
        %v1376 = vadd.f32 %v1359, %v1371
        %v1377 = vadd.f32 %v1360, %v1371
        %v1378 = vadd.f32 %v1361, %v1371
        %v1379 = vadd.f32 %v1362, %v1371
        %v1380 = vadd.f32 %v1363, %v1371
        %v1381 = vadd.f32 %v1364, %v1371
        %v1382 = vadd.f32 %v1365, %v1371
        %v1383 = vadd.f32 %v1366, %v1371
        %v1384 = vadd.f32 %v1367, %v1371
        %v1385 = vadd.f32 %v1368, %v1371
        %v1386 = vadd.f32 %v1369, %v1371
        %v1387 = vadd.f32 %v1370, %v1371
        %v1388 = vmax.f32 %v1372, 0.0
        %v1389 = vmax.f32 %v1373, 0.0
        %v1390 = vmax.f32 %v1374, 0.0
        %v1391 = vmax.f32 %v1375, 0.0
        %v1392 = vmax.f32 %v1376, 0.0
        %v1393 = vmax.f32 %v1377, 0.0
        %v1394 = vmax.f32 %v1378, 0.0
        %v1395 = vmax.f32 %v1379, 0.0
        %v1396 = vmax.f32 %v1380, 0.0
        %v1397 = vmax.f32 %v1381, 0.0
        %v1398 = vmax.f32 %v1382, 0.0
        %v1399 = vmax.f32 %v1383, 0.0
        %v1400 = vmax.f32 %v1384, 0.0
        %v1401 = vmax.f32 %v1385, 0.0
        %v1402 = vmax.f32 %v1386, 0.0
        %v1403 = vmax.f32 %v1387, 0.0
        %v1404 = vpack.c.bf16 %v1389, %v1388
        %v1405 = vpack.c.bf16 %v1391, %v1390
        %v1406 = vpack.c.bf16 %v1393, %v1392
        %v1407 = vpack.c.bf16 %v1395, %v1394
        %v1408 = vpack.c.bf16 %v1397, %v1396
        %v1409 = vpack.c.bf16 %v1399, %v1398
        %v1410 = vpack.c.bf16 %v1401, %v1400
        %v1411 = vpack.c.bf16 %v1403, %v1402
        %s1412 = scalar_lea.vmem [#allocation2], 16
        %v1413 = vld [vmem:[%s1412] sm:$0xf]
        %v1414 = vld [vmem:[%s1412 + $0x4] sm:$0xf]
        %v1415 = vld [vmem:[%s1412 + $0x8] sm:$0xf]
        %v1416 = vld [vmem:[%s1412 + $0xc] sm:$0xf]
        %s1417 = scalar_lea.vmem %s3, 4
        %v1418 = vld [vmem:[%s1417] sm:$0x7]
        %v1419 = vperm.slane %v1418, 0
        %v1424 = vunpack.c.l.b16 %v1413
        %v1425 = vunpack.c.l.b16 %v1414
        %v1426 = vunpack.c.l.b16 %v1415
        %v1427 = vunpack.c.l.b16 %v1416
        %v1428 = vpack.c.b16 %v1425, %v1424
        %v1429 = vpack.c.b16 %v1427, %v1426
        %v1433 = vsel %vm463, %v1404, 0
        %v1436 = vsel %vm463, %v1405, 0
        %v1439 = vsel %vm463, %v1406, 0
        %v1442 = vsel %vm463, %v1407, 0
        %v1445 = vsel %vm463, %v1408, 0
        %v1448 = vsel %vm463, %v1409, 0
        %v1451 = vsel %vm463, %v1410, 0
        %v1454 = vsel %vm463, %v1411, 0
        %1456 = vmatpush.bf16.msra.mxu0 0
        %1457 = vmatpush.bf16.msra.mxu0 0
        %1458 = vmatpush.bf16.msra.mxu0 0
        %1459 = vmatpush.bf16.msra.mxu0 0
        %1460 = vmatpush.bf16.msra.mxu0 0
        %1461 = vmatpush.bf16.msra.mxu0 0
        %1462 = vmatpush.bf16.msra.mxu0 %v1429
        %1463 = vmatpush.bf16.msra.mxu0 %v1428
        %1464 = vmatmul.bf16.gmra.mxu0 %v1433
        %v1465 = vpop.f32.mrf.mxu0
        %v1466 = vadd.f32 %v1419, %v1465
        %v1467 = vpop.f32.mrf.mxu0
        %v1468 = vadd.f32 %v1419, %v1467
        %1469 = vmatmul.bf16.gmra.mxu0 %v1436
        %v1470 = vpop.f32.mrf.mxu0
        %v1471 = vadd.f32 %v1419, %v1470
        %v1472 = vpop.f32.mrf.mxu0
        %v1473 = vadd.f32 %v1419, %v1472
        %1474 = vmatmul.bf16.gmra.mxu0 %v1439
        %v1475 = vpop.f32.mrf.mxu0
        %v1476 = vadd.f32 %v1419, %v1475
        %v1477 = vpop.f32.mrf.mxu0
        %v1478 = vadd.f32 %v1419, %v1477
        %1479 = vmatmul.bf16.gmra.mxu0 %v1442
        %v1480 = vpop.f32.mrf.mxu0
        %v1481 = vadd.f32 %v1419, %v1480
        %v1482 = vpop.f32.mrf.mxu0
        %v1483 = vadd.f32 %v1419, %v1482
        %1484 = vmatmul.bf16.gmra.mxu0 %v1445
        %v1485 = vpop.f32.mrf.mxu0
        %v1486 = vadd.f32 %v1419, %v1485
        %v1487 = vpop.f32.mrf.mxu0
        %v1488 = vadd.f32 %v1419, %v1487
        %1489 = vmatmul.bf16.gmra.mxu0 %v1448
        %v1490 = vpop.f32.mrf.mxu0
        %v1491 = vadd.f32 %v1419, %v1490
        %v1492 = vpop.f32.mrf.mxu0
        %v1493 = vadd.f32 %v1419, %v1492
        %1494 = vmatmul.bf16.gmra.mxu0 %v1451
        %v1495 = vpop.f32.mrf.mxu0
        %v1496 = vadd.f32 %v1419, %v1495
        %v1497 = vpop.f32.mrf.mxu0
        %v1498 = vadd.f32 %v1419, %v1497
        %1499 = vmatmul.bf16.gmra.mxu0 %v1454
        %v1500 = vpop.f32.mrf.mxu0
        %v1501 = vadd.f32 %v1419, %v1500
        %v1502 = vpop.f32.mrf.mxu0
        %v1503 = vadd.f32 %v1419, %v1502
        %1504 = vdwg.mxu0
        %v1505 = vpack.c.bf16 %v1466, %v1466
        %v1506 = vpack.c.bf16 %v1468, %v1468
        %v1507 = vpack.c.bf16 %v1471, %v1471
        %v1508 = vpack.c.bf16 %v1473, %v1473
        %v1509 = vpack.c.bf16 %v1476, %v1476
        %v1510 = vpack.c.bf16 %v1478, %v1478
        %v1511 = vpack.c.bf16 %v1481, %v1481
        %v1512 = vpack.c.bf16 %v1483, %v1483
        %v1513 = vpack.c.bf16 %v1486, %v1486
        %v1514 = vpack.c.bf16 %v1488, %v1488
        %v1515 = vpack.c.bf16 %v1491, %v1491
        %v1516 = vpack.c.bf16 %v1493, %v1493
        %v1517 = vpack.c.bf16 %v1496, %v1496
        %v1518 = vpack.c.bf16 %v1498, %v1498
        %v1519 = vpack.c.bf16 %v1501, %v1501
        %v1520 = vpack.c.bf16 %v1503, %v1503
        %v1537 = vunpack.c.l.b16 %v1505
        %v1538 = vunpack.c.l.b16 %v1506
        %v1539 = vunpack.c.l.b16 %v1507
        %v1540 = vunpack.c.l.b16 %v1508
        %v1541 = vunpack.c.l.b16 %v1509
        %v1542 = vunpack.c.l.b16 %v1510
        %v1543 = vunpack.c.l.b16 %v1511
        %v1544 = vunpack.c.l.b16 %v1512
        %v1545 = vunpack.c.l.b16 %v1513
        %v1546 = vunpack.c.l.b16 %v1514
        %v1547 = vunpack.c.l.b16 %v1515
        %v1548 = vunpack.c.l.b16 %v1516
        %v1549 = vunpack.c.l.b16 %v1517
        %v1550 = vunpack.c.l.b16 %v1518
        %v1551 = vunpack.c.l.b16 %v1519
        %v1552 = vunpack.c.l.b16 %v1520
        %v1553 = vpack.c.b16 %v1538, %v1537
        %v1554 = vpack.c.b16 %v1540, %v1539
        %v1555 = vpack.c.b16 %v1542, %v1541
        %v1556 = vpack.c.b16 %v1544, %v1543
        %v1557 = vpack.c.b16 %v1546, %v1545
        %v1558 = vpack.c.b16 %v1548, %v1547
        %v1559 = vpack.c.b16 %v1550, %v1549
        %v1560 = vpack.c.b16 %v1552, %v1551
        %1569 = vmatpush.bf16.msra.mxu0 %v1560
        %1570 = vmatpush.bf16.msra.mxu0 %v1559
        %1571 = vmatpush.bf16.msra.mxu0 %v1558
        %1572 = vmatpush.bf16.msra.mxu0 %v1557
        %1573 = vmatpush.bf16.msra.mxu0 %v1556
        %1574 = vmatpush.bf16.msra.mxu0 %v1555
        %1575 = vmatpush.bf16.msra.mxu0 %v1554
        %1576 = vmatpush.bf16.msra.mxu0 %v1553
        %1577 = vmatmul.bf16.gmra.mxu0 %v585
        %v1578 = vpop.f32.mrf.mxu0
        %v1579 = vadd.f32 0.0, %v1578
        %v1580 = vpop.f32.mrf.mxu0
        %v1581 = vadd.f32 0.0, %v1580
        %1582 = vmatmul.bf16.gmra.mxu0 %v586
        %v1583 = vpop.f32.mrf.mxu0
        %v1584 = vadd.f32 0.0, %v1583
        %v1585 = vpop.f32.mrf.mxu0
        %v1586 = vadd.f32 0.0, %v1585
        %1587 = vmatmul.bf16.gmra.mxu0 %v587
        %v1588 = vpop.f32.mrf.mxu0
        %v1589 = vadd.f32 0.0, %v1588
        %v1590 = vpop.f32.mrf.mxu0
        %v1591 = vadd.f32 0.0, %v1590
        %1592 = vmatmul.bf16.gmra.mxu0 %v588
        %v1593 = vpop.f32.mrf.mxu0
        %v1594 = vadd.f32 0.0, %v1593
        %v1595 = vpop.f32.mrf.mxu0
        %v1596 = vadd.f32 0.0, %v1595
        %1597 = vmatmul.bf16.gmra.mxu0 %v589
        %v1598 = vpop.f32.mrf.mxu0
        %v1599 = vadd.f32 0.0, %v1598
        %v1600 = vpop.f32.mrf.mxu0
        %v1601 = vadd.f32 0.0, %v1600
        %1602 = vmatmul.bf16.gmra.mxu0 %v590
        %v1603 = vpop.f32.mrf.mxu0
        %v1604 = vadd.f32 0.0, %v1603
        %v1605 = vpop.f32.mrf.mxu0
        %v1606 = vadd.f32 0.0, %v1605
        %1607 = vmatmul.bf16.gmra.mxu0 %v591
        %v1608 = vpop.f32.mrf.mxu0
        %v1609 = vadd.f32 0.0, %v1608
        %v1610 = vpop.f32.mrf.mxu0
        %v1611 = vadd.f32 0.0, %v1610
        %1612 = vmatmul.bf16.gmra.mxu0 %v592
        %v1613 = vpop.f32.mrf.mxu0
        %v1614 = vadd.f32 0.0, %v1613
        %v1615 = vpop.f32.mrf.mxu0
        %v1616 = vadd.f32 0.0, %v1615
        %1617 = vdwg.mxu0
        %v1618 = vsel %vm463, %v1579, 0.0
        %1619 = vadd.xlane.f32.xlu0 %v1618
        %v1620 = vpop.xlane.xlu0 %1619
        %v1621 = vsel %vm463, %v1581, 0.0
        %1622 = vadd.xlane.f32.xlu0 %v1621
        %v1623 = vpop.xlane.xlu0 %1622
        %v1624 = vsel %vm463, %v1584, 0.0
        %1625 = vadd.xlane.f32.xlu0 %v1624
        %v1626 = vpop.xlane.xlu0 %1625
        %v1627 = vsel %vm463, %v1586, 0.0
        %1628 = vadd.xlane.f32.xlu0 %v1627
        %v1629 = vpop.xlane.xlu0 %1628
        %v1630 = vsel %vm463, %v1589, 0.0
        %1631 = vadd.xlane.f32.xlu0 %v1630
        %v1632 = vpop.xlane.xlu0 %1631
        %v1633 = vsel %vm463, %v1591, 0.0
        %1634 = vadd.xlane.f32.xlu0 %v1633
        %v1635 = vpop.xlane.xlu0 %1634
        %v1636 = vsel %vm463, %v1594, 0.0
        %1637 = vadd.xlane.f32.xlu0 %v1636
        %v1638 = vpop.xlane.xlu0 %1637
        %v1639 = vsel %vm463, %v1596, 0.0
        %1640 = vadd.xlane.f32.xlu0 %v1639
        %v1641 = vpop.xlane.xlu0 %1640
        %v1642 = vsel %vm463, %v1599, 0.0
        %1643 = vadd.xlane.f32.xlu0 %v1642
        %v1644 = vpop.xlane.xlu0 %1643
        %v1645 = vsel %vm463, %v1601, 0.0
        %1646 = vadd.xlane.f32.xlu0 %v1645
        %v1647 = vpop.xlane.xlu0 %1646
        %v1648 = vsel %vm463, %v1604, 0.0
        %1649 = vadd.xlane.f32.xlu0 %v1648
        %v1650 = vpop.xlane.xlu0 %1649
        %v1651 = vsel %vm463, %v1606, 0.0
        %1652 = vadd.xlane.f32.xlu0 %v1651
        %v1653 = vpop.xlane.xlu0 %1652
        %v1654 = vsel %vm463, %v1609, 0.0
        %1655 = vadd.xlane.f32.xlu0 %v1654
        %v1656 = vpop.xlane.xlu0 %1655
        %v1657 = vsel %vm463, %v1611, 0.0
        %1658 = vadd.xlane.f32.xlu0 %v1657
        %v1659 = vpop.xlane.xlu0 %1658
        %v1660 = vsel %vm463, %v1614, 0.0
        %1661 = vadd.xlane.f32.xlu0 %v1660
        %v1662 = vpop.xlane.xlu0 %1661
        %v1663 = vsel %vm463, %v1616, 0.0
        %1664 = vadd.xlane.f32.xlu0 %v1663
        %v1665 = vpop.xlane.xlu0 %1664
        %v1666 = vmul.f32 %v1579, %v1579
        %v1667 = vmul.f32 %v1581, %v1581
        %v1668 = vmul.f32 %v1584, %v1584
        %v1669 = vmul.f32 %v1586, %v1586
        %v1670 = vmul.f32 %v1589, %v1589
        %v1671 = vmul.f32 %v1591, %v1591
        %v1672 = vmul.f32 %v1594, %v1594
        %v1673 = vmul.f32 %v1596, %v1596
        %v1674 = vmul.f32 %v1599, %v1599
        %v1675 = vmul.f32 %v1601, %v1601
        %v1676 = vmul.f32 %v1604, %v1604
        %v1677 = vmul.f32 %v1606, %v1606
        %v1678 = vmul.f32 %v1609, %v1609
        %v1679 = vmul.f32 %v1611, %v1611
        %v1680 = vmul.f32 %v1614, %v1614
        %v1681 = vmul.f32 %v1616, %v1616
        %v1682 = vsel %vm463, %v1666, 0.0
        %1683 = vadd.xlane.f32.xlu0 %v1682
        %v1684 = vpop.xlane.xlu0 %1683
        %v1685 = vsel %vm463, %v1667, 0.0
        %1686 = vadd.xlane.f32.xlu0 %v1685
        %v1687 = vpop.xlane.xlu0 %1686
        %v1688 = vsel %vm463, %v1668, 0.0
        %1689 = vadd.xlane.f32.xlu0 %v1688
        %v1690 = vpop.xlane.xlu0 %1689
        %v1691 = vsel %vm463, %v1669, 0.0
        %1692 = vadd.xlane.f32.xlu0 %v1691
        %v1693 = vpop.xlane.xlu0 %1692
        %v1694 = vsel %vm463, %v1670, 0.0
        %1695 = vadd.xlane.f32.xlu0 %v1694
        %v1696 = vpop.xlane.xlu0 %1695
        %v1697 = vsel %vm463, %v1671, 0.0
        %1698 = vadd.xlane.f32.xlu0 %v1697
        %v1699 = vpop.xlane.xlu0 %1698
        %v1700 = vsel %vm463, %v1672, 0.0
        %1701 = vadd.xlane.f32.xlu0 %v1700
        %v1702 = vpop.xlane.xlu0 %1701
        %v1703 = vsel %vm463, %v1673, 0.0
        %1704 = vadd.xlane.f32.xlu0 %v1703
        %v1705 = vpop.xlane.xlu0 %1704
        %v1706 = vsel %vm463, %v1674, 0.0
        %1707 = vadd.xlane.f32.xlu0 %v1706
        %v1708 = vpop.xlane.xlu0 %1707
        %v1709 = vsel %vm463, %v1675, 0.0
        %1710 = vadd.xlane.f32.xlu0 %v1709
        %v1711 = vpop.xlane.xlu0 %1710
        %v1712 = vsel %vm463, %v1676, 0.0
        %1713 = vadd.xlane.f32.xlu0 %v1712
        %v1714 = vpop.xlane.xlu0 %1713
        %v1715 = vsel %vm463, %v1677, 0.0
        %1716 = vadd.xlane.f32.xlu0 %v1715
        %v1717 = vpop.xlane.xlu0 %1716
        %v1718 = vsel %vm463, %v1678, 0.0
        %1719 = vadd.xlane.f32.xlu0 %v1718
        %v1720 = vpop.xlane.xlu0 %1719
        %v1721 = vsel %vm463, %v1679, 0.0
        %1722 = vadd.xlane.f32.xlu0 %v1721
        %v1723 = vpop.xlane.xlu0 %1722
        %v1724 = vsel %vm463, %v1680, 0.0
        %1725 = vadd.xlane.f32.xlu0 %v1724
        %v1726 = vpop.xlane.xlu0 %1725
        %v1727 = vsel %vm463, %v1681, 0.0
        %1728 = vadd.xlane.f32.xlu0 %v1727
        %v1729 = vpop.xlane.xlu0 %1728
        %v1730 = vmul.f32 %v1620, 0.03125
        %v1731 = vmul.f32 %v1623, 0.03125
        %v1732 = vmul.f32 %v1626, 0.03125
        %v1733 = vmul.f32 %v1629, 0.03125
        %v1734 = vmul.f32 %v1632, 0.03125
        %v1735 = vmul.f32 %v1635, 0.03125
        %v1736 = vmul.f32 %v1638, 0.03125
        %v1737 = vmul.f32 %v1641, 0.03125
        %v1738 = vmul.f32 %v1644, 0.03125
        %v1739 = vmul.f32 %v1647, 0.03125
        %v1740 = vmul.f32 %v1650, 0.03125
        %v1741 = vmul.f32 %v1653, 0.03125
        %v1742 = vmul.f32 %v1656, 0.03125
        %v1743 = vmul.f32 %v1659, 0.03125
        %v1744 = vmul.f32 %v1662, 0.03125
        %v1745 = vmul.f32 %v1665, 0.03125
        %v1746 = vmul.f32 %v1730, %v1620
        %v1747 = vmul.f32 %v1731, %v1623
        %v1748 = vmul.f32 %v1732, %v1626
        %v1749 = vmul.f32 %v1733, %v1629
        %v1750 = vmul.f32 %v1734, %v1632
        %v1751 = vmul.f32 %v1735, %v1635
        %v1752 = vmul.f32 %v1736, %v1638
        %v1753 = vmul.f32 %v1737, %v1641
        %v1754 = vmul.f32 %v1738, %v1644
        %v1755 = vmul.f32 %v1739, %v1647
        %v1756 = vmul.f32 %v1740, %v1650
        %v1757 = vmul.f32 %v1741, %v1653
        %v1758 = vmul.f32 %v1742, %v1656
        %v1759 = vmul.f32 %v1743, %v1659
        %v1760 = vmul.f32 %v1744, %v1662
        %v1761 = vmul.f32 %v1745, %v1665
        %v1762 = vsub.f32 %v1684, %v1746
        %v1763 = vsub.f32 %v1687, %v1747
        %v1764 = vsub.f32 %v1690, %v1748
        %v1765 = vsub.f32 %v1693, %v1749
        %v1766 = vsub.f32 %v1696, %v1750
        %v1767 = vsub.f32 %v1699, %v1751
        %v1768 = vsub.f32 %v1702, %v1752
        %v1769 = vsub.f32 %v1705, %v1753
        %v1770 = vsub.f32 %v1708, %v1754
        %v1771 = vsub.f32 %v1711, %v1755
        %v1772 = vsub.f32 %v1714, %v1756
        %v1773 = vsub.f32 %v1717, %v1757
        %v1774 = vsub.f32 %v1720, %v1758
        %v1775 = vsub.f32 %v1723, %v1759
        %v1776 = vsub.f32 %v1726, %v1760
        %v1777 = vsub.f32 %v1729, %v1761
        %v1778 = vmax.f32 %v1762, 0.0
        %v1779 = vmax.f32 %v1763, 0.0
        %v1780 = vmax.f32 %v1764, 0.0
        %v1781 = vmax.f32 %v1765, 0.0
        %v1782 = vmax.f32 %v1766, 0.0
        %v1783 = vmax.f32 %v1767, 0.0
        %v1784 = vmax.f32 %v1768, 0.0
        %v1785 = vmax.f32 %v1769, 0.0
        %v1786 = vmax.f32 %v1770, 0.0
        %v1787 = vmax.f32 %v1771, 0.0
        %v1788 = vmax.f32 %v1772, 0.0
        %v1789 = vmax.f32 %v1773, 0.0
        %v1790 = vmax.f32 %v1774, 0.0
        %v1791 = vmax.f32 %v1775, 0.0
        %v1792 = vmax.f32 %v1776, 0.0
        %v1793 = vmax.f32 %v1777, 0.0
        %v1794 = vmul.f32 %v1778, 0.032258064
        %v1795 = vmul.f32 %v1779, 0.032258064
        %v1796 = vmul.f32 %v1780, 0.032258064
        %v1797 = vmul.f32 %v1781, 0.032258064
        %v1798 = vmul.f32 %v1782, 0.032258064
        %v1799 = vmul.f32 %v1783, 0.032258064
        %v1800 = vmul.f32 %v1784, 0.032258064
        %v1801 = vmul.f32 %v1785, 0.032258064
        %v1802 = vmul.f32 %v1786, 0.032258064
        %v1803 = vmul.f32 %v1787, 0.032258064
        %v1804 = vmul.f32 %v1788, 0.032258064
        %v1805 = vmul.f32 %v1789, 0.032258064
        %v1806 = vmul.f32 %v1790, 0.032258064
        %v1807 = vmul.f32 %v1791, 0.032258064
        %v1808 = vmul.f32 %v1792, 0.032258064
        %v1809 = vmul.f32 %v1793, 0.032258064
        %v1810 = vrsqrt.pop %v1794
        %v1811 = vmul.f32 %v1810, %v1794
        %v1812 = vmul.f32 %v1811, %v1810
        %v1813 = vmul.f32 0.5, %v1812
        %v1814 = vsub.f32 1.5, %v1813
        %v1815 = vmul.f32 %v1810, %v1814
        %v1816 = vmul.f32 %v1794, %v1815
        %vm1817 = vcmp.eq.f32.partialorder %v1794, inf
        %v1818 = vsel %vm1817, %v1794, %v1816
        %vm1819 = vcmp.eq.f32.partialorder %v1794, 0.0
        %v1820 = vand.u32 %v1794, 2147483648
        %v1821 = vsel %vm1819, %v1820, %v1818
        %v1822 = vrsqrt.pop %v1795
        %v1823 = vmul.f32 %v1822, %v1795
        %v1824 = vmul.f32 %v1823, %v1822
        %v1825 = vmul.f32 0.5, %v1824
        %v1826 = vsub.f32 1.5, %v1825
        %v1827 = vmul.f32 %v1822, %v1826
        %v1828 = vmul.f32 %v1795, %v1827
        %vm1829 = vcmp.eq.f32.partialorder %v1795, inf
        %v1830 = vsel %vm1829, %v1795, %v1828
        %vm1831 = vcmp.eq.f32.partialorder %v1795, 0.0
        %v1832 = vand.u32 %v1795, 2147483648
        %v1833 = vsel %vm1831, %v1832, %v1830
        %v1834 = vrsqrt.pop %v1796
        %v1835 = vmul.f32 %v1834, %v1796
        %v1836 = vmul.f32 %v1835, %v1834
        %v1837 = vmul.f32 0.5, %v1836
        %v1838 = vsub.f32 1.5, %v1837
        %v1839 = vmul.f32 %v1834, %v1838
        %v1840 = vmul.f32 %v1796, %v1839
        %vm1841 = vcmp.eq.f32.partialorder %v1796, inf
        %v1842 = vsel %vm1841, %v1796, %v1840
        %vm1843 = vcmp.eq.f32.partialorder %v1796, 0.0
        %v1844 = vand.u32 %v1796, 2147483648
        %v1845 = vsel %vm1843, %v1844, %v1842
        %v1846 = vrsqrt.pop %v1797
        %v1847 = vmul.f32 %v1846, %v1797
        %v1848 = vmul.f32 %v1847, %v1846
        %v1849 = vmul.f32 0.5, %v1848
        %v1850 = vsub.f32 1.5, %v1849
        %v1851 = vmul.f32 %v1846, %v1850
        %v1852 = vmul.f32 %v1797, %v1851
        %vm1853 = vcmp.eq.f32.partialorder %v1797, inf
        %v1854 = vsel %vm1853, %v1797, %v1852
        %vm1855 = vcmp.eq.f32.partialorder %v1797, 0.0
        %v1856 = vand.u32 %v1797, 2147483648
        %v1857 = vsel %vm1855, %v1856, %v1854
        %v1858 = vrsqrt.pop %v1798
        %v1859 = vmul.f32 %v1858, %v1798
        %v1860 = vmul.f32 %v1859, %v1858
        %v1861 = vmul.f32 0.5, %v1860
        %v1862 = vsub.f32 1.5, %v1861
        %v1863 = vmul.f32 %v1858, %v1862
        %v1864 = vmul.f32 %v1798, %v1863
        %vm1865 = vcmp.eq.f32.partialorder %v1798, inf
        %v1866 = vsel %vm1865, %v1798, %v1864
        %vm1867 = vcmp.eq.f32.partialorder %v1798, 0.0
        %v1868 = vand.u32 %v1798, 2147483648
        %v1869 = vsel %vm1867, %v1868, %v1866
        %v1870 = vrsqrt.pop %v1799
        %v1871 = vmul.f32 %v1870, %v1799
        %v1872 = vmul.f32 %v1871, %v1870
        %v1873 = vmul.f32 0.5, %v1872
        %v1874 = vsub.f32 1.5, %v1873
        %v1875 = vmul.f32 %v1870, %v1874
        %v1876 = vmul.f32 %v1799, %v1875
        %vm1877 = vcmp.eq.f32.partialorder %v1799, inf
        %v1878 = vsel %vm1877, %v1799, %v1876
        %vm1879 = vcmp.eq.f32.partialorder %v1799, 0.0
        %v1880 = vand.u32 %v1799, 2147483648
        %v1881 = vsel %vm1879, %v1880, %v1878
        %v1882 = vrsqrt.pop %v1800
        %v1883 = vmul.f32 %v1882, %v1800
        %v1884 = vmul.f32 %v1883, %v1882
        %v1885 = vmul.f32 0.5, %v1884
        %v1886 = vsub.f32 1.5, %v1885
        %v1887 = vmul.f32 %v1882, %v1886
        %v1888 = vmul.f32 %v1800, %v1887
        %vm1889 = vcmp.eq.f32.partialorder %v1800, inf
        %v1890 = vsel %vm1889, %v1800, %v1888
        %vm1891 = vcmp.eq.f32.partialorder %v1800, 0.0
        %v1892 = vand.u32 %v1800, 2147483648
        %v1893 = vsel %vm1891, %v1892, %v1890
        %v1894 = vrsqrt.pop %v1801
        %v1895 = vmul.f32 %v1894, %v1801
        %v1896 = vmul.f32 %v1895, %v1894
        %v1897 = vmul.f32 0.5, %v1896
        %v1898 = vsub.f32 1.5, %v1897
        %v1899 = vmul.f32 %v1894, %v1898
        %v1900 = vmul.f32 %v1801, %v1899
        %vm1901 = vcmp.eq.f32.partialorder %v1801, inf
        %v1902 = vsel %vm1901, %v1801, %v1900
        %vm1903 = vcmp.eq.f32.partialorder %v1801, 0.0
        %v1904 = vand.u32 %v1801, 2147483648
        %v1905 = vsel %vm1903, %v1904, %v1902
        %v1906 = vrsqrt.pop %v1802
        %v1907 = vmul.f32 %v1906, %v1802
        %v1908 = vmul.f32 %v1907, %v1906
        %v1909 = vmul.f32 0.5, %v1908
        %v1910 = vsub.f32 1.5, %v1909
        %v1911 = vmul.f32 %v1906, %v1910
        %v1912 = vmul.f32 %v1802, %v1911
        %vm1913 = vcmp.eq.f32.partialorder %v1802, inf
        %v1914 = vsel %vm1913, %v1802, %v1912
        %vm1915 = vcmp.eq.f32.partialorder %v1802, 0.0
        %v1916 = vand.u32 %v1802, 2147483648
        %v1917 = vsel %vm1915, %v1916, %v1914
        %v1918 = vrsqrt.pop %v1803
        %v1919 = vmul.f32 %v1918, %v1803
        %v1920 = vmul.f32 %v1919, %v1918
        %v1921 = vmul.f32 0.5, %v1920
        %v1922 = vsub.f32 1.5, %v1921
        %v1923 = vmul.f32 %v1918, %v1922
        %v1924 = vmul.f32 %v1803, %v1923
        %vm1925 = vcmp.eq.f32.partialorder %v1803, inf
        %v1926 = vsel %vm1925, %v1803, %v1924
        %vm1927 = vcmp.eq.f32.partialorder %v1803, 0.0
        %v1928 = vand.u32 %v1803, 2147483648
        %v1929 = vsel %vm1927, %v1928, %v1926
        %v1930 = vrsqrt.pop %v1804
        %v1931 = vmul.f32 %v1930, %v1804
        %v1932 = vmul.f32 %v1931, %v1930
        %v1933 = vmul.f32 0.5, %v1932
        %v1934 = vsub.f32 1.5, %v1933
        %v1935 = vmul.f32 %v1930, %v1934
        %v1936 = vmul.f32 %v1804, %v1935
        %vm1937 = vcmp.eq.f32.partialorder %v1804, inf
        %v1938 = vsel %vm1937, %v1804, %v1936
        %vm1939 = vcmp.eq.f32.partialorder %v1804, 0.0
        %v1940 = vand.u32 %v1804, 2147483648
        %v1941 = vsel %vm1939, %v1940, %v1938
        %v1942 = vrsqrt.pop %v1805
        %v1943 = vmul.f32 %v1942, %v1805
        %v1944 = vmul.f32 %v1943, %v1942
        %v1945 = vmul.f32 0.5, %v1944
        %v1946 = vsub.f32 1.5, %v1945
        %v1947 = vmul.f32 %v1942, %v1946
        %v1948 = vmul.f32 %v1805, %v1947
        %vm1949 = vcmp.eq.f32.partialorder %v1805, inf
        %v1950 = vsel %vm1949, %v1805, %v1948
        %vm1951 = vcmp.eq.f32.partialorder %v1805, 0.0
        %v1952 = vand.u32 %v1805, 2147483648
        %v1953 = vsel %vm1951, %v1952, %v1950
        %v1954 = vrsqrt.pop %v1806
        %v1955 = vmul.f32 %v1954, %v1806
        %v1956 = vmul.f32 %v1955, %v1954
        %v1957 = vmul.f32 0.5, %v1956
        %v1958 = vsub.f32 1.5, %v1957
        %v1959 = vmul.f32 %v1954, %v1958
        %v1960 = vmul.f32 %v1806, %v1959
        %vm1961 = vcmp.eq.f32.partialorder %v1806, inf
        %v1962 = vsel %vm1961, %v1806, %v1960
        %vm1963 = vcmp.eq.f32.partialorder %v1806, 0.0
        %v1964 = vand.u32 %v1806, 2147483648
        %v1965 = vsel %vm1963, %v1964, %v1962
        %v1966 = vrsqrt.pop %v1807
        %v1967 = vmul.f32 %v1966, %v1807
        %v1968 = vmul.f32 %v1967, %v1966
        %v1969 = vmul.f32 0.5, %v1968
        %v1970 = vsub.f32 1.5, %v1969
        %v1971 = vmul.f32 %v1966, %v1970
        %v1972 = vmul.f32 %v1807, %v1971
        %vm1973 = vcmp.eq.f32.partialorder %v1807, inf
        %v1974 = vsel %vm1973, %v1807, %v1972
        %vm1975 = vcmp.eq.f32.partialorder %v1807, 0.0
        %v1976 = vand.u32 %v1807, 2147483648
        %v1977 = vsel %vm1975, %v1976, %v1974
        %v1978 = vrsqrt.pop %v1808
        %v1979 = vmul.f32 %v1978, %v1808
        %v1980 = vmul.f32 %v1979, %v1978
        %v1981 = vmul.f32 0.5, %v1980
        %v1982 = vsub.f32 1.5, %v1981
        %v1983 = vmul.f32 %v1978, %v1982
        %v1984 = vmul.f32 %v1808, %v1983
        %vm1985 = vcmp.eq.f32.partialorder %v1808, inf
        %v1986 = vsel %vm1985, %v1808, %v1984
        %vm1987 = vcmp.eq.f32.partialorder %v1808, 0.0
        %v1988 = vand.u32 %v1808, 2147483648
        %v1989 = vsel %vm1987, %v1988, %v1986
        %v1990 = vrsqrt.pop %v1809
        %v1991 = vmul.f32 %v1990, %v1809
        %v1992 = vmul.f32 %v1991, %v1990
        %v1993 = vmul.f32 0.5, %v1992
        %v1994 = vsub.f32 1.5, %v1993
        %v1995 = vmul.f32 %v1990, %v1994
        %v1996 = vmul.f32 %v1809, %v1995
        %vm1997 = vcmp.eq.f32.partialorder %v1809, inf
        %v1998 = vsel %vm1997, %v1809, %v1996
        %vm1999 = vcmp.eq.f32.partialorder %v1809, 0.0
        %v2000 = vand.u32 %v1809, 2147483648
        %v2001 = vsel %vm1999, %v2000, %v1998
        %v2002 = vadd.f32 %v1821, 0.001
        %v2003 = vadd.f32 %v1833, 0.001
        %v2004 = vadd.f32 %v1845, 0.001
        %v2005 = vadd.f32 %v1857, 0.001
        %v2006 = vadd.f32 %v1869, 0.001
        %v2007 = vadd.f32 %v1881, 0.001
        %v2008 = vadd.f32 %v1893, 0.001
        %v2009 = vadd.f32 %v1905, 0.001
        %v2010 = vadd.f32 %v1917, 0.001
        %v2011 = vadd.f32 %v1929, 0.001
        %v2012 = vadd.f32 %v1941, 0.001
        %v2013 = vadd.f32 %v1953, 0.001
        %v2014 = vadd.f32 %v1965, 0.001
        %v2015 = vadd.f32 %v1977, 0.001
        %v2016 = vadd.f32 %v1989, 0.001
        %v2017 = vadd.f32 %v2001, 0.001
        %v2018 = vrcp.pop %v2002
        %v2019 = vmul.f32 %v2002, %v2018
        %v2020 = vsub.f32 1.0, %v2019
        %v2021 = vmul.f32 %v2018, %v2020
        %v2022 = vadd.f32 %v2018, %v2021
        %vm2023 = vweird.f32 %v2002
        %vm2024 = vweird.f32 %v2018
        %vm2025 = vmor %vm2023, %vm2024
        %v2026 = vsel %vm2025, %v2018, %v2022
        %v2027 = vand.u32 2147483647, %v2002
        %vm2028 = vcmp.eq.f32.partialorder %v2027, 8.507059e+37
        %v2029 = vand.u32 %v2002, 2147483648
        %v2030 = vor.u32 1.1754944e-38, %v2029
        %v2031 = vsel %vm2028, %v2030, %v2026
        %v2032 = vrcp.pop %v2003
        %v2033 = vmul.f32 %v2003, %v2032
        %v2034 = vsub.f32 1.0, %v2033
        %v2035 = vmul.f32 %v2032, %v2034
        %v2036 = vadd.f32 %v2032, %v2035
        %vm2037 = vweird.f32 %v2003
        %vm2038 = vweird.f32 %v2032
        %vm2039 = vmor %vm2037, %vm2038
        %v2040 = vsel %vm2039, %v2032, %v2036
        %v2041 = vand.u32 2147483647, %v2003
        %vm2042 = vcmp.eq.f32.partialorder %v2041, 8.507059e+37
        %v2043 = vand.u32 %v2003, 2147483648
        %v2044 = vor.u32 1.1754944e-38, %v2043
        %v2045 = vsel %vm2042, %v2044, %v2040
        %v2046 = vrcp.pop %v2004
        %v2047 = vmul.f32 %v2004, %v2046
        %v2048 = vsub.f32 1.0, %v2047
        %v2049 = vmul.f32 %v2046, %v2048
        %v2050 = vadd.f32 %v2046, %v2049
        %vm2051 = vweird.f32 %v2004
        %vm2052 = vweird.f32 %v2046
        %vm2053 = vmor %vm2051, %vm2052
        %v2054 = vsel %vm2053, %v2046, %v2050
        %v2055 = vand.u32 2147483647, %v2004
        %vm2056 = vcmp.eq.f32.partialorder %v2055, 8.507059e+37
        %v2057 = vand.u32 %v2004, 2147483648
        %v2058 = vor.u32 1.1754944e-38, %v2057
        %v2059 = vsel %vm2056, %v2058, %v2054
        %v2060 = vrcp.pop %v2005
        %v2061 = vmul.f32 %v2005, %v2060
        %v2062 = vsub.f32 1.0, %v2061
        %v2063 = vmul.f32 %v2060, %v2062
        %v2064 = vadd.f32 %v2060, %v2063
        %vm2065 = vweird.f32 %v2005
        %vm2066 = vweird.f32 %v2060
        %vm2067 = vmor %vm2065, %vm2066
        %v2068 = vsel %vm2067, %v2060, %v2064
        %v2069 = vand.u32 2147483647, %v2005
        %vm2070 = vcmp.eq.f32.partialorder %v2069, 8.507059e+37
        %v2071 = vand.u32 %v2005, 2147483648
        %v2072 = vor.u32 1.1754944e-38, %v2071
        %v2073 = vsel %vm2070, %v2072, %v2068
        %v2074 = vrcp.pop %v2006
        %v2075 = vmul.f32 %v2006, %v2074
        %v2076 = vsub.f32 1.0, %v2075
        %v2077 = vmul.f32 %v2074, %v2076
        %v2078 = vadd.f32 %v2074, %v2077
        %vm2079 = vweird.f32 %v2006
        %vm2080 = vweird.f32 %v2074
        %vm2081 = vmor %vm2079, %vm2080
        %v2082 = vsel %vm2081, %v2074, %v2078
        %v2083 = vand.u32 2147483647, %v2006
        %vm2084 = vcmp.eq.f32.partialorder %v2083, 8.507059e+37
        %v2085 = vand.u32 %v2006, 2147483648
        %v2086 = vor.u32 1.1754944e-38, %v2085
        %v2087 = vsel %vm2084, %v2086, %v2082
        %v2088 = vrcp.pop %v2007
        %v2089 = vmul.f32 %v2007, %v2088
        %v2090 = vsub.f32 1.0, %v2089
        %v2091 = vmul.f32 %v2088, %v2090
        %v2092 = vadd.f32 %v2088, %v2091
        %vm2093 = vweird.f32 %v2007
        %vm2094 = vweird.f32 %v2088
        %vm2095 = vmor %vm2093, %vm2094
        %v2096 = vsel %vm2095, %v2088, %v2092
        %v2097 = vand.u32 2147483647, %v2007
        %vm2098 = vcmp.eq.f32.partialorder %v2097, 8.507059e+37
        %v2099 = vand.u32 %v2007, 2147483648
        %v2100 = vor.u32 1.1754944e-38, %v2099
        %v2101 = vsel %vm2098, %v2100, %v2096
        %v2102 = vrcp.pop %v2008
        %v2103 = vmul.f32 %v2008, %v2102
        %v2104 = vsub.f32 1.0, %v2103
        %v2105 = vmul.f32 %v2102, %v2104
        %v2106 = vadd.f32 %v2102, %v2105
        %vm2107 = vweird.f32 %v2008
        %vm2108 = vweird.f32 %v2102
        %vm2109 = vmor %vm2107, %vm2108
        %v2110 = vsel %vm2109, %v2102, %v2106
        %v2111 = vand.u32 2147483647, %v2008
        %vm2112 = vcmp.eq.f32.partialorder %v2111, 8.507059e+37
        %v2113 = vand.u32 %v2008, 2147483648
        %v2114 = vor.u32 1.1754944e-38, %v2113
        %v2115 = vsel %vm2112, %v2114, %v2110
        %v2116 = vrcp.pop %v2009
        %v2117 = vmul.f32 %v2009, %v2116
        %v2118 = vsub.f32 1.0, %v2117
        %v2119 = vmul.f32 %v2116, %v2118
        %v2120 = vadd.f32 %v2116, %v2119
        %vm2121 = vweird.f32 %v2009
        %vm2122 = vweird.f32 %v2116
        %vm2123 = vmor %vm2121, %vm2122
        %v2124 = vsel %vm2123, %v2116, %v2120
        %v2125 = vand.u32 2147483647, %v2009
        %vm2126 = vcmp.eq.f32.partialorder %v2125, 8.507059e+37
        %v2127 = vand.u32 %v2009, 2147483648
        %v2128 = vor.u32 1.1754944e-38, %v2127
        %v2129 = vsel %vm2126, %v2128, %v2124
        %v2130 = vrcp.pop %v2010
        %v2131 = vmul.f32 %v2010, %v2130
        %v2132 = vsub.f32 1.0, %v2131
        %v2133 = vmul.f32 %v2130, %v2132
        %v2134 = vadd.f32 %v2130, %v2133
        %vm2135 = vweird.f32 %v2010
        %vm2136 = vweird.f32 %v2130
        %vm2137 = vmor %vm2135, %vm2136
        %v2138 = vsel %vm2137, %v2130, %v2134
        %v2139 = vand.u32 2147483647, %v2010
        %vm2140 = vcmp.eq.f32.partialorder %v2139, 8.507059e+37
        %v2141 = vand.u32 %v2010, 2147483648
        %v2142 = vor.u32 1.1754944e-38, %v2141
        %v2143 = vsel %vm2140, %v2142, %v2138
        %v2144 = vrcp.pop %v2011
        %v2145 = vmul.f32 %v2011, %v2144
        %v2146 = vsub.f32 1.0, %v2145
        %v2147 = vmul.f32 %v2144, %v2146
        %v2148 = vadd.f32 %v2144, %v2147
        %vm2149 = vweird.f32 %v2011
        %vm2150 = vweird.f32 %v2144
        %vm2151 = vmor %vm2149, %vm2150
        %v2152 = vsel %vm2151, %v2144, %v2148
        %v2153 = vand.u32 2147483647, %v2011
        %vm2154 = vcmp.eq.f32.partialorder %v2153, 8.507059e+37
        %v2155 = vand.u32 %v2011, 2147483648
        %v2156 = vor.u32 1.1754944e-38, %v2155
        %v2157 = vsel %vm2154, %v2156, %v2152
        %v2158 = vrcp.pop %v2012
        %v2159 = vmul.f32 %v2012, %v2158
        %v2160 = vsub.f32 1.0, %v2159
        %v2161 = vmul.f32 %v2158, %v2160
        %v2162 = vadd.f32 %v2158, %v2161
        %vm2163 = vweird.f32 %v2012
        %vm2164 = vweird.f32 %v2158
        %vm2165 = vmor %vm2163, %vm2164
        %v2166 = vsel %vm2165, %v2158, %v2162
        %v2167 = vand.u32 2147483647, %v2012
        %vm2168 = vcmp.eq.f32.partialorder %v2167, 8.507059e+37
        %v2169 = vand.u32 %v2012, 2147483648
        %v2170 = vor.u32 1.1754944e-38, %v2169
        %v2171 = vsel %vm2168, %v2170, %v2166
        %v2172 = vrcp.pop %v2013
        %v2173 = vmul.f32 %v2013, %v2172
        %v2174 = vsub.f32 1.0, %v2173
        %v2175 = vmul.f32 %v2172, %v2174
        %v2176 = vadd.f32 %v2172, %v2175
        %vm2177 = vweird.f32 %v2013
        %vm2178 = vweird.f32 %v2172
        %vm2179 = vmor %vm2177, %vm2178
        %v2180 = vsel %vm2179, %v2172, %v2176
        %v2181 = vand.u32 2147483647, %v2013
        %vm2182 = vcmp.eq.f32.partialorder %v2181, 8.507059e+37
        %v2183 = vand.u32 %v2013, 2147483648
        %v2184 = vor.u32 1.1754944e-38, %v2183
        %v2185 = vsel %vm2182, %v2184, %v2180
        %v2186 = vrcp.pop %v2014
        %v2187 = vmul.f32 %v2014, %v2186
        %v2188 = vsub.f32 1.0, %v2187
        %v2189 = vmul.f32 %v2186, %v2188
        %v2190 = vadd.f32 %v2186, %v2189
        %vm2191 = vweird.f32 %v2014
        %vm2192 = vweird.f32 %v2186
        %vm2193 = vmor %vm2191, %vm2192
        %v2194 = vsel %vm2193, %v2186, %v2190
        %v2195 = vand.u32 2147483647, %v2014
        %vm2196 = vcmp.eq.f32.partialorder %v2195, 8.507059e+37
        %v2197 = vand.u32 %v2014, 2147483648
        %v2198 = vor.u32 1.1754944e-38, %v2197
        %v2199 = vsel %vm2196, %v2198, %v2194
        %v2200 = vrcp.pop %v2015
        %v2201 = vmul.f32 %v2015, %v2200
        %v2202 = vsub.f32 1.0, %v2201
        %v2203 = vmul.f32 %v2200, %v2202
        %v2204 = vadd.f32 %v2200, %v2203
        %vm2205 = vweird.f32 %v2015
        %vm2206 = vweird.f32 %v2200
        %vm2207 = vmor %vm2205, %vm2206
        %v2208 = vsel %vm2207, %v2200, %v2204
        %v2209 = vand.u32 2147483647, %v2015
        %vm2210 = vcmp.eq.f32.partialorder %v2209, 8.507059e+37
        %v2211 = vand.u32 %v2015, 2147483648
        %v2212 = vor.u32 1.1754944e-38, %v2211
        %v2213 = vsel %vm2210, %v2212, %v2208
        %v2214 = vrcp.pop %v2016
        %v2215 = vmul.f32 %v2016, %v2214
        %v2216 = vsub.f32 1.0, %v2215
        %v2217 = vmul.f32 %v2214, %v2216
        %v2218 = vadd.f32 %v2214, %v2217
        %vm2219 = vweird.f32 %v2016
        %vm2220 = vweird.f32 %v2214
        %vm2221 = vmor %vm2219, %vm2220
        %v2222 = vsel %vm2221, %v2214, %v2218
        %v2223 = vand.u32 2147483647, %v2016
        %vm2224 = vcmp.eq.f32.partialorder %v2223, 8.507059e+37
        %v2225 = vand.u32 %v2016, 2147483648
        %v2226 = vor.u32 1.1754944e-38, %v2225
        %v2227 = vsel %vm2224, %v2226, %v2222
        %v2228 = vrcp.pop %v2017
        %v2229 = vmul.f32 %v2017, %v2228
        %v2230 = vsub.f32 1.0, %v2229
        %v2231 = vmul.f32 %v2228, %v2230
        %v2232 = vadd.f32 %v2228, %v2231
        %vm2233 = vweird.f32 %v2017
        %vm2234 = vweird.f32 %v2228
        %vm2235 = vmor %vm2233, %vm2234
        %v2236 = vsel %vm2235, %v2228, %v2232
        %v2237 = vand.u32 2147483647, %v2017
        %vm2238 = vcmp.eq.f32.partialorder %v2237, 8.507059e+37
        %v2239 = vand.u32 %v2017, 2147483648
        %v2240 = vor.u32 1.1754944e-38, %v2239
        %v2241 = vsel %vm2238, %v2240, %v2236
        %v2242 = vsub.f32 %v1579, %v1730
        %v2243 = vsub.f32 %v1581, %v1731
        %v2244 = vsub.f32 %v1584, %v1732
        %v2245 = vsub.f32 %v1586, %v1733
        %v2246 = vsub.f32 %v1589, %v1734
        %v2247 = vsub.f32 %v1591, %v1735
        %v2248 = vsub.f32 %v1594, %v1736
        %v2249 = vsub.f32 %v1596, %v1737
        %v2250 = vsub.f32 %v1599, %v1738
        %v2251 = vsub.f32 %v1601, %v1739
        %v2252 = vsub.f32 %v1604, %v1740
        %v2253 = vsub.f32 %v1606, %v1741
        %v2254 = vsub.f32 %v1609, %v1742
        %v2255 = vsub.f32 %v1611, %v1743
        %v2256 = vsub.f32 %v1614, %v1744
        %v2257 = vsub.f32 %v1616, %v1745
        %v2258 = vmul.f32 %v2242, %v2031
        %v2259 = vmul.f32 %v2243, %v2045
        %v2260 = vmul.f32 %v2244, %v2059
        %v2261 = vmul.f32 %v2245, %v2073
        %v2262 = vmul.f32 %v2246, %v2087
        %v2263 = vmul.f32 %v2247, %v2101
        %v2264 = vmul.f32 %v2248, %v2115
        %v2265 = vmul.f32 %v2249, %v2129
        %v2266 = vmul.f32 %v2250, %v2143
        %v2267 = vmul.f32 %v2251, %v2157
        %v2268 = vmul.f32 %v2252, %v2171
        %v2269 = vmul.f32 %v2253, %v2185
        %v2270 = vmul.f32 %v2254, %v2199
        %v2271 = vmul.f32 %v2255, %v2213
        %v2272 = vmul.f32 %v2256, %v2227
        %v2273 = vmul.f32 %v2257, %v2241
        %v2274 = vperm.slane %v1418, 1
        %v2275 = vmul.f32 %v2258, %v2274
        %v2276 = vmul.f32 %v2259, %v2274
        %v2277 = vmul.f32 %v2260, %v2274
        %v2278 = vmul.f32 %v2261, %v2274
        %v2279 = vmul.f32 %v2262, %v2274
        %v2280 = vmul.f32 %v2263, %v2274
        %v2281 = vmul.f32 %v2264, %v2274
        %v2282 = vmul.f32 %v2265, %v2274
        %v2283 = vmul.f32 %v2266, %v2274
        %v2284 = vmul.f32 %v2267, %v2274
        %v2285 = vmul.f32 %v2268, %v2274
        %v2286 = vmul.f32 %v2269, %v2274
        %v2287 = vmul.f32 %v2270, %v2274
        %v2288 = vmul.f32 %v2271, %v2274
        %v2289 = vmul.f32 %v2272, %v2274
        %v2290 = vmul.f32 %v2273, %v2274
        %v2291 = vperm.slane %v1418, 2
        %v2292 = vadd.f32 %v2275, %v2291
        %v2293 = vadd.f32 %v2276, %v2291
        %v2294 = vadd.f32 %v2277, %v2291
        %v2295 = vadd.f32 %v2278, %v2291
        %v2296 = vadd.f32 %v2279, %v2291
        %v2297 = vadd.f32 %v2280, %v2291
        %v2298 = vadd.f32 %v2281, %v2291
        %v2299 = vadd.f32 %v2282, %v2291
        %v2300 = vadd.f32 %v2283, %v2291
        %v2301 = vadd.f32 %v2284, %v2291
        %v2302 = vadd.f32 %v2285, %v2291
        %v2303 = vadd.f32 %v2286, %v2291
        %v2304 = vadd.f32 %v2287, %v2291
        %v2305 = vadd.f32 %v2288, %v2291
        %v2306 = vadd.f32 %v2289, %v2291
        %v2307 = vadd.f32 %v2290, %v2291
        %v2308 = vmax.f32 %v2292, 0.0
        %v2309 = vmax.f32 %v2293, 0.0
        %v2310 = vmax.f32 %v2294, 0.0
        %v2311 = vmax.f32 %v2295, 0.0
        %v2312 = vmax.f32 %v2296, 0.0
        %v2313 = vmax.f32 %v2297, 0.0
        %v2314 = vmax.f32 %v2298, 0.0
        %v2315 = vmax.f32 %v2299, 0.0
        %v2316 = vmax.f32 %v2300, 0.0
        %v2317 = vmax.f32 %v2301, 0.0
        %v2318 = vmax.f32 %v2302, 0.0
        %v2319 = vmax.f32 %v2303, 0.0
        %v2320 = vmax.f32 %v2304, 0.0
        %v2321 = vmax.f32 %v2305, 0.0
        %v2322 = vmax.f32 %v2306, 0.0
        %v2323 = vmax.f32 %v2307, 0.0
        %v2324 = vpack.c.bf16 %v2309, %v2308
        %v2325 = vpack.c.bf16 %v2311, %v2310
        %v2326 = vpack.c.bf16 %v2313, %v2312
        %v2327 = vpack.c.bf16 %v2315, %v2314
        %v2328 = vpack.c.bf16 %v2317, %v2316
        %v2329 = vpack.c.bf16 %v2319, %v2318
        %v2330 = vpack.c.bf16 %v2321, %v2320
        %v2331 = vpack.c.bf16 %v2323, %v2322
        %s2332 = scalar_lea.vmem [#allocation2], 32
        %v2333 = vld [vmem:[%s2332] sm:$0xf]
        %v2334 = vld [vmem:[%s2332 + $0x4] sm:$0xf]
        %v2335 = vld [vmem:[%s2332 + $0x8] sm:$0xf]
        %v2336 = vld [vmem:[%s2332 + $0xc] sm:$0xf]
        %s2337 = scalar_lea.vmem %s3, 8
        %v2338 = vld [vmem:[%s2337] sm:$0x7]
        %v2339 = vperm.slane %v2338, 0
        %v2344 = vunpack.c.l.b16 %v2333
        %v2345 = vunpack.c.l.b16 %v2334
        %v2346 = vunpack.c.l.b16 %v2335
        %v2347 = vunpack.c.l.b16 %v2336
        %v2348 = vpack.c.b16 %v2345, %v2344
        %v2349 = vpack.c.b16 %v2347, %v2346
        %v2353 = vsel %vm463, %v2324, 0
        %v2356 = vsel %vm463, %v2325, 0
        %v2359 = vsel %vm463, %v2326, 0
        %v2362 = vsel %vm463, %v2327, 0
        %v2365 = vsel %vm463, %v2328, 0
        %v2368 = vsel %vm463, %v2329, 0
        %v2371 = vsel %vm463, %v2330, 0
        %v2374 = vsel %vm463, %v2331, 0
        %2376 = vmatpush.bf16.msra.mxu0 0
        %2377 = vmatpush.bf16.msra.mxu0 0
        %2378 = vmatpush.bf16.msra.mxu0 0
        %2379 = vmatpush.bf16.msra.mxu0 0
        %2380 = vmatpush.bf16.msra.mxu0 0
        %2381 = vmatpush.bf16.msra.mxu0 0
        %2382 = vmatpush.bf16.msra.mxu0 %v2349
        %2383 = vmatpush.bf16.msra.mxu0 %v2348
        %2384 = vmatmul.bf16.gmra.mxu0 %v2353
        %v2385 = vpop.f32.mrf.mxu0
        %v2386 = vadd.f32 %v2339, %v2385
        %v2387 = vpop.f32.mrf.mxu0
        %v2388 = vadd.f32 %v2339, %v2387
        %2389 = vmatmul.bf16.gmra.mxu0 %v2356
        %v2390 = vpop.f32.mrf.mxu0
        %v2391 = vadd.f32 %v2339, %v2390
        %v2392 = vpop.f32.mrf.mxu0
        %v2393 = vadd.f32 %v2339, %v2392
        %2394 = vmatmul.bf16.gmra.mxu0 %v2359
        %v2395 = vpop.f32.mrf.mxu0
        %v2396 = vadd.f32 %v2339, %v2395
        %v2397 = vpop.f32.mrf.mxu0
        %v2398 = vadd.f32 %v2339, %v2397
        %2399 = vmatmul.bf16.gmra.mxu0 %v2362
        %v2400 = vpop.f32.mrf.mxu0
        %v2401 = vadd.f32 %v2339, %v2400
        %v2402 = vpop.f32.mrf.mxu0
        %v2403 = vadd.f32 %v2339, %v2402
        %2404 = vmatmul.bf16.gmra.mxu0 %v2365
        %v2405 = vpop.f32.mrf.mxu0
        %v2406 = vadd.f32 %v2339, %v2405
        %v2407 = vpop.f32.mrf.mxu0
        %v2408 = vadd.f32 %v2339, %v2407
        %2409 = vmatmul.bf16.gmra.mxu0 %v2368
        %v2410 = vpop.f32.mrf.mxu0
        %v2411 = vadd.f32 %v2339, %v2410
        %v2412 = vpop.f32.mrf.mxu0
        %v2413 = vadd.f32 %v2339, %v2412
        %2414 = vmatmul.bf16.gmra.mxu0 %v2371
        %v2415 = vpop.f32.mrf.mxu0
        %v2416 = vadd.f32 %v2339, %v2415
        %v2417 = vpop.f32.mrf.mxu0
        %v2418 = vadd.f32 %v2339, %v2417
        %2419 = vmatmul.bf16.gmra.mxu0 %v2374
        %v2420 = vpop.f32.mrf.mxu0
        %v2421 = vadd.f32 %v2339, %v2420
        %v2422 = vpop.f32.mrf.mxu0
        %v2423 = vadd.f32 %v2339, %v2422
        %2424 = vdwg.mxu0
        %v2425 = vpack.c.bf16 %v2386, %v2386
        %v2426 = vpack.c.bf16 %v2388, %v2388
        %v2427 = vpack.c.bf16 %v2391, %v2391
        %v2428 = vpack.c.bf16 %v2393, %v2393
        %v2429 = vpack.c.bf16 %v2396, %v2396
        %v2430 = vpack.c.bf16 %v2398, %v2398
        %v2431 = vpack.c.bf16 %v2401, %v2401
        %v2432 = vpack.c.bf16 %v2403, %v2403
        %v2433 = vpack.c.bf16 %v2406, %v2406
        %v2434 = vpack.c.bf16 %v2408, %v2408
        %v2435 = vpack.c.bf16 %v2411, %v2411
        %v2436 = vpack.c.bf16 %v2413, %v2413
        %v2437 = vpack.c.bf16 %v2416, %v2416
        %v2438 = vpack.c.bf16 %v2418, %v2418
        %v2439 = vpack.c.bf16 %v2421, %v2421
        %v2440 = vpack.c.bf16 %v2423, %v2423
        %v2457 = vunpack.c.l.b16 %v2425
        %v2458 = vunpack.c.l.b16 %v2426
        %v2459 = vunpack.c.l.b16 %v2427
        %v2460 = vunpack.c.l.b16 %v2428
        %v2461 = vunpack.c.l.b16 %v2429
        %v2462 = vunpack.c.l.b16 %v2430
        %v2463 = vunpack.c.l.b16 %v2431
        %v2464 = vunpack.c.l.b16 %v2432
        %v2465 = vunpack.c.l.b16 %v2433
        %v2466 = vunpack.c.l.b16 %v2434
        %v2467 = vunpack.c.l.b16 %v2435
        %v2468 = vunpack.c.l.b16 %v2436
        %v2469 = vunpack.c.l.b16 %v2437
        %v2470 = vunpack.c.l.b16 %v2438
        %v2471 = vunpack.c.l.b16 %v2439
        %v2472 = vunpack.c.l.b16 %v2440
        %v2473 = vpack.c.b16 %v2458, %v2457
        %v2474 = vpack.c.b16 %v2460, %v2459
        %v2475 = vpack.c.b16 %v2462, %v2461
        %v2476 = vpack.c.b16 %v2464, %v2463
        %v2477 = vpack.c.b16 %v2466, %v2465
        %v2478 = vpack.c.b16 %v2468, %v2467
        %v2479 = vpack.c.b16 %v2470, %v2469
        %v2480 = vpack.c.b16 %v2472, %v2471
        %2489 = vmatpush.bf16.msra.mxu0 %v2480
        %2490 = vmatpush.bf16.msra.mxu0 %v2479
        %2491 = vmatpush.bf16.msra.mxu0 %v2478
        %2492 = vmatpush.bf16.msra.mxu0 %v2477
        %2493 = vmatpush.bf16.msra.mxu0 %v2476
        %2494 = vmatpush.bf16.msra.mxu0 %v2475
        %2495 = vmatpush.bf16.msra.mxu0 %v2474
        %2496 = vmatpush.bf16.msra.mxu0 %v2473
        %2497 = vmatmul.bf16.gmra.mxu0 %v585
        %v2498 = vpop.f32.mrf.mxu0
        %v2499 = vadd.f32 0.0, %v2498
        %v2500 = vpop.f32.mrf.mxu0
        %v2501 = vadd.f32 0.0, %v2500
        %2502 = vmatmul.bf16.gmra.mxu0 %v586
        %v2503 = vpop.f32.mrf.mxu0
        %v2504 = vadd.f32 0.0, %v2503
        %v2505 = vpop.f32.mrf.mxu0
        %v2506 = vadd.f32 0.0, %v2505
        %2507 = vmatmul.bf16.gmra.mxu0 %v587
        %v2508 = vpop.f32.mrf.mxu0
        %v2509 = vadd.f32 0.0, %v2508
        %v2510 = vpop.f32.mrf.mxu0
        %v2511 = vadd.f32 0.0, %v2510
        %2512 = vmatmul.bf16.gmra.mxu0 %v588
        %v2513 = vpop.f32.mrf.mxu0
        %v2514 = vadd.f32 0.0, %v2513
        %v2515 = vpop.f32.mrf.mxu0
        %v2516 = vadd.f32 0.0, %v2515
        %2517 = vmatmul.bf16.gmra.mxu0 %v589
        %v2518 = vpop.f32.mrf.mxu0
        %v2519 = vadd.f32 0.0, %v2518
        %v2520 = vpop.f32.mrf.mxu0
        %v2521 = vadd.f32 0.0, %v2520
        %2522 = vmatmul.bf16.gmra.mxu0 %v590
        %v2523 = vpop.f32.mrf.mxu0
        %v2524 = vadd.f32 0.0, %v2523
        %v2525 = vpop.f32.mrf.mxu0
        %v2526 = vadd.f32 0.0, %v2525
        %2527 = vmatmul.bf16.gmra.mxu0 %v591
        %v2528 = vpop.f32.mrf.mxu0
        %v2529 = vadd.f32 0.0, %v2528
        %v2530 = vpop.f32.mrf.mxu0
        %v2531 = vadd.f32 0.0, %v2530
        %2532 = vmatmul.bf16.gmra.mxu0 %v592
        %v2533 = vpop.f32.mrf.mxu0
        %v2534 = vadd.f32 0.0, %v2533
        %v2535 = vpop.f32.mrf.mxu0
        %v2536 = vadd.f32 0.0, %v2535
        %2537 = vdwg.mxu0
        %v2538 = vsel %vm463, %v2499, 0.0
        %2539 = vadd.xlane.f32.xlu0 %v2538
        %v2540 = vpop.xlane.xlu0 %2539
        %v2541 = vsel %vm463, %v2501, 0.0
        %2542 = vadd.xlane.f32.xlu0 %v2541
        %v2543 = vpop.xlane.xlu0 %2542
        %v2544 = vsel %vm463, %v2504, 0.0
        %2545 = vadd.xlane.f32.xlu0 %v2544
        %v2546 = vpop.xlane.xlu0 %2545
        %v2547 = vsel %vm463, %v2506, 0.0
        %2548 = vadd.xlane.f32.xlu0 %v2547
        %v2549 = vpop.xlane.xlu0 %2548
        %v2550 = vsel %vm463, %v2509, 0.0
        %2551 = vadd.xlane.f32.xlu0 %v2550
        %v2552 = vpop.xlane.xlu0 %2551
        %v2553 = vsel %vm463, %v2511, 0.0
        %2554 = vadd.xlane.f32.xlu0 %v2553
        %v2555 = vpop.xlane.xlu0 %2554
        %v2556 = vsel %vm463, %v2514, 0.0
        %2557 = vadd.xlane.f32.xlu0 %v2556
        %v2558 = vpop.xlane.xlu0 %2557
        %v2559 = vsel %vm463, %v2516, 0.0
        %2560 = vadd.xlane.f32.xlu0 %v2559
        %v2561 = vpop.xlane.xlu0 %2560
        %v2562 = vsel %vm463, %v2519, 0.0
        %2563 = vadd.xlane.f32.xlu0 %v2562
        %v2564 = vpop.xlane.xlu0 %2563
        %v2565 = vsel %vm463, %v2521, 0.0
        %2566 = vadd.xlane.f32.xlu0 %v2565
        %v2567 = vpop.xlane.xlu0 %2566
        %v2568 = vsel %vm463, %v2524, 0.0
        %2569 = vadd.xlane.f32.xlu0 %v2568
        %v2570 = vpop.xlane.xlu0 %2569
        %v2571 = vsel %vm463, %v2526, 0.0
        %2572 = vadd.xlane.f32.xlu0 %v2571
        %v2573 = vpop.xlane.xlu0 %2572
        %v2574 = vsel %vm463, %v2529, 0.0
        %2575 = vadd.xlane.f32.xlu0 %v2574
        %v2576 = vpop.xlane.xlu0 %2575
        %v2577 = vsel %vm463, %v2531, 0.0
        %2578 = vadd.xlane.f32.xlu0 %v2577
        %v2579 = vpop.xlane.xlu0 %2578
        %v2580 = vsel %vm463, %v2534, 0.0
        %2581 = vadd.xlane.f32.xlu0 %v2580
        %v2582 = vpop.xlane.xlu0 %2581
        %v2583 = vsel %vm463, %v2536, 0.0
        %2584 = vadd.xlane.f32.xlu0 %v2583
        %v2585 = vpop.xlane.xlu0 %2584
        %v2586 = vmul.f32 %v2499, %v2499
        %v2587 = vmul.f32 %v2501, %v2501
        %v2588 = vmul.f32 %v2504, %v2504
        %v2589 = vmul.f32 %v2506, %v2506
        %v2590 = vmul.f32 %v2509, %v2509
        %v2591 = vmul.f32 %v2511, %v2511
        %v2592 = vmul.f32 %v2514, %v2514
        %v2593 = vmul.f32 %v2516, %v2516
        %v2594 = vmul.f32 %v2519, %v2519
        %v2595 = vmul.f32 %v2521, %v2521
        %v2596 = vmul.f32 %v2524, %v2524
        %v2597 = vmul.f32 %v2526, %v2526
        %v2598 = vmul.f32 %v2529, %v2529
        %v2599 = vmul.f32 %v2531, %v2531
        %v2600 = vmul.f32 %v2534, %v2534
        %v2601 = vmul.f32 %v2536, %v2536
        %v2602 = vsel %vm463, %v2586, 0.0
        %2603 = vadd.xlane.f32.xlu0 %v2602
        %v2604 = vpop.xlane.xlu0 %2603
        %v2605 = vsel %vm463, %v2587, 0.0
        %2606 = vadd.xlane.f32.xlu0 %v2605
        %v2607 = vpop.xlane.xlu0 %2606
        %v2608 = vsel %vm463, %v2588, 0.0
        %2609 = vadd.xlane.f32.xlu0 %v2608
        %v2610 = vpop.xlane.xlu0 %2609
        %v2611 = vsel %vm463, %v2589, 0.0
        %2612 = vadd.xlane.f32.xlu0 %v2611
        %v2613 = vpop.xlane.xlu0 %2612
        %v2614 = vsel %vm463, %v2590, 0.0
        %2615 = vadd.xlane.f32.xlu0 %v2614
        %v2616 = vpop.xlane.xlu0 %2615
        %v2617 = vsel %vm463, %v2591, 0.0
        %2618 = vadd.xlane.f32.xlu0 %v2617
        %v2619 = vpop.xlane.xlu0 %2618
        %v2620 = vsel %vm463, %v2592, 0.0
        %2621 = vadd.xlane.f32.xlu0 %v2620
        %v2622 = vpop.xlane.xlu0 %2621
        %v2623 = vsel %vm463, %v2593, 0.0
        %2624 = vadd.xlane.f32.xlu0 %v2623
        %v2625 = vpop.xlane.xlu0 %2624
        %v2626 = vsel %vm463, %v2594, 0.0
        %2627 = vadd.xlane.f32.xlu0 %v2626
        %v2628 = vpop.xlane.xlu0 %2627
        %v2629 = vsel %vm463, %v2595, 0.0
        %2630 = vadd.xlane.f32.xlu0 %v2629
        %v2631 = vpop.xlane.xlu0 %2630
        %v2632 = vsel %vm463, %v2596, 0.0
        %2633 = vadd.xlane.f32.xlu0 %v2632
        %v2634 = vpop.xlane.xlu0 %2633
        %v2635 = vsel %vm463, %v2597, 0.0
        %2636 = vadd.xlane.f32.xlu0 %v2635
        %v2637 = vpop.xlane.xlu0 %2636
        %v2638 = vsel %vm463, %v2598, 0.0
        %2639 = vadd.xlane.f32.xlu0 %v2638
        %v2640 = vpop.xlane.xlu0 %2639
        %v2641 = vsel %vm463, %v2599, 0.0
        %2642 = vadd.xlane.f32.xlu0 %v2641
        %v2643 = vpop.xlane.xlu0 %2642
        %v2644 = vsel %vm463, %v2600, 0.0
        %2645 = vadd.xlane.f32.xlu0 %v2644
        %v2646 = vpop.xlane.xlu0 %2645
        %v2647 = vsel %vm463, %v2601, 0.0
        %2648 = vadd.xlane.f32.xlu0 %v2647
        %v2649 = vpop.xlane.xlu0 %2648
        %v2650 = vmul.f32 %v2540, 0.03125
        %v2651 = vmul.f32 %v2543, 0.03125
        %v2652 = vmul.f32 %v2546, 0.03125
        %v2653 = vmul.f32 %v2549, 0.03125
        %v2654 = vmul.f32 %v2552, 0.03125
        %v2655 = vmul.f32 %v2555, 0.03125
        %v2656 = vmul.f32 %v2558, 0.03125
        %v2657 = vmul.f32 %v2561, 0.03125
        %v2658 = vmul.f32 %v2564, 0.03125
        %v2659 = vmul.f32 %v2567, 0.03125
        %v2660 = vmul.f32 %v2570, 0.03125
        %v2661 = vmul.f32 %v2573, 0.03125
        %v2662 = vmul.f32 %v2576, 0.03125
        %v2663 = vmul.f32 %v2579, 0.03125
        %v2664 = vmul.f32 %v2582, 0.03125
        %v2665 = vmul.f32 %v2585, 0.03125
        %v2666 = vmul.f32 %v2650, %v2540
        %v2667 = vmul.f32 %v2651, %v2543
        %v2668 = vmul.f32 %v2652, %v2546
        %v2669 = vmul.f32 %v2653, %v2549
        %v2670 = vmul.f32 %v2654, %v2552
        %v2671 = vmul.f32 %v2655, %v2555
        %v2672 = vmul.f32 %v2656, %v2558
        %v2673 = vmul.f32 %v2657, %v2561
        %v2674 = vmul.f32 %v2658, %v2564
        %v2675 = vmul.f32 %v2659, %v2567
        %v2676 = vmul.f32 %v2660, %v2570
        %v2677 = vmul.f32 %v2661, %v2573
        %v2678 = vmul.f32 %v2662, %v2576
        %v2679 = vmul.f32 %v2663, %v2579
        %v2680 = vmul.f32 %v2664, %v2582
        %v2681 = vmul.f32 %v2665, %v2585
        %v2682 = vsub.f32 %v2604, %v2666
        %v2683 = vsub.f32 %v2607, %v2667
        %v2684 = vsub.f32 %v2610, %v2668
        %v2685 = vsub.f32 %v2613, %v2669
        %v2686 = vsub.f32 %v2616, %v2670
        %v2687 = vsub.f32 %v2619, %v2671
        %v2688 = vsub.f32 %v2622, %v2672
        %v2689 = vsub.f32 %v2625, %v2673
        %v2690 = vsub.f32 %v2628, %v2674
        %v2691 = vsub.f32 %v2631, %v2675
        %v2692 = vsub.f32 %v2634, %v2676
        %v2693 = vsub.f32 %v2637, %v2677
        %v2694 = vsub.f32 %v2640, %v2678
        %v2695 = vsub.f32 %v2643, %v2679
        %v2696 = vsub.f32 %v2646, %v2680
        %v2697 = vsub.f32 %v2649, %v2681
        %v2698 = vmax.f32 %v2682, 0.0
        %v2699 = vmax.f32 %v2683, 0.0
        %v2700 = vmax.f32 %v2684, 0.0
        %v2701 = vmax.f32 %v2685, 0.0
        %v2702 = vmax.f32 %v2686, 0.0
        %v2703 = vmax.f32 %v2687, 0.0
        %v2704 = vmax.f32 %v2688, 0.0
        %v2705 = vmax.f32 %v2689, 0.0
        %v2706 = vmax.f32 %v2690, 0.0
        %v2707 = vmax.f32 %v2691, 0.0
        %v2708 = vmax.f32 %v2692, 0.0
        %v2709 = vmax.f32 %v2693, 0.0
        %v2710 = vmax.f32 %v2694, 0.0
        %v2711 = vmax.f32 %v2695, 0.0
        %v2712 = vmax.f32 %v2696, 0.0
        %v2713 = vmax.f32 %v2697, 0.0
        %v2714 = vmul.f32 %v2698, 0.032258064
        %v2715 = vmul.f32 %v2699, 0.032258064
        %v2716 = vmul.f32 %v2700, 0.032258064
        %v2717 = vmul.f32 %v2701, 0.032258064
        %v2718 = vmul.f32 %v2702, 0.032258064
        %v2719 = vmul.f32 %v2703, 0.032258064
        %v2720 = vmul.f32 %v2704, 0.032258064
        %v2721 = vmul.f32 %v2705, 0.032258064
        %v2722 = vmul.f32 %v2706, 0.032258064
        %v2723 = vmul.f32 %v2707, 0.032258064
        %v2724 = vmul.f32 %v2708, 0.032258064
        %v2725 = vmul.f32 %v2709, 0.032258064
        %v2726 = vmul.f32 %v2710, 0.032258064
        %v2727 = vmul.f32 %v2711, 0.032258064
        %v2728 = vmul.f32 %v2712, 0.032258064
        %v2729 = vmul.f32 %v2713, 0.032258064
        %v2730 = vrsqrt.pop %v2714
        %v2731 = vmul.f32 %v2730, %v2714
        %v2732 = vmul.f32 %v2731, %v2730
        %v2733 = vmul.f32 0.5, %v2732
        %v2734 = vsub.f32 1.5, %v2733
        %v2735 = vmul.f32 %v2730, %v2734
        %v2736 = vmul.f32 %v2714, %v2735
        %vm2737 = vcmp.eq.f32.partialorder %v2714, inf
        %v2738 = vsel %vm2737, %v2714, %v2736
        %vm2739 = vcmp.eq.f32.partialorder %v2714, 0.0
        %v2740 = vand.u32 %v2714, 2147483648
        %v2741 = vsel %vm2739, %v2740, %v2738
        %v2742 = vrsqrt.pop %v2715
        %v2743 = vmul.f32 %v2742, %v2715
        %v2744 = vmul.f32 %v2743, %v2742
        %v2745 = vmul.f32 0.5, %v2744
        %v2746 = vsub.f32 1.5, %v2745
        %v2747 = vmul.f32 %v2742, %v2746
        %v2748 = vmul.f32 %v2715, %v2747
        %vm2749 = vcmp.eq.f32.partialorder %v2715, inf
        %v2750 = vsel %vm2749, %v2715, %v2748
        %vm2751 = vcmp.eq.f32.partialorder %v2715, 0.0
        %v2752 = vand.u32 %v2715, 2147483648
        %v2753 = vsel %vm2751, %v2752, %v2750
        %v2754 = vrsqrt.pop %v2716
        %v2755 = vmul.f32 %v2754, %v2716
        %v2756 = vmul.f32 %v2755, %v2754
        %v2757 = vmul.f32 0.5, %v2756
        %v2758 = vsub.f32 1.5, %v2757
        %v2759 = vmul.f32 %v2754, %v2758
        %v2760 = vmul.f32 %v2716, %v2759
        %vm2761 = vcmp.eq.f32.partialorder %v2716, inf
        %v2762 = vsel %vm2761, %v2716, %v2760
        %vm2763 = vcmp.eq.f32.partialorder %v2716, 0.0
        %v2764 = vand.u32 %v2716, 2147483648
        %v2765 = vsel %vm2763, %v2764, %v2762
        %v2766 = vrsqrt.pop %v2717
        %v2767 = vmul.f32 %v2766, %v2717
        %v2768 = vmul.f32 %v2767, %v2766
        %v2769 = vmul.f32 0.5, %v2768
        %v2770 = vsub.f32 1.5, %v2769
        %v2771 = vmul.f32 %v2766, %v2770
        %v2772 = vmul.f32 %v2717, %v2771
        %vm2773 = vcmp.eq.f32.partialorder %v2717, inf
        %v2774 = vsel %vm2773, %v2717, %v2772
        %vm2775 = vcmp.eq.f32.partialorder %v2717, 0.0
        %v2776 = vand.u32 %v2717, 2147483648
        %v2777 = vsel %vm2775, %v2776, %v2774
        %v2778 = vrsqrt.pop %v2718
        %v2779 = vmul.f32 %v2778, %v2718
        %v2780 = vmul.f32 %v2779, %v2778
        %v2781 = vmul.f32 0.5, %v2780
        %v2782 = vsub.f32 1.5, %v2781
        %v2783 = vmul.f32 %v2778, %v2782
        %v2784 = vmul.f32 %v2718, %v2783
        %vm2785 = vcmp.eq.f32.partialorder %v2718, inf
        %v2786 = vsel %vm2785, %v2718, %v2784
        %vm2787 = vcmp.eq.f32.partialorder %v2718, 0.0
        %v2788 = vand.u32 %v2718, 2147483648
        %v2789 = vsel %vm2787, %v2788, %v2786
        %v2790 = vrsqrt.pop %v2719
        %v2791 = vmul.f32 %v2790, %v2719
        %v2792 = vmul.f32 %v2791, %v2790
        %v2793 = vmul.f32 0.5, %v2792
        %v2794 = vsub.f32 1.5, %v2793
        %v2795 = vmul.f32 %v2790, %v2794
        %v2796 = vmul.f32 %v2719, %v2795
        %vm2797 = vcmp.eq.f32.partialorder %v2719, inf
        %v2798 = vsel %vm2797, %v2719, %v2796
        %vm2799 = vcmp.eq.f32.partialorder %v2719, 0.0
        %v2800 = vand.u32 %v2719, 2147483648
        %v2801 = vsel %vm2799, %v2800, %v2798
        %v2802 = vrsqrt.pop %v2720
        %v2803 = vmul.f32 %v2802, %v2720
        %v2804 = vmul.f32 %v2803, %v2802
        %v2805 = vmul.f32 0.5, %v2804
        %v2806 = vsub.f32 1.5, %v2805
        %v2807 = vmul.f32 %v2802, %v2806
        %v2808 = vmul.f32 %v2720, %v2807
        %vm2809 = vcmp.eq.f32.partialorder %v2720, inf
        %v2810 = vsel %vm2809, %v2720, %v2808
        %vm2811 = vcmp.eq.f32.partialorder %v2720, 0.0
        %v2812 = vand.u32 %v2720, 2147483648
        %v2813 = vsel %vm2811, %v2812, %v2810
        %v2814 = vrsqrt.pop %v2721
        %v2815 = vmul.f32 %v2814, %v2721
        %v2816 = vmul.f32 %v2815, %v2814
        %v2817 = vmul.f32 0.5, %v2816
        %v2818 = vsub.f32 1.5, %v2817
        %v2819 = vmul.f32 %v2814, %v2818
        %v2820 = vmul.f32 %v2721, %v2819
        %vm2821 = vcmp.eq.f32.partialorder %v2721, inf
        %v2822 = vsel %vm2821, %v2721, %v2820
        %vm2823 = vcmp.eq.f32.partialorder %v2721, 0.0
        %v2824 = vand.u32 %v2721, 2147483648
        %v2825 = vsel %vm2823, %v2824, %v2822
        %v2826 = vrsqrt.pop %v2722
        %v2827 = vmul.f32 %v2826, %v2722
        %v2828 = vmul.f32 %v2827, %v2826
        %v2829 = vmul.f32 0.5, %v2828
        %v2830 = vsub.f32 1.5, %v2829
        %v2831 = vmul.f32 %v2826, %v2830
        %v2832 = vmul.f32 %v2722, %v2831
        %vm2833 = vcmp.eq.f32.partialorder %v2722, inf
        %v2834 = vsel %vm2833, %v2722, %v2832
        %vm2835 = vcmp.eq.f32.partialorder %v2722, 0.0
        %v2836 = vand.u32 %v2722, 2147483648
        %v2837 = vsel %vm2835, %v2836, %v2834
        %v2838 = vrsqrt.pop %v2723
        %v2839 = vmul.f32 %v2838, %v2723
        %v2840 = vmul.f32 %v2839, %v2838
        %v2841 = vmul.f32 0.5, %v2840
        %v2842 = vsub.f32 1.5, %v2841
        %v2843 = vmul.f32 %v2838, %v2842
        %v2844 = vmul.f32 %v2723, %v2843
        %vm2845 = vcmp.eq.f32.partialorder %v2723, inf
        %v2846 = vsel %vm2845, %v2723, %v2844
        %vm2847 = vcmp.eq.f32.partialorder %v2723, 0.0
        %v2848 = vand.u32 %v2723, 2147483648
        %v2849 = vsel %vm2847, %v2848, %v2846
        %v2850 = vrsqrt.pop %v2724
        %v2851 = vmul.f32 %v2850, %v2724
        %v2852 = vmul.f32 %v2851, %v2850
        %v2853 = vmul.f32 0.5, %v2852
        %v2854 = vsub.f32 1.5, %v2853
        %v2855 = vmul.f32 %v2850, %v2854
        %v2856 = vmul.f32 %v2724, %v2855
        %vm2857 = vcmp.eq.f32.partialorder %v2724, inf
        %v2858 = vsel %vm2857, %v2724, %v2856
        %vm2859 = vcmp.eq.f32.partialorder %v2724, 0.0
        %v2860 = vand.u32 %v2724, 2147483648
        %v2861 = vsel %vm2859, %v2860, %v2858
        %v2862 = vrsqrt.pop %v2725
        %v2863 = vmul.f32 %v2862, %v2725
        %v2864 = vmul.f32 %v2863, %v2862
        %v2865 = vmul.f32 0.5, %v2864
        %v2866 = vsub.f32 1.5, %v2865
        %v2867 = vmul.f32 %v2862, %v2866
        %v2868 = vmul.f32 %v2725, %v2867
        %vm2869 = vcmp.eq.f32.partialorder %v2725, inf
        %v2870 = vsel %vm2869, %v2725, %v2868
        %vm2871 = vcmp.eq.f32.partialorder %v2725, 0.0
        %v2872 = vand.u32 %v2725, 2147483648
        %v2873 = vsel %vm2871, %v2872, %v2870
        %v2874 = vrsqrt.pop %v2726
        %v2875 = vmul.f32 %v2874, %v2726
        %v2876 = vmul.f32 %v2875, %v2874
        %v2877 = vmul.f32 0.5, %v2876
        %v2878 = vsub.f32 1.5, %v2877
        %v2879 = vmul.f32 %v2874, %v2878
        %v2880 = vmul.f32 %v2726, %v2879
        %vm2881 = vcmp.eq.f32.partialorder %v2726, inf
        %v2882 = vsel %vm2881, %v2726, %v2880
        %vm2883 = vcmp.eq.f32.partialorder %v2726, 0.0
        %v2884 = vand.u32 %v2726, 2147483648
        %v2885 = vsel %vm2883, %v2884, %v2882
        %v2886 = vrsqrt.pop %v2727
        %v2887 = vmul.f32 %v2886, %v2727
        %v2888 = vmul.f32 %v2887, %v2886
        %v2889 = vmul.f32 0.5, %v2888
        %v2890 = vsub.f32 1.5, %v2889
        %v2891 = vmul.f32 %v2886, %v2890
        %v2892 = vmul.f32 %v2727, %v2891
        %vm2893 = vcmp.eq.f32.partialorder %v2727, inf
        %v2894 = vsel %vm2893, %v2727, %v2892
        %vm2895 = vcmp.eq.f32.partialorder %v2727, 0.0
        %v2896 = vand.u32 %v2727, 2147483648
        %v2897 = vsel %vm2895, %v2896, %v2894
        %v2898 = vrsqrt.pop %v2728
        %v2899 = vmul.f32 %v2898, %v2728
        %v2900 = vmul.f32 %v2899, %v2898
        %v2901 = vmul.f32 0.5, %v2900
        %v2902 = vsub.f32 1.5, %v2901
        %v2903 = vmul.f32 %v2898, %v2902
        %v2904 = vmul.f32 %v2728, %v2903
        %vm2905 = vcmp.eq.f32.partialorder %v2728, inf
        %v2906 = vsel %vm2905, %v2728, %v2904
        %vm2907 = vcmp.eq.f32.partialorder %v2728, 0.0
        %v2908 = vand.u32 %v2728, 2147483648
        %v2909 = vsel %vm2907, %v2908, %v2906
        %v2910 = vrsqrt.pop %v2729
        %v2911 = vmul.f32 %v2910, %v2729
        %v2912 = vmul.f32 %v2911, %v2910
        %v2913 = vmul.f32 0.5, %v2912
        %v2914 = vsub.f32 1.5, %v2913
        %v2915 = vmul.f32 %v2910, %v2914
        %v2916 = vmul.f32 %v2729, %v2915
        %vm2917 = vcmp.eq.f32.partialorder %v2729, inf
        %v2918 = vsel %vm2917, %v2729, %v2916
        %vm2919 = vcmp.eq.f32.partialorder %v2729, 0.0
        %v2920 = vand.u32 %v2729, 2147483648
        %v2921 = vsel %vm2919, %v2920, %v2918
        %v2922 = vadd.f32 %v2741, 0.001
        %v2923 = vadd.f32 %v2753, 0.001
        %v2924 = vadd.f32 %v2765, 0.001
        %v2925 = vadd.f32 %v2777, 0.001
        %v2926 = vadd.f32 %v2789, 0.001
        %v2927 = vadd.f32 %v2801, 0.001
        %v2928 = vadd.f32 %v2813, 0.001
        %v2929 = vadd.f32 %v2825, 0.001
        %v2930 = vadd.f32 %v2837, 0.001
        %v2931 = vadd.f32 %v2849, 0.001
        %v2932 = vadd.f32 %v2861, 0.001
        %v2933 = vadd.f32 %v2873, 0.001
        %v2934 = vadd.f32 %v2885, 0.001
        %v2935 = vadd.f32 %v2897, 0.001
        %v2936 = vadd.f32 %v2909, 0.001
        %v2937 = vadd.f32 %v2921, 0.001
        %v2938 = vrcp.pop %v2922
        %v2939 = vmul.f32 %v2922, %v2938
        %v2940 = vsub.f32 1.0, %v2939
        %v2941 = vmul.f32 %v2938, %v2940
        %v2942 = vadd.f32 %v2938, %v2941
        %vm2943 = vweird.f32 %v2922
        %vm2944 = vweird.f32 %v2938
        %vm2945 = vmor %vm2943, %vm2944
        %v2946 = vsel %vm2945, %v2938, %v2942
        %v2947 = vand.u32 2147483647, %v2922
        %vm2948 = vcmp.eq.f32.partialorder %v2947, 8.507059e+37
        %v2949 = vand.u32 %v2922, 2147483648
        %v2950 = vor.u32 1.1754944e-38, %v2949
        %v2951 = vsel %vm2948, %v2950, %v2946
        %v2952 = vrcp.pop %v2923
        %v2953 = vmul.f32 %v2923, %v2952
        %v2954 = vsub.f32 1.0, %v2953
        %v2955 = vmul.f32 %v2952, %v2954
        %v2956 = vadd.f32 %v2952, %v2955
        %vm2957 = vweird.f32 %v2923
        %vm2958 = vweird.f32 %v2952
        %vm2959 = vmor %vm2957, %vm2958
        %v2960 = vsel %vm2959, %v2952, %v2956
        %v2961 = vand.u32 2147483647, %v2923
        %vm2962 = vcmp.eq.f32.partialorder %v2961, 8.507059e+37
        %v2963 = vand.u32 %v2923, 2147483648
        %v2964 = vor.u32 1.1754944e-38, %v2963
        %v2965 = vsel %vm2962, %v2964, %v2960
        %v2966 = vrcp.pop %v2924
        %v2967 = vmul.f32 %v2924, %v2966
        %v2968 = vsub.f32 1.0, %v2967
        %v2969 = vmul.f32 %v2966, %v2968
        %v2970 = vadd.f32 %v2966, %v2969
        %vm2971 = vweird.f32 %v2924
        %vm2972 = vweird.f32 %v2966
        %vm2973 = vmor %vm2971, %vm2972
        %v2974 = vsel %vm2973, %v2966, %v2970
        %v2975 = vand.u32 2147483647, %v2924
        %vm2976 = vcmp.eq.f32.partialorder %v2975, 8.507059e+37
        %v2977 = vand.u32 %v2924, 2147483648
        %v2978 = vor.u32 1.1754944e-38, %v2977
        %v2979 = vsel %vm2976, %v2978, %v2974
        %v2980 = vrcp.pop %v2925
        %v2981 = vmul.f32 %v2925, %v2980
        %v2982 = vsub.f32 1.0, %v2981
        %v2983 = vmul.f32 %v2980, %v2982
        %v2984 = vadd.f32 %v2980, %v2983
        %vm2985 = vweird.f32 %v2925
        %vm2986 = vweird.f32 %v2980
        %vm2987 = vmor %vm2985, %vm2986
        %v2988 = vsel %vm2987, %v2980, %v2984
        %v2989 = vand.u32 2147483647, %v2925
        %vm2990 = vcmp.eq.f32.partialorder %v2989, 8.507059e+37
        %v2991 = vand.u32 %v2925, 2147483648
        %v2992 = vor.u32 1.1754944e-38, %v2991
        %v2993 = vsel %vm2990, %v2992, %v2988
        %v2994 = vrcp.pop %v2926
        %v2995 = vmul.f32 %v2926, %v2994
        %v2996 = vsub.f32 1.0, %v2995
        %v2997 = vmul.f32 %v2994, %v2996
        %v2998 = vadd.f32 %v2994, %v2997
        %vm2999 = vweird.f32 %v2926
        %vm3000 = vweird.f32 %v2994
        %vm3001 = vmor %vm2999, %vm3000
        %v3002 = vsel %vm3001, %v2994, %v2998
        %v3003 = vand.u32 2147483647, %v2926
        %vm3004 = vcmp.eq.f32.partialorder %v3003, 8.507059e+37
        %v3005 = vand.u32 %v2926, 2147483648
        %v3006 = vor.u32 1.1754944e-38, %v3005
        %v3007 = vsel %vm3004, %v3006, %v3002
        %v3008 = vrcp.pop %v2927
        %v3009 = vmul.f32 %v2927, %v3008
        %v3010 = vsub.f32 1.0, %v3009
        %v3011 = vmul.f32 %v3008, %v3010
        %v3012 = vadd.f32 %v3008, %v3011
        %vm3013 = vweird.f32 %v2927
        %vm3014 = vweird.f32 %v3008
        %vm3015 = vmor %vm3013, %vm3014
        %v3016 = vsel %vm3015, %v3008, %v3012
        %v3017 = vand.u32 2147483647, %v2927
        %vm3018 = vcmp.eq.f32.partialorder %v3017, 8.507059e+37
        %v3019 = vand.u32 %v2927, 2147483648
        %v3020 = vor.u32 1.1754944e-38, %v3019
        %v3021 = vsel %vm3018, %v3020, %v3016
        %v3022 = vrcp.pop %v2928
        %v3023 = vmul.f32 %v2928, %v3022
        %v3024 = vsub.f32 1.0, %v3023
        %v3025 = vmul.f32 %v3022, %v3024
        %v3026 = vadd.f32 %v3022, %v3025
        %vm3027 = vweird.f32 %v2928
        %vm3028 = vweird.f32 %v3022
        %vm3029 = vmor %vm3027, %vm3028
        %v3030 = vsel %vm3029, %v3022, %v3026
        %v3031 = vand.u32 2147483647, %v2928
        %vm3032 = vcmp.eq.f32.partialorder %v3031, 8.507059e+37
        %v3033 = vand.u32 %v2928, 2147483648
        %v3034 = vor.u32 1.1754944e-38, %v3033
        %v3035 = vsel %vm3032, %v3034, %v3030
        %v3036 = vrcp.pop %v2929
        %v3037 = vmul.f32 %v2929, %v3036
        %v3038 = vsub.f32 1.0, %v3037
        %v3039 = vmul.f32 %v3036, %v3038
        %v3040 = vadd.f32 %v3036, %v3039
        %vm3041 = vweird.f32 %v2929
        %vm3042 = vweird.f32 %v3036
        %vm3043 = vmor %vm3041, %vm3042
        %v3044 = vsel %vm3043, %v3036, %v3040
        %v3045 = vand.u32 2147483647, %v2929
        %vm3046 = vcmp.eq.f32.partialorder %v3045, 8.507059e+37
        %v3047 = vand.u32 %v2929, 2147483648
        %v3048 = vor.u32 1.1754944e-38, %v3047
        %v3049 = vsel %vm3046, %v3048, %v3044
        %v3050 = vrcp.pop %v2930
        %v3051 = vmul.f32 %v2930, %v3050
        %v3052 = vsub.f32 1.0, %v3051
        %v3053 = vmul.f32 %v3050, %v3052
        %v3054 = vadd.f32 %v3050, %v3053
        %vm3055 = vweird.f32 %v2930
        %vm3056 = vweird.f32 %v3050
        %vm3057 = vmor %vm3055, %vm3056
        %v3058 = vsel %vm3057, %v3050, %v3054
        %v3059 = vand.u32 2147483647, %v2930
        %vm3060 = vcmp.eq.f32.partialorder %v3059, 8.507059e+37
        %v3061 = vand.u32 %v2930, 2147483648
        %v3062 = vor.u32 1.1754944e-38, %v3061
        %v3063 = vsel %vm3060, %v3062, %v3058
        %v3064 = vrcp.pop %v2931
        %v3065 = vmul.f32 %v2931, %v3064
        %v3066 = vsub.f32 1.0, %v3065
        %v3067 = vmul.f32 %v3064, %v3066
        %v3068 = vadd.f32 %v3064, %v3067
        %vm3069 = vweird.f32 %v2931
        %vm3070 = vweird.f32 %v3064
        %vm3071 = vmor %vm3069, %vm3070
        %v3072 = vsel %vm3071, %v3064, %v3068
        %v3073 = vand.u32 2147483647, %v2931
        %vm3074 = vcmp.eq.f32.partialorder %v3073, 8.507059e+37
        %v3075 = vand.u32 %v2931, 2147483648
        %v3076 = vor.u32 1.1754944e-38, %v3075
        %v3077 = vsel %vm3074, %v3076, %v3072
        %v3078 = vrcp.pop %v2932
        %v3079 = vmul.f32 %v2932, %v3078
        %v3080 = vsub.f32 1.0, %v3079
        %v3081 = vmul.f32 %v3078, %v3080
        %v3082 = vadd.f32 %v3078, %v3081
        %vm3083 = vweird.f32 %v2932
        %vm3084 = vweird.f32 %v3078
        %vm3085 = vmor %vm3083, %vm3084
        %v3086 = vsel %vm3085, %v3078, %v3082
        %v3087 = vand.u32 2147483647, %v2932
        %vm3088 = vcmp.eq.f32.partialorder %v3087, 8.507059e+37
        %v3089 = vand.u32 %v2932, 2147483648
        %v3090 = vor.u32 1.1754944e-38, %v3089
        %v3091 = vsel %vm3088, %v3090, %v3086
        %v3092 = vrcp.pop %v2933
        %v3093 = vmul.f32 %v2933, %v3092
        %v3094 = vsub.f32 1.0, %v3093
        %v3095 = vmul.f32 %v3092, %v3094
        %v3096 = vadd.f32 %v3092, %v3095
        %vm3097 = vweird.f32 %v2933
        %vm3098 = vweird.f32 %v3092
        %vm3099 = vmor %vm3097, %vm3098
        %v3100 = vsel %vm3099, %v3092, %v3096
        %v3101 = vand.u32 2147483647, %v2933
        %vm3102 = vcmp.eq.f32.partialorder %v3101, 8.507059e+37
        %v3103 = vand.u32 %v2933, 2147483648
        %v3104 = vor.u32 1.1754944e-38, %v3103
        %v3105 = vsel %vm3102, %v3104, %v3100
        %v3106 = vrcp.pop %v2934
        %v3107 = vmul.f32 %v2934, %v3106
        %v3108 = vsub.f32 1.0, %v3107
        %v3109 = vmul.f32 %v3106, %v3108
        %v3110 = vadd.f32 %v3106, %v3109
        %vm3111 = vweird.f32 %v2934
        %vm3112 = vweird.f32 %v3106
        %vm3113 = vmor %vm3111, %vm3112
        %v3114 = vsel %vm3113, %v3106, %v3110
        %v3115 = vand.u32 2147483647, %v2934
        %vm3116 = vcmp.eq.f32.partialorder %v3115, 8.507059e+37
        %v3117 = vand.u32 %v2934, 2147483648
        %v3118 = vor.u32 1.1754944e-38, %v3117
        %v3119 = vsel %vm3116, %v3118, %v3114
        %v3120 = vrcp.pop %v2935
        %v3121 = vmul.f32 %v2935, %v3120
        %v3122 = vsub.f32 1.0, %v3121
        %v3123 = vmul.f32 %v3120, %v3122
        %v3124 = vadd.f32 %v3120, %v3123
        %vm3125 = vweird.f32 %v2935
        %vm3126 = vweird.f32 %v3120
        %vm3127 = vmor %vm3125, %vm3126
        %v3128 = vsel %vm3127, %v3120, %v3124
        %v3129 = vand.u32 2147483647, %v2935
        %vm3130 = vcmp.eq.f32.partialorder %v3129, 8.507059e+37
        %v3131 = vand.u32 %v2935, 2147483648
        %v3132 = vor.u32 1.1754944e-38, %v3131
        %v3133 = vsel %vm3130, %v3132, %v3128
        %v3134 = vrcp.pop %v2936
        %v3135 = vmul.f32 %v2936, %v3134
        %v3136 = vsub.f32 1.0, %v3135
        %v3137 = vmul.f32 %v3134, %v3136
        %v3138 = vadd.f32 %v3134, %v3137
        %vm3139 = vweird.f32 %v2936
        %vm3140 = vweird.f32 %v3134
        %vm3141 = vmor %vm3139, %vm3140
        %v3142 = vsel %vm3141, %v3134, %v3138
        %v3143 = vand.u32 2147483647, %v2936
        %vm3144 = vcmp.eq.f32.partialorder %v3143, 8.507059e+37
        %v3145 = vand.u32 %v2936, 2147483648
        %v3146 = vor.u32 1.1754944e-38, %v3145
        %v3147 = vsel %vm3144, %v3146, %v3142
        %v3148 = vrcp.pop %v2937
        %v3149 = vmul.f32 %v2937, %v3148
        %v3150 = vsub.f32 1.0, %v3149
        %v3151 = vmul.f32 %v3148, %v3150
        %v3152 = vadd.f32 %v3148, %v3151
        %vm3153 = vweird.f32 %v2937
        %vm3154 = vweird.f32 %v3148
        %vm3155 = vmor %vm3153, %vm3154
        %v3156 = vsel %vm3155, %v3148, %v3152
        %v3157 = vand.u32 2147483647, %v2937
        %vm3158 = vcmp.eq.f32.partialorder %v3157, 8.507059e+37
        %v3159 = vand.u32 %v2937, 2147483648
        %v3160 = vor.u32 1.1754944e-38, %v3159
        %v3161 = vsel %vm3158, %v3160, %v3156
        %v3162 = vsub.f32 %v2499, %v2650
        %v3163 = vsub.f32 %v2501, %v2651
        %v3164 = vsub.f32 %v2504, %v2652
        %v3165 = vsub.f32 %v2506, %v2653
        %v3166 = vsub.f32 %v2509, %v2654
        %v3167 = vsub.f32 %v2511, %v2655
        %v3168 = vsub.f32 %v2514, %v2656
        %v3169 = vsub.f32 %v2516, %v2657
        %v3170 = vsub.f32 %v2519, %v2658
        %v3171 = vsub.f32 %v2521, %v2659
        %v3172 = vsub.f32 %v2524, %v2660
        %v3173 = vsub.f32 %v2526, %v2661
        %v3174 = vsub.f32 %v2529, %v2662
        %v3175 = vsub.f32 %v2531, %v2663
        %v3176 = vsub.f32 %v2534, %v2664
        %v3177 = vsub.f32 %v2536, %v2665
        %v3178 = vmul.f32 %v3162, %v2951
        %v3179 = vmul.f32 %v3163, %v2965
        %v3180 = vmul.f32 %v3164, %v2979
        %v3181 = vmul.f32 %v3165, %v2993
        %v3182 = vmul.f32 %v3166, %v3007
        %v3183 = vmul.f32 %v3167, %v3021
        %v3184 = vmul.f32 %v3168, %v3035
        %v3185 = vmul.f32 %v3169, %v3049
        %v3186 = vmul.f32 %v3170, %v3063
        %v3187 = vmul.f32 %v3171, %v3077
        %v3188 = vmul.f32 %v3172, %v3091
        %v3189 = vmul.f32 %v3173, %v3105
        %v3190 = vmul.f32 %v3174, %v3119
        %v3191 = vmul.f32 %v3175, %v3133
        %v3192 = vmul.f32 %v3176, %v3147
        %v3193 = vmul.f32 %v3177, %v3161
        %v3194 = vperm.slane %v2338, 1
        %v3195 = vmul.f32 %v3178, %v3194
        %v3196 = vmul.f32 %v3179, %v3194
        %v3197 = vmul.f32 %v3180, %v3194
        %v3198 = vmul.f32 %v3181, %v3194
        %v3199 = vmul.f32 %v3182, %v3194
        %v3200 = vmul.f32 %v3183, %v3194
        %v3201 = vmul.f32 %v3184, %v3194
        %v3202 = vmul.f32 %v3185, %v3194
        %v3203 = vmul.f32 %v3186, %v3194
        %v3204 = vmul.f32 %v3187, %v3194
        %v3205 = vmul.f32 %v3188, %v3194
        %v3206 = vmul.f32 %v3189, %v3194
        %v3207 = vmul.f32 %v3190, %v3194
        %v3208 = vmul.f32 %v3191, %v3194
        %v3209 = vmul.f32 %v3192, %v3194
        %v3210 = vmul.f32 %v3193, %v3194
        %v3211 = vperm.slane %v2338, 2
        %v3212 = vadd.f32 %v3195, %v3211
        %v3213 = vadd.f32 %v3196, %v3211
        %v3214 = vadd.f32 %v3197, %v3211
        %v3215 = vadd.f32 %v3198, %v3211
        %v3216 = vadd.f32 %v3199, %v3211
        %v3217 = vadd.f32 %v3200, %v3211
        %v3218 = vadd.f32 %v3201, %v3211
        %v3219 = vadd.f32 %v3202, %v3211
        %v3220 = vadd.f32 %v3203, %v3211
        %v3221 = vadd.f32 %v3204, %v3211
        %v3222 = vadd.f32 %v3205, %v3211
        %v3223 = vadd.f32 %v3206, %v3211
        %v3224 = vadd.f32 %v3207, %v3211
        %v3225 = vadd.f32 %v3208, %v3211
        %v3226 = vadd.f32 %v3209, %v3211
        %v3227 = vadd.f32 %v3210, %v3211
        %v3228 = vmax.f32 %v3212, 0.0
        %v3229 = vmax.f32 %v3213, 0.0
        %v3230 = vmax.f32 %v3214, 0.0
        %v3231 = vmax.f32 %v3215, 0.0
        %v3232 = vmax.f32 %v3216, 0.0
        %v3233 = vmax.f32 %v3217, 0.0
        %v3234 = vmax.f32 %v3218, 0.0
        %v3235 = vmax.f32 %v3219, 0.0
        %v3236 = vmax.f32 %v3220, 0.0
        %v3237 = vmax.f32 %v3221, 0.0
        %v3238 = vmax.f32 %v3222, 0.0
        %v3239 = vmax.f32 %v3223, 0.0
        %v3240 = vmax.f32 %v3224, 0.0
        %v3241 = vmax.f32 %v3225, 0.0
        %v3242 = vmax.f32 %v3226, 0.0
        %v3243 = vmax.f32 %v3227, 0.0
        %v3244 = vpack.c.bf16 %v3229, %v3228
        %v3245 = vpack.c.bf16 %v3231, %v3230
        %v3246 = vpack.c.bf16 %v3233, %v3232
        %v3247 = vpack.c.bf16 %v3235, %v3234
        %v3248 = vpack.c.bf16 %v3237, %v3236
        %v3249 = vpack.c.bf16 %v3239, %v3238
        %v3250 = vpack.c.bf16 %v3241, %v3240
        %v3251 = vpack.c.bf16 %v3243, %v3242
        %v3252 = vld [vmem:[%s4] sm:$0xf]
        %v3253 = vld [vmem:[%s4 + $0x4] sm:$0xf]
        %v3254 = vld [vmem:[%s4 + $0x8] sm:$0xf]
        %v3255 = vld [vmem:[%s4 + $0xc] sm:$0xf]
        %v3260 = vunpack.c.l.b16 %v3252
        %v3261 = vunpack.c.l.b16 %v3253
        %v3262 = vunpack.c.l.b16 %v3254
        %v3263 = vunpack.c.l.b16 %v3255
        %v3264 = vpack.c.b16 %v3261, %v3260
        %v3265 = vpack.c.b16 %v3263, %v3262
        %v3269 = vsel %vm463, %v3244, 0
        %v3272 = vsel %vm463, %v3245, 0
        %v3275 = vsel %vm463, %v3246, 0
        %v3278 = vsel %vm463, %v3247, 0
        %v3281 = vsel %vm463, %v3248, 0
        %v3284 = vsel %vm463, %v3249, 0
        %v3287 = vsel %vm463, %v3250, 0
        %v3290 = vsel %vm463, %v3251, 0
        %3292 = vmatpush.bf16.msra.mxu0 0
        %3293 = vmatpush.bf16.msra.mxu0 0
        %3294 = vmatpush.bf16.msra.mxu0 0
        %3295 = vmatpush.bf16.msra.mxu0 0
        %3296 = vmatpush.bf16.msra.mxu0 0
        %3297 = vmatpush.bf16.msra.mxu0 0
        %3298 = vmatpush.bf16.msra.mxu0 %v3265
        %3299 = vmatpush.bf16.msra.mxu0 %v3264
        %3300 = vmatmul.bf16.gmra.mxu0 %v3269
        %v3301 = vpop.f32.mrf.mxu0
        %v3302 = vadd.f32 0.0, %v3301
        %v3303 = vpop.f32.mrf.mxu0
        %v3304 = vadd.f32 0.0, %v3303
        %3305 = vmatmul.bf16.gmra.mxu0 %v3272
        %v3306 = vpop.f32.mrf.mxu0
        %v3307 = vadd.f32 0.0, %v3306
        %v3308 = vpop.f32.mrf.mxu0
        %v3309 = vadd.f32 0.0, %v3308
        %3310 = vmatmul.bf16.gmra.mxu0 %v3275
        %v3311 = vpop.f32.mrf.mxu0
        %v3312 = vadd.f32 0.0, %v3311
        %v3313 = vpop.f32.mrf.mxu0
        %v3314 = vadd.f32 0.0, %v3313
        %3315 = vmatmul.bf16.gmra.mxu0 %v3278
        %v3316 = vpop.f32.mrf.mxu0
        %v3317 = vadd.f32 0.0, %v3316
        %v3318 = vpop.f32.mrf.mxu0
        %v3319 = vadd.f32 0.0, %v3318
        %3320 = vmatmul.bf16.gmra.mxu0 %v3281
        %v3321 = vpop.f32.mrf.mxu0
        %v3322 = vadd.f32 0.0, %v3321
        %v3323 = vpop.f32.mrf.mxu0
        %v3324 = vadd.f32 0.0, %v3323
        %3325 = vmatmul.bf16.gmra.mxu0 %v3284
        %v3326 = vpop.f32.mrf.mxu0
        %v3327 = vadd.f32 0.0, %v3326
        %v3328 = vpop.f32.mrf.mxu0
        %v3329 = vadd.f32 0.0, %v3328
        %3330 = vmatmul.bf16.gmra.mxu0 %v3287
        %v3331 = vpop.f32.mrf.mxu0
        %v3332 = vadd.f32 0.0, %v3331
        %v3333 = vpop.f32.mrf.mxu0
        %v3334 = vadd.f32 0.0, %v3333
        %3335 = vmatmul.bf16.gmra.mxu0 %v3290
        %v3336 = vpop.f32.mrf.mxu0
        %v3337 = vadd.f32 0.0, %v3336
        %v3338 = vpop.f32.mrf.mxu0
        %v3339 = vadd.f32 0.0, %v3338
        %3340 = vdwg.mxu0
        %v3341 = vpack.c.bf16 %v3302, %v3302
        %v3342 = vpack.c.bf16 %v3304, %v3304
        %v3343 = vpack.c.bf16 %v3307, %v3307
        %v3344 = vpack.c.bf16 %v3309, %v3309
        %v3345 = vpack.c.bf16 %v3312, %v3312
        %v3346 = vpack.c.bf16 %v3314, %v3314
        %v3347 = vpack.c.bf16 %v3317, %v3317
        %v3348 = vpack.c.bf16 %v3319, %v3319
        %v3349 = vpack.c.bf16 %v3322, %v3322
        %v3350 = vpack.c.bf16 %v3324, %v3324
        %v3351 = vpack.c.bf16 %v3327, %v3327
        %v3352 = vpack.c.bf16 %v3329, %v3329
        %v3353 = vpack.c.bf16 %v3332, %v3332
        %v3354 = vpack.c.bf16 %v3334, %v3334
        %v3355 = vpack.c.bf16 %v3337, %v3337
        %v3356 = vpack.c.bf16 %v3339, %v3339
        %3357 = vst [vmem:[%s249] sm:$0xf] %v3341
        %3358 = vst [vmem:[%s249 + $0x4] sm:$0xf] %v3342
        %3359 = vst [vmem:[%s249 + $0x8] sm:$0xf] %v3343
        %3360 = vst [vmem:[%s249 + $0xc] sm:$0xf] %v3344
        %3361 = vst [vmem:[%s249 + $0x10] sm:$0xf] %v3345
        %3362 = vst [vmem:[%s249 + $0x14] sm:$0xf] %v3346
        %3363 = vst [vmem:[%s249 + $0x18] sm:$0xf] %v3347
        %3364 = vst [vmem:[%s249 + $0x1c] sm:$0xf] %v3348
        %3365 = vst [vmem:[%s249 + $0x20] sm:$0xf] %v3349
        %3366 = vst [vmem:[%s249 + $0x24] sm:$0xf] %v3350
        %3367 = vst [vmem:[%s249 + $0x28] sm:$0xf] %v3351
        %3368 = vst [vmem:[%s249 + $0x2c] sm:$0xf] %v3352
        %3369 = vst [vmem:[%s249 + $0x30] sm:$0xf] %v3353
        %3370 = vst [vmem:[%s249 + $0x34] sm:$0xf] %v3354
        %3371 = vst [vmem:[%s249 + $0x38] sm:$0xf] %v3355
        %3372 = vst [vmem:[%s249 + $0x3c] sm:$0xf] %v3356
        %s3373 = sand.u32 %s143, 1
        %s3374 = scalar_lea.sflag [#allocation4], %s3373
        %s3375 = sand.u32 %s143, 1
        %s3376 = smul.addr %s3375, 64
        %s3377 = scalar_lea.vmem [#allocation5], %s3376
        // Predicated region
        $region45: #{tpu_custom_call.1} parent=39 // pred_check
          %p3378 = pneg %p153
        $region46: #{tpu_custom_call.1} parent=39 // pred_check_branch
          %3380 = sbr.rel (%p3378) target = $region48
        $region47: #{tpu_custom_call.1} parent=39 // pred_region
          %3382 = vsyncadd %s3374, 0
          %s3383 = smul.addr %s20, 16
          %s3384 = smul.addr %s3383, 4
          %s3385 = scalar_lea.hbm %s5, %s3384
          %s3386 = sshll.u32 %s3377, 4
          %s3387 = int_to_ptr.vmem [resolvable:$true] %s3386
          %s3388 = sshll.u32 %s3385, 4
          %s3389 = int_to_ptr.hbm [resolvable:$true] %s3388
          %3394 = dma.vmem_to_hbm [thread:$0]  %s3387, 1024, %s3389, %s3374, 64, 64, 4
        $region48: #{tpu_custom_call.1} parent=39 // pred_fallthru
          _
      $region40: #{tpu_custom_call.1} parent=5 // pred_fallthru
        _
      %p3395 = scmp.le.s32.totalorder 2, %s15
      // Predicated region
      $region49: #{tpu_custom_call.1} parent=5 // pred_check
        %p3396 = pneg %p3395
      $region50: #{tpu_custom_call.1} parent=5 // pred_check_branch
        %3398 = sbr.rel (%p3396) target = $region52
      $region51: #{tpu_custom_call.1} parent=5 // pred_region
        %s3399 = ssub.s32 %s15, 2
        // Predicated region
        $region53: #{tpu_custom_call.1} parent=51 // pred_check
          %p3400 = pneg %p159
        $region54: #{tpu_custom_call.1} parent=51 // pred_check_branch
          %3402 = sbr.rel (%p3400) target = $region56
        $region55: #{tpu_custom_call.1} parent=51 // pred_region
          %s3403 = sand.u32 %s144, 1
          %s3404 = scalar_lea.sflag [#allocation4], %s3403
          %s3405 = sand.u32 %s144, 1
          %s3406 = smul.addr %s3405, 64
          %s3407 = scalar_lea.vmem [#allocation5], %s3406
          %3409 = dma.done %s3404, 1024
        $region56: #{tpu_custom_call.1} parent=51 // pred_fallthru
          _
      $region52: #{tpu_custom_call.1} parent=5 // pred_fallthru
        _
    $region6: #{tpu_custom_call.1} parent=1 // loop_footer
      %s19 = sadd.s32 1, %s15
    $region7: #{tpu_custom_call.1} parent=1 // loop_footer_branch
      %14 = sbr.rel target = $region3
    $region8: #{tpu_custom_call.1} parent=1 // loop_exit
      _
    %3410 = vsyncpa [#allocation3], 1
    %s3411 = scalar_lea.sflag [#allocation3], 1
    %3412 = vsyncpa %s3411, 1
    %3413 = vsyncpa [#allocation4], 1
    %s3414 = scalar_lea.sflag [#allocation4], 1
    %3415 = vsyncpa %s3414, 1

</llo_original>
